<compile_context>
chip_gen: v7x
topology: tpu7x:2x2x1
jax: 0.10.0
libtpu: 0.0.40
codegen_flags: <defaults>
</compile_context>

<pallas_src>
import functools

import jax
import jax.numpy as jnp
from jax.experimental import pallas as pl
from jax.experimental.pallas import tpu as pltpu

LANE = 128


def _round_up(v, m):
    return ((v + m - 1) // m) * m


# ----------------------------------------------------------------------------
# Conv(3x3, stride s, pad 1) + bias + ReLU  [+ fused global-average-pool]
# One image per grid step; im2col happens in-kernel via the phase decomposition.
# ----------------------------------------------------------------------------
def _conv_kernel(x_ref, w_ref, b_ref, o_ref, *, kh, kw, stride, Ho, Wo, fuse_gap):
    """x_ref: (s*s, Hq, Wq, Cin)  phase-decomposed padded input (bf16)
       w_ref: (kh*kw, Cin, Cp)    zero-padded conv weights (bf16)
       b_ref: (1, Cp)             zero-padded bias (f32)
       o_ref: (Ho, Wo, Cp) bf16   or (1, Cp) f32 when fuse_gap."""
    s = stride
    cin = x_ref.shape[-1]
    cp = w_ref.shape[-1]
    bias = b_ref[...].astype(jnp.float32)                       # (1, Cp)

    acc = [jnp.zeros((Wo, cp), jnp.float32) for _ in range(Ho)]
    for i in range(kh):
        for j in range(kw):
            # x_padded[s*ho + i, s*wo + j] == phase plane p at (ho + di, wo + dj)
            p = (i % s) * s + (j % s)
            di, dj = i // s, j // s
            wt = w_ref[i * kw + j]                              # (Cin, Cp), one load/tap
            for ho in range(Ho):
                win = x_ref[p, ho + di, pl.ds(dj, Wo), :]       # (Wo, Cin) contiguous
                if cin <= 4:
                    # tiny contraction: broadcasted outer products on the VPU
                    contrib = jnp.zeros((Wo, cp), jnp.float32)
                    for c in range(cin):
                        contrib = contrib + (
                            win[:, c:c + 1].astype(jnp.float32)
                            * wt[c:c + 1, :].astype(jnp.float32))
                else:
                    # bf16 operands, f32 accumulation on the MXU
                    contrib = jnp.dot(win, wt, preferred_element_type=jnp.float32)
                acc[ho] = acc[ho] + contrib

    rows = [jnp.maximum(a + bias, 0.0) for a in acc]            # f32, (Wo, Cp) each
    if fuse_gap:
        tot = rows[0]
        for r in rows[1:]:
            tot = tot + r
        gap = jnp.sum(tot, axis=0, keepdims=True) * (1.0 / float(Ho * Wo))
        o_ref[...] = gap.astype(o_ref.dtype)                    # (1, Cp)
    else:
        for ho in range(Ho):
            o_ref[ho] = rows[ho].astype(o_ref.dtype)            # lane-dense stores


def _conv_layer(xr, w_p, b_p, *, kh, kw, stride, Ho, Wo, fuse_gap):
    B, P, Hq, Wq, Cin = xr.shape
    T, _, Cp = w_p.shape
    kernel = functools.partial(_conv_kernel, kh=kh, kw=kw, stride=stride,
                               Ho=Ho, Wo=Wo, fuse_gap=fuse_gap)
    if fuse_gap:
        out_shape = jax.ShapeDtypeStruct((B, 1, Cp), jnp.float32)
        out_spec = pl.BlockSpec((None, 1, Cp), lambda b: (b, 0, 0))
    else:
        out_shape = jax.ShapeDtypeStruct((B, Ho, Wo, Cp), jnp.bfloat16)
        out_spec = pl.BlockSpec((None, Ho, Wo, Cp), lambda b: (b, 0, 0, 0))
    return pl.pallas_call(
        kernel,
        out_shape=out_shape,
        grid=(B,),
        in_specs=[
            pl.BlockSpec((None, P, Hq, Wq, Cin), lambda b: (b, 0, 0, 0, 0)),
            pl.BlockSpec((T, Cin, Cp), lambda b: (0, 0, 0)),
            pl.BlockSpec((1, Cp), lambda b: (0, 0)),
        ],
        out_specs=out_spec,
        compiler_params=pltpu.CompilerParams(
            dimension_semantics=("parallel",),       # shard batch across v7x's 2 TCs
            vmem_limit_bytes=32 * 1024 * 1024,
        ),
    )(xr, w_p, b_p)


# ----------------------------------------------------------------------------
# Wrapper-side phase decomposition (lossless layout shuffle, no duplication):
#   x_padded[s*a + pa, s*b + pb] == xr[pa*s + pb][a, b]
# so every conv tap becomes a CONTIGUOUS in-kernel slice of one phase plane.
# ----------------------------------------------------------------------------
def phase_decompose(x, kh, kw, stride, pad):
    B, H, W, C = x.shape
    s = stride
    Hp, Wp = H + 2 * pad, W + 2 * pad
    Ho = (Hp - kh) // s + 1
    Wo = (Wp - kw) // s + 1
    Hq = -(-Hp // s)
    Wq = -(-Wp // s)
    xp = jnp.pad(x, ((0, 0),
                     (pad, Hq * s - H - pad),
                     (pad, Wq * s - W - pad),
                     (0, 0)))
    xr = xp.reshape(B, Hq, s, Wq, s, C)
    xr = jnp.transpose(xr, (0, 2, 4, 1, 3, 5)).reshape(B, s * s, Hq, Wq, C)
    return xr, Ho, Wo


def cnn_block_pool(x_nchw, conv_params, strides):
    """conv_params: list of (w:(kh,kw,Cin,Cout), b:(Cout,)). Returns (B, Cout_last)."""
    x = jnp.transpose(x_nchw, (0, 2, 3, 1)).astype(jnp.bfloat16)     # NCHW -> NHWC bf16
    n = len(conv_params)
    for li, ((w, b), stride) in enumerate(zip(conv_params, strides)):
        kh, kw, cin, cout = w.shape
        last = li == n - 1
        cin_x = x.shape[-1]                                          # padded in-channels
        cp = _round_up(cout, LANE)                                   # lane-dense out-channels
        w_p = jnp.zeros((kh * kw, cin_x, cp), jnp.float32)
        w_p = w_p.at[:, :cin, :cout].set(w.reshape(kh * kw, cin, cout))
        w_p = w_p.astype(jnp.bfloat16)
        b_p = jnp.zeros((1, cp), jnp.float32).at[0, :cout].set(b)
        xr, Ho, Wo = phase_decompose(x, kh, kw, stride, pad=1)
        y = _conv_layer(xr, w_p, b_p, kh=kh, kw=kw, stride=stride,
                        Ho=Ho, Wo=Wo, fuse_gap=last)
        if last:
            # fused GAP output (B, 1, Cp): slice padded channels back off
            return y.reshape(y.shape[0], cp)[:, :cout]
        x = y                                                        # (B, Ho, Wo, Cp) bf16


# ----------------------------------------------------------------------------
# Fused classifier: all Linear(+ReLU) layers in ONE pallas_call.
# Hidden/output widths are zero-padded to 128 lanes; padded columns stay 0.
# ----------------------------------------------------------------------------
def _mlp_kernel(*refs, n_layers):
    x_ref, o_ref = refs[0], refs[-1]
    h = x_ref[...]
    for l in range(n_layers):
        w_ref = refs[1 + 2 * l]
        b_ref = refs[2 + 2 * l]
        h = jnp.dot(h.astype(w_ref.dtype), w_ref[...],
                    preferred_element_type=jnp.float32) + b_ref[...]
        if l < n_layers - 1:
            h = jnp.maximum(h, 0.0).astype(jnp.bfloat16)
            # TODO(synk): Dropout omitted (identity at inference).
    o_ref[...] = h.astype(o_ref.dtype)


def classifier_pallas(x, fc_params):
    n = len(fc_params)
    B, K = x.shape
    args = [x.astype(jnp.bfloat16)]
    in_specs = [pl.BlockSpec((B, K), lambda i: (0, 0))]
    in_dim = K
    for (w, b) in fc_params:
        kin, kout = w.shape
        outp = _round_up(kout, LANE)
        wp = jnp.zeros((in_dim, outp), jnp.float32).at[:kin, :kout].set(w)
        bp = jnp.zeros((1, outp), jnp.float32).at[0, :kout].set(b)
        args += [wp.astype(jnp.bfloat16), bp]
        in_specs += [pl.BlockSpec((in_dim, outp), lambda i: (0, 0)),
                     pl.BlockSpec((1, outp), lambda i: (0, 0))]
        in_dim = outp
    out_classes = fc_params[-1][0].shape[1]
    out_p = pl.pallas_call(
        functools.partial(_mlp_kernel, n_layers=n),
        out_shape=jax.ShapeDtypeStruct((B, in_dim), jnp.float32),
        grid=(1,),
        in_specs=in_specs,
        out_specs=pl.BlockSpec((B, in_dim), lambda i: (0, 0)),
        compiler_params=pltpu.CompilerParams(vmem_limit_bytes=32 * 1024 * 1024),
    )(*args)
    return out_p[:, :out_classes]


# ----------------------------------------------------------------------------
# Model2 forward: cc block shared by l_cc/r_cc, mlo block shared by l_mlo/r_mlo.
# Shared-weight views are stacked along batch so each block runs once.
# ----------------------------------------------------------------------------
def model2_apply(params, l_cc, l_mlo, r_cc, r_mlo, *, strides):
    cc_params, mlo_params, fc_params = params
    cc_in = jnp.concatenate([l_cc, r_cc], axis=0)
    mlo_in = jnp.concatenate([l_mlo, r_mlo], axis=0)
    f_cc = cnn_block_pool(cc_in, cc_params, strides)     # (2B, C)
    f_mlo = cnn_block_pool(mlo_in, mlo_params, strides)  # (2B, C)
    B = l_cc.shape[0]
    cat = jnp.concatenate([f_cc[:B], f_mlo[:B], f_cc[B:], f_mlo[B:]], axis=1)
    return classifier_pallas(cat, fc_params)


# ----------------------------------------------------------------------------
# Deterministic parameter construction
# ----------------------------------------------------------------------------
def init_cnn_params(key, in_ch, channels, kh=3, kw=3):
    params = []
    prev = in_ch
    for ch in channels:
        key, k1, k2 = jax.random.split(key, 3)
        scale = 1.0 / jnp.sqrt(float(kh * kw * prev))
        w = jax.random.normal(k1, (kh, kw, prev, ch), jnp.float32) * scale
        b = jax.random.normal(k2, (ch,), jnp.float32) * 0.01
        params.append((w, b))
        prev = ch
    return params, key


def init_fc_params(key, in_size, fc_sizes, out_classes):
    params = []
    prev = in_size
    for fc in list(fc_sizes) + [out_classes]:
        key, k1, k2 = jax.random.split(key, 3)
        scale = 1.0 / jnp.sqrt(float(prev))
        w = jax.random.normal(k1, (prev, fc), jnp.float32) * scale
        b = jax.random.normal(k2, (fc,), jnp.float32) * 0.01
        params.append((w, b))
        prev = fc
    return params, key


# ----------------------------------------------------------------------------
if __name__ == "__main__":
    in_dims = (1, 16, 16)          # (Cin, H, W)
    channels = [8, 16]
    strides = (2, 2)
    fc_sizes = [32]
    dropouts = [0.1]               # identity at inference
    out_classes = 3
    batch = 2

    key = jax.random.PRNGKey(0)
    cc_params, key = init_cnn_params(key, in_dims[0], channels)
    mlo_params, key = init_cnn_params(key, in_dims[0], channels)
    fc_params, key = init_fc_params(key, 4 * channels[-1], fc_sizes, out_classes)

    key, k1, k2, k3, k4 = jax.random.split(key, 5)
    shape = (batch, in_dims[0], in_dims[1], in_dims[2])   # NCHW like PyTorch
    l_cc = jax.random.normal(k1, shape, jnp.float32)
    l_mlo = jax.random.normal(k2, shape, jnp.float32)
    r_cc = jax.random.normal(k3, shape, jnp.float32)
    r_mlo = jax.random.normal(k4, shape, jnp.float32)

    fwd = jax.jit(functools.partial(model2_apply, strides=strides))
    out = fwd((cc_params, mlo_params, fc_params), l_cc, l_mlo, r_cc, r_mlo)
    out = jax.block_until_ready(out)
    assert out.shape == (batch, out_classes), out.shape
    print("KERNEL_OK")
</pallas_src>

<mosaic_0001>
module attributes {stable_mosaic.version = 11 : i64} {
  func.func @_conv_kernel(%arg0: i32, %arg1: memref<1x4x9x9x1xbf16, #tpu.memory_space<vmem>>, %arg2: memref<9x1x128xbf16, #tpu.memory_space<vmem>>, %arg3: memref<1x128xf32, #tpu.memory_space<vmem>>, %arg4: memref<1x8x8x128xbf16, #tpu.memory_space<vmem>>) attributes {dimension_semantics = [#tpu.dimension_semantics<parallel>], iteration_bounds = array<i64: 4>, scalar_prefetch = 0 : i64, scratch_operands = 0 : i64, tpu.core_type = #tpu.core_type<tc>, window_params = [{transform_indices = @transform_0, window_bounds = array<i64: 1, 4, 9, 9, 1>}, {pipeline_mode = #tpu.pipeline_mode<synchronous>, transform_indices = @transform_1, window_bounds = array<i64: 9, 1, 128>}, {pipeline_mode = #tpu.pipeline_mode<synchronous>, transform_indices = @transform_2, window_bounds = array<i64: 1, 128>}, {transform_indices = @transform_3, window_bounds = array<i64: 1, 8, 8, 128>}]} {
    %c0 = arith.constant 0 : index
    %c0_0 = arith.constant 0 : index
    %0 = vector.load %arg3[%c0, %c0_0] : memref<1x128xf32, #tpu.memory_space<vmem>>, vector<1x128xf32>
    %cst = arith.constant 0.000000e+00 : f32
    %1 = vector.broadcast %cst : f32 to vector<8x128xf32>
    %cst_1 = arith.constant 0.000000e+00 : f32
    %2 = vector.broadcast %cst_1 : f32 to vector<8x128xf32>
    %cst_2 = arith.constant 0.000000e+00 : f32
    %3 = vector.broadcast %cst_2 : f32 to vector<8x128xf32>
    %cst_3 = arith.constant 0.000000e+00 : f32
    %4 = vector.broadcast %cst_3 : f32 to vector<8x128xf32>
    %cst_4 = arith.constant 0.000000e+00 : f32
    %5 = vector.broadcast %cst_4 : f32 to vector<8x128xf32>
    %cst_5 = arith.constant 0.000000e+00 : f32
    %6 = vector.broadcast %cst_5 : f32 to vector<8x128xf32>
    %cst_6 = arith.constant 0.000000e+00 : f32
    %7 = vector.broadcast %cst_6 : f32 to vector<8x128xf32>
    %cst_7 = arith.constant 0.000000e+00 : f32
    %8 = vector.broadcast %cst_7 : f32 to vector<8x128xf32>
    %c0_8 = arith.constant 0 : index
    %c0_9 = arith.constant 0 : index
    %c0_10 = arith.constant 0 : index
    %9 = vector.load %arg2[%c0_8, %c0_9, %c0_10] : memref<9x1x128xbf16, #tpu.memory_space<vmem>>, vector<1x1x128xbf16>
    %10 = vector.shape_cast %9 : vector<1x1x128xbf16> to vector<1x128xbf16>
    %c0_11 = arith.constant 0 : index
    %c0_12 = arith.constant 0 : index
    %c0_13 = arith.constant 0 : index
    %c0_14 = arith.constant 0 : index
    %c0_15 = arith.constant 0 : index
    %11 = vector.load %arg1[%c0_11, %c0_12, %c0_13, %c0_14, %c0_15] : memref<1x4x9x9x1xbf16, #tpu.memory_space<vmem>>, vector<1x1x1x8x1xbf16>
    %12 = vector.shape_cast %11 : vector<1x1x1x8x1xbf16> to vector<8x1xbf16>
    %cst_16 = arith.constant 0.000000e+00 : f32
    %13 = vector.broadcast %cst_16 : f32 to vector<8x128xf32>
    %14 = arith.extf %12 : vector<8x1xbf16> to vector<8x1xf32>
    %15 = arith.extf %10 : vector<1x128xbf16> to vector<1x128xf32>
    %16 = vector.broadcast %14 : vector<8x1xf32> to vector<8x128xf32>
    %17 = vector.broadcast %15 : vector<1x128xf32> to vector<8x128xf32>
    %18 = arith.mulf %16, %17 : vector<8x128xf32>
    %19 = arith.addf %13, %18 : vector<8x128xf32>
    %20 = arith.addf %1, %19 : vector<8x128xf32>
    %c0_17 = arith.constant 0 : index
    %c0_18 = arith.constant 0 : index
    %c1 = arith.constant 1 : index
    %c0_19 = arith.constant 0 : index
    %c0_20 = arith.constant 0 : index
    %21 = vector.load %arg1[%c0_17, %c0_18, %c1, %c0_19, %c0_20] : memref<1x4x9x9x1xbf16, #tpu.memory_space<vmem>>, vector<1x1x1x8x1xbf16>
    %22 = vector.shape_cast %21 : vector<1x1x1x8x1xbf16> to vector<8x1xbf16>
    %cst_21 = arith.constant 0.000000e+00 : f32
    %23 = vector.broadcast %cst_21 : f32 to vector<8x128xf32>
    %24 = arith.extf %22 : vector<8x1xbf16> to vector<8x1xf32>
    %25 = arith.extf %10 : vector<1x128xbf16> to vector<1x128xf32>
    %26 = vector.broadcast %24 : vector<8x1xf32> to vector<8x128xf32>
    %27 = vector.broadcast %25 : vector<1x128xf32> to vector<8x128xf32>
    %28 = arith.mulf %26, %27 : vector<8x128xf32>
    %29 = arith.addf %23, %28 : vector<8x128xf32>
    %30 = arith.addf %2, %29 : vector<8x128xf32>
    %c0_22 = arith.constant 0 : index
    %c0_23 = arith.constant 0 : index
    %c2 = arith.constant 2 : index
    %c0_24 = arith.constant 0 : index
    %c0_25 = arith.constant 0 : index
    %31 = vector.load %arg1[%c0_22, %c0_23, %c2, %c0_24, %c0_25] : memref<1x4x9x9x1xbf16, #tpu.memory_space<vmem>>, vector<1x1x1x8x1xbf16>
    %32 = vector.shape_cast %31 : vector<1x1x1x8x1xbf16> to vector<8x1xbf16>
    %cst_26 = arith.constant 0.000000e+00 : f32
    %33 = vector.broadcast %cst_26 : f32 to vector<8x128xf32>
    %34 = arith.extf %32 : vector<8x1xbf16> to vector<8x1xf32>
    %35 = arith.extf %10 : vector<1x128xbf16> to vector<1x128xf32>
    %36 = vector.broadcast %34 : vector<8x1xf32> to vector<8x128xf32>
    %37 = vector.broadcast %35 : vector<1x128xf32> to vector<8x128xf32>
    %38 = arith.mulf %36, %37 : vector<8x128xf32>
    %39 = arith.addf %33, %38 : vector<8x128xf32>
    %40 = arith.addf %3, %39 : vector<8x128xf32>
    %c0_27 = arith.constant 0 : index
    %c0_28 = arith.constant 0 : index
    %c3 = arith.constant 3 : index
    %c0_29 = arith.constant 0 : index
    %c0_30 = arith.constant 0 : index
    %41 = vector.load %arg1[%c0_27, %c0_28, %c3, %c0_29, %c0_30] : memref<1x4x9x9x1xbf16, #tpu.memory_space<vmem>>, vector<1x1x1x8x1xbf16>
    %42 = vector.shape_cast %41 : vector<1x1x1x8x1xbf16> to vector<8x1xbf16>
    %cst_31 = arith.constant 0.000000e+00 : f32
    %43 = vector.broadcast %cst_31 : f32 to vector<8x128xf32>
    %44 = arith.extf %42 : vector<8x1xbf16> to vector<8x1xf32>
    %45 = arith.extf %10 : vector<1x128xbf16> to vector<1x128xf32>
    %46 = vector.broadcast %44 : vector<8x1xf32> to vector<8x128xf32>
    %47 = vector.broadcast %45 : vector<1x128xf32> to vector<8x128xf32>
    %48 = arith.mulf %46, %47 : vector<8x128xf32>
    %49 = arith.addf %43, %48 : vector<8x128xf32>
    %50 = arith.addf %4, %49 : vector<8x128xf32>
    %c0_32 = arith.constant 0 : index
    %c0_33 = arith.constant 0 : index
    %c4 = arith.constant 4 : index
    %c0_34 = arith.constant 0 : index
    %c0_35 = arith.constant 0 : index
    %51 = vector.load %arg1[%c0_32, %c0_33, %c4, %c0_34, %c0_35] : memref<1x4x9x9x1xbf16, #tpu.memory_space<vmem>>, vector<1x1x1x8x1xbf16>
    %52 = vector.shape_cast %51 : vector<1x1x1x8x1xbf16> to vector<8x1xbf16>
    %cst_36 = arith.constant 0.000000e+00 : f32
    %53 = vector.broadcast %cst_36 : f32 to vector<8x128xf32>
    %54 = arith.extf %52 : vector<8x1xbf16> to vector<8x1xf32>
    %55 = arith.extf %10 : vector<1x128xbf16> to vector<1x128xf32>
    %56 = vector.broadcast %54 : vector<8x1xf32> to vector<8x128xf32>
    %57 = vector.broadcast %55 : vector<1x128xf32> to vector<8x128xf32>
    %58 = arith.mulf %56, %57 : vector<8x128xf32>
    %59 = arith.addf %53, %58 : vector<8x128xf32>
    %60 = arith.addf %5, %59 : vector<8x128xf32>
    %c0_37 = arith.constant 0 : index
    %c0_38 = arith.constant 0 : index
    %c5 = arith.constant 5 : index
    %c0_39 = arith.constant 0 : index
    %c0_40 = arith.constant 0 : index
    %61 = vector.load %arg1[%c0_37, %c0_38, %c5, %c0_39, %c0_40] : memref<1x4x9x9x1xbf16, #tpu.memory_space<vmem>>, vector<1x1x1x8x1xbf16>
    %62 = vector.shape_cast %61 : vector<1x1x1x8x1xbf16> to vector<8x1xbf16>
    %cst_41 = arith.constant 0.000000e+00 : f32
    %63 = vector.broadcast %cst_41 : f32 to vector<8x128xf32>
    %64 = arith.extf %62 : vector<8x1xbf16> to vector<8x1xf32>
    %65 = arith.extf %10 : vector<1x128xbf16> to vector<1x128xf32>
    %66 = vector.broadcast %64 : vector<8x1xf32> to vector<8x128xf32>
    %67 = vector.broadcast %65 : vector<1x128xf32> to vector<8x128xf32>
    %68 = arith.mulf %66, %67 : vector<8x128xf32>
    %69 = arith.addf %63, %68 : vector<8x128xf32>
    %70 = arith.addf %6, %69 : vector<8x128xf32>
    %c0_42 = arith.constant 0 : index
    %c0_43 = arith.constant 0 : index
    %c6 = arith.constant 6 : index
    %c0_44 = arith.constant 0 : index
    %c0_45 = arith.constant 0 : index
    %71 = vector.load %arg1[%c0_42, %c0_43, %c6, %c0_44, %c0_45] : memref<1x4x9x9x1xbf16, #tpu.memory_space<vmem>>, vector<1x1x1x8x1xbf16>
    %72 = vector.shape_cast %71 : vector<1x1x1x8x1xbf16> to vector<8x1xbf16>
    %cst_46 = arith.constant 0.000000e+00 : f32
    %73 = vector.broadcast %cst_46 : f32 to vector<8x128xf32>
    %74 = arith.extf %72 : vector<8x1xbf16> to vector<8x1xf32>
    %75 = arith.extf %10 : vector<1x128xbf16> to vector<1x128xf32>
    %76 = vector.broadcast %74 : vector<8x1xf32> to vector<8x128xf32>
    %77 = vector.broadcast %75 : vector<1x128xf32> to vector<8x128xf32>
    %78 = arith.mulf %76, %77 : vector<8x128xf32>
    %79 = arith.addf %73, %78 : vector<8x128xf32>
    %80 = arith.addf %7, %79 : vector<8x128xf32>
    %c0_47 = arith.constant 0 : index
    %c0_48 = arith.constant 0 : index
    %c7 = arith.constant 7 : index
    %c0_49 = arith.constant 0 : index
    %c0_50 = arith.constant 0 : index
    %81 = vector.load %arg1[%c0_47, %c0_48, %c7, %c0_49, %c0_50] : memref<1x4x9x9x1xbf16, #tpu.memory_space<vmem>>, vector<1x1x1x8x1xbf16>
    %82 = vector.shape_cast %81 : vector<1x1x1x8x1xbf16> to vector<8x1xbf16>
    %cst_51 = arith.constant 0.000000e+00 : f32
    %83 = vector.broadcast %cst_51 : f32 to vector<8x128xf32>
    %84 = arith.extf %82 : vector<8x1xbf16> to vector<8x1xf32>
    %85 = arith.extf %10 : vector<1x128xbf16> to vector<1x128xf32>
    %86 = vector.broadcast %84 : vector<8x1xf32> to vector<8x128xf32>
    %87 = vector.broadcast %85 : vector<1x128xf32> to vector<8x128xf32>
    %88 = arith.mulf %86, %87 : vector<8x128xf32>
    %89 = arith.addf %83, %88 : vector<8x128xf32>
    %90 = arith.addf %8, %89 : vector<8x128xf32>
    %c1_52 = arith.constant 1 : index
    %c0_53 = arith.constant 0 : index
    %c0_54 = arith.constant 0 : index
    %91 = vector.load %arg2[%c1_52, %c0_53, %c0_54] : memref<9x1x128xbf16, #tpu.memory_space<vmem>>, vector<1x1x128xbf16>
    %92 = vector.shape_cast %91 : vector<1x1x128xbf16> to vector<1x128xbf16>
    %c0_55 = arith.constant 0 : index
    %c1_56 = arith.constant 1 : index
    %c0_57 = arith.constant 0 : index
    %c0_58 = arith.constant 0 : index
    %c0_59 = arith.constant 0 : index
    %93 = vector.load %arg1[%c0_55, %c1_56, %c0_57, %c0_58, %c0_59] : memref<1x4x9x9x1xbf16, #tpu.memory_space<vmem>>, vector<1x1x1x8x1xbf16>
    %94 = vector.shape_cast %93 : vector<1x1x1x8x1xbf16> to vector<8x1xbf16>
    %cst_60 = arith.constant 0.000000e+00 : f32
    %95 = vector.broadcast %cst_60 : f32 to vector<8x128xf32>
    %96 = arith.extf %94 : vector<8x1xbf16> to vector<8x1xf32>
    %97 = arith.extf %92 : vector<1x128xbf16> to vector<1x128xf32>
    %98 = vector.broadcast %96 : vector<8x1xf32> to vector<8x128xf32>
    %99 = vector.broadcast %97 : vector<1x128xf32> to vector<8x128xf32>
    %100 = arith.mulf %98, %99 : vector<8x128xf32>
    %101 = arith.addf %95, %100 : vector<8x128xf32>
    %102 = arith.addf %20, %101 : vector<8x128xf32>
    %c0_61 = arith.constant 0 : index
    %c1_62 = arith.constant 1 : index
    %c1_63 = arith.constant 1 : index
    %c0_64 = arith.constant 0 : index
    %c0_65 = arith.constant 0 : index
    %103 = vector.load %arg1[%c0_61, %c1_62, %c1_63, %c0_64, %c0_65] : memref<1x4x9x9x1xbf16, #tpu.memory_space<vmem>>, vector<1x1x1x8x1xbf16>
    %104 = vector.shape_cast %103 : vector<1x1x1x8x1xbf16> to vector<8x1xbf16>
    %cst_66 = arith.constant 0.000000e+00 : f32
    %105 = vector.broadcast %cst_66 : f32 to vector<8x128xf32>
    %106 = arith.extf %104 : vector<8x1xbf16> to vector<8x1xf32>
    %107 = arith.extf %92 : vector<1x128xbf16> to vector<1x128xf32>
    %108 = vector.broadcast %106 : vector<8x1xf32> to vector<8x128xf32>
    %109 = vector.broadcast %107 : vector<1x128xf32> to vector<8x128xf32>
    %110 = arith.mulf %108, %109 : vector<8x128xf32>
    %111 = arith.addf %105, %110 : vector<8x128xf32>
    %112 = arith.addf %30, %111 : vector<8x128xf32>
    %c0_67 = arith.constant 0 : index
    %c1_68 = arith.constant 1 : index
    %c2_69 = arith.constant 2 : index
    %c0_70 = arith.constant 0 : index
    %c0_71 = arith.constant 0 : index
    %113 = vector.load %arg1[%c0_67, %c1_68, %c2_69, %c0_70, %c0_71] : memref<1x4x9x9x1xbf16, #tpu.memory_space<vmem>>, vector<1x1x1x8x1xbf16>
    %114 = vector.shape_cast %113 : vector<1x1x1x8x1xbf16> to vector<8x1xbf16>
    %cst_72 = arith.constant 0.000000e+00 : f32
    %115 = vector.broadcast %cst_72 : f32 to vector<8x128xf32>
    %116 = arith.extf %114 : vector<8x1xbf16> to vector<8x1xf32>
    %117 = arith.extf %92 : vector<1x128xbf16> to vector<1x128xf32>
    %118 = vector.broadcast %116 : vector<8x1xf32> to vector<8x128xf32>
    %119 = vector.broadcast %117 : vector<1x128xf32> to vector<8x128xf32>
    %120 = arith.mulf %118, %119 : vector<8x128xf32>
    %121 = arith.addf %115, %120 : vector<8x128xf32>
    %122 = arith.addf %40, %121 : vector<8x128xf32>
    %c0_73 = arith.constant 0 : index
    %c1_74 = arith.constant 1 : index
    %c3_75 = arith.constant 3 : index
    %c0_76 = arith.constant 0 : index
    %c0_77 = arith.constant 0 : index
    %123 = vector.load %arg1[%c0_73, %c1_74, %c3_75, %c0_76, %c0_77] : memref<1x4x9x9x1xbf16, #tpu.memory_space<vmem>>, vector<1x1x1x8x1xbf16>
    %124 = vector.shape_cast %123 : vector<1x1x1x8x1xbf16> to vector<8x1xbf16>
    %cst_78 = arith.constant 0.000000e+00 : f32
    %125 = vector.broadcast %cst_78 : f32 to vector<8x128xf32>
    %126 = arith.extf %124 : vector<8x1xbf16> to vector<8x1xf32>
    %127 = arith.extf %92 : vector<1x128xbf16> to vector<1x128xf32>
    %128 = vector.broadcast %126 : vector<8x1xf32> to vector<8x128xf32>
    %129 = vector.broadcast %127 : vector<1x128xf32> to vector<8x128xf32>
    %130 = arith.mulf %128, %129 : vector<8x128xf32>
    %131 = arith.addf %125, %130 : vector<8x128xf32>
    %132 = arith.addf %50, %131 : vector<8x128xf32>
    %c0_79 = arith.constant 0 : index
    %c1_80 = arith.constant 1 : index
    %c4_81 = arith.constant 4 : index
    %c0_82 = arith.constant 0 : index
    %c0_83 = arith.constant 0 : index
    %133 = vector.load %arg1[%c0_79, %c1_80, %c4_81, %c0_82, %c0_83] : memref<1x4x9x9x1xbf16, #tpu.memory_space<vmem>>, vector<1x1x1x8x1xbf16>
    %134 = vector.shape_cast %133 : vector<1x1x1x8x1xbf16> to vector<8x1xbf16>
    %cst_84 = arith.constant 0.000000e+00 : f32
    %135 = vector.broadcast %cst_84 : f32 to vector<8x128xf32>
    %136 = arith.extf %134 : vector<8x1xbf16> to vector<8x1xf32>
    %137 = arith.extf %92 : vector<1x128xbf16> to vector<1x128xf32>
    %138 = vector.broadcast %136 : vector<8x1xf32> to vector<8x128xf32>
    %139 = vector.broadcast %137 : vector<1x128xf32> to vector<8x128xf32>
    %140 = arith.mulf %138, %139 : vector<8x128xf32>
    %141 = arith.addf %135, %140 : vector<8x128xf32>
    %142 = arith.addf %60, %141 : vector<8x128xf32>
    %c0_85 = arith.constant 0 : index
    %c1_86 = arith.constant 1 : index
    %c5_87 = arith.constant 5 : index
    %c0_88 = arith.constant 0 : index
    %c0_89 = arith.constant 0 : index
    %143 = vector.load %arg1[%c0_85, %c1_86, %c5_87, %c0_88, %c0_89] : memref<1x4x9x9x1xbf16, #tpu.memory_space<vmem>>, vector<1x1x1x8x1xbf16>
    %144 = vector.shape_cast %143 : vector<1x1x1x8x1xbf16> to vector<8x1xbf16>
    %cst_90 = arith.constant 0.000000e+00 : f32
    %145 = vector.broadcast %cst_90 : f32 to vector<8x128xf32>
    %146 = arith.extf %144 : vector<8x1xbf16> to vector<8x1xf32>
    %147 = arith.extf %92 : vector<1x128xbf16> to vector<1x128xf32>
    %148 = vector.broadcast %146 : vector<8x1xf32> to vector<8x128xf32>
    %149 = vector.broadcast %147 : vector<1x128xf32> to vector<8x128xf32>
    %150 = arith.mulf %148, %149 : vector<8x128xf32>
    %151 = arith.addf %145, %150 : vector<8x128xf32>
    %152 = arith.addf %70, %151 : vector<8x128xf32>
    %c0_91 = arith.constant 0 : index
    %c1_92 = arith.constant 1 : index
    %c6_93 = arith.constant 6 : index
    %c0_94 = arith.constant 0 : index
    %c0_95 = arith.constant 0 : index
    %153 = vector.load %arg1[%c0_91, %c1_92, %c6_93, %c0_94, %c0_95] : memref<1x4x9x9x1xbf16, #tpu.memory_space<vmem>>, vector<1x1x1x8x1xbf16>
    %154 = vector.shape_cast %153 : vector<1x1x1x8x1xbf16> to vector<8x1xbf16>
    %cst_96 = arith.constant 0.000000e+00 : f32
    %155 = vector.broadcast %cst_96 : f32 to vector<8x128xf32>
    %156 = arith.extf %154 : vector<8x1xbf16> to vector<8x1xf32>
    %157 = arith.extf %92 : vector<1x128xbf16> to vector<1x128xf32>
    %158 = vector.broadcast %156 : vector<8x1xf32> to vector<8x128xf32>
    %159 = vector.broadcast %157 : vector<1x128xf32> to vector<8x128xf32>
    %160 = arith.mulf %158, %159 : vector<8x128xf32>
    %161 = arith.addf %155, %160 : vector<8x128xf32>
    %162 = arith.addf %80, %161 : vector<8x128xf32>
    %c0_97 = arith.constant 0 : index
    %c1_98 = arith.constant 1 : index
    %c7_99 = arith.constant 7 : index
    %c0_100 = arith.constant 0 : index
    %c0_101 = arith.constant 0 : index
    %163 = vector.load %arg1[%c0_97, %c1_98, %c7_99, %c0_100, %c0_101] : memref<1x4x9x9x1xbf16, #tpu.memory_space<vmem>>, vector<1x1x1x8x1xbf16>
    %164 = vector.shape_cast %163 : vector<1x1x1x8x1xbf16> to vector<8x1xbf16>
    %cst_102 = arith.constant 0.000000e+00 : f32
    %165 = vector.broadcast %cst_102 : f32 to vector<8x128xf32>
    %166 = arith.extf %164 : vector<8x1xbf16> to vector<8x1xf32>
    %167 = arith.extf %92 : vector<1x128xbf16> to vector<1x128xf32>
    %168 = vector.broadcast %166 : vector<8x1xf32> to vector<8x128xf32>
    %169 = vector.broadcast %167 : vector<1x128xf32> to vector<8x128xf32>
    %170 = arith.mulf %168, %169 : vector<8x128xf32>
    %171 = arith.addf %165, %170 : vector<8x128xf32>
    %172 = arith.addf %90, %171 : vector<8x128xf32>
    %c2_103 = arith.constant 2 : index
    %c0_104 = arith.constant 0 : index
    %c0_105 = arith.constant 0 : index
    %173 = vector.load %arg2[%c2_103, %c0_104, %c0_105] : memref<9x1x128xbf16, #tpu.memory_space<vmem>>, vector<1x1x128xbf16>
    %174 = vector.shape_cast %173 : vector<1x1x128xbf16> to vector<1x128xbf16>
    %c0_106 = arith.constant 0 : index
    %c0_107 = arith.constant 0 : index
    %c0_108 = arith.constant 0 : index
    %c1_109 = arith.constant 1 : index
    %c0_110 = arith.constant 0 : index
    %175 = vector.load %arg1[%c0_106, %c0_107, %c0_108, %c1_109, %c0_110] : memref<1x4x9x9x1xbf16, #tpu.memory_space<vmem>>, vector<1x1x1x8x1xbf16>
    %176 = vector.shape_cast %175 : vector<1x1x1x8x1xbf16> to vector<8x1xbf16>
    %cst_111 = arith.constant 0.000000e+00 : f32
    %177 = vector.broadcast %cst_111 : f32 to vector<8x128xf32>
    %178 = arith.extf %176 : vector<8x1xbf16> to vector<8x1xf32>
    %179 = arith.extf %174 : vector<1x128xbf16> to vector<1x128xf32>
    %180 = vector.broadcast %178 : vector<8x1xf32> to vector<8x128xf32>
    %181 = vector.broadcast %179 : vector<1x128xf32> to vector<8x128xf32>
    %182 = arith.mulf %180, %181 : vector<8x128xf32>
    %183 = arith.addf %177, %182 : vector<8x128xf32>
    %184 = arith.addf %102, %183 : vector<8x128xf32>
    %c0_112 = arith.constant 0 : index
    %c0_113 = arith.constant 0 : index
    %c1_114 = arith.constant 1 : index
    %c1_115 = arith.constant 1 : index
    %c0_116 = arith.constant 0 : index
    %185 = vector.load %arg1[%c0_112, %c0_113, %c1_114, %c1_115, %c0_116] : memref<1x4x9x9x1xbf16, #tpu.memory_space<vmem>>, vector<1x1x1x8x1xbf16>
    %186 = vector.shape_cast %185 : vector<1x1x1x8x1xbf16> to vector<8x1xbf16>
    %cst_117 = arith.constant 0.000000e+00 : f32
    %187 = vector.broadcast %cst_117 : f32 to vector<8x128xf32>
    %188 = arith.extf %186 : vector<8x1xbf16> to vector<8x1xf32>
    %189 = arith.extf %174 : vector<1x128xbf16> to vector<1x128xf32>
    %190 = vector.broadcast %188 : vector<8x1xf32> to vector<8x128xf32>
    %191 = vector.broadcast %189 : vector<1x128xf32> to vector<8x128xf32>
    %192 = arith.mulf %190, %191 : vector<8x128xf32>
    %193 = arith.addf %187, %192 : vector<8x128xf32>
    %194 = arith.addf %112, %193 : vector<8x128xf32>
    %c0_118 = arith.constant 0 : index
    %c0_119 = arith.constant 0 : index
    %c2_120 = arith.constant 2 : index
    %c1_121 = arith.constant 1 : index
    %c0_122 = arith.constant 0 : index
    %195 = vector.load %arg1[%c0_118, %c0_119, %c2_120, %c1_121, %c0_122] : memref<1x4x9x9x1xbf16, #tpu.memory_space<vmem>>, vector<1x1x1x8x1xbf16>
    %196 = vector.shape_cast %195 : vector<1x1x1x8x1xbf16> to vector<8x1xbf16>
    %cst_123 = arith.constant 0.000000e+00 : f32
    %197 = vector.broadcast %cst_123 : f32 to vector<8x128xf32>
    %198 = arith.extf %196 : vector<8x1xbf16> to vector<8x1xf32>
    %199 = arith.extf %174 : vector<1x128xbf16> to vector<1x128xf32>
    %200 = vector.broadcast %198 : vector<8x1xf32> to vector<8x128xf32>
    %201 = vector.broadcast %199 : vector<1x128xf32> to vector<8x128xf32>
    %202 = arith.mulf %200, %201 : vector<8x128xf32>
    %203 = arith.addf %197, %202 : vector<8x128xf32>
    %204 = arith.addf %122, %203 : vector<8x128xf32>
    %c0_124 = arith.constant 0 : index
    %c0_125 = arith.constant 0 : index
    %c3_126 = arith.constant 3 : index
    %c1_127 = arith.constant 1 : index
    %c0_128 = arith.constant 0 : index
    %205 = vector.load %arg1[%c0_124, %c0_125, %c3_126, %c1_127, %c0_128] : memref<1x4x9x9x1xbf16, #tpu.memory_space<vmem>>, vector<1x1x1x8x1xbf16>
    %206 = vector.shape_cast %205 : vector<1x1x1x8x1xbf16> to vector<8x1xbf16>
    %cst_129 = arith.constant 0.000000e+00 : f32
    %207 = vector.broadcast %cst_129 : f32 to vector<8x128xf32>
    %208 = arith.extf %206 : vector<8x1xbf16> to vector<8x1xf32>
    %209 = arith.extf %174 : vector<1x128xbf16> to vector<1x128xf32>
    %210 = vector.broadcast %208 : vector<8x1xf32> to vector<8x128xf32>
    %211 = vector.broadcast %209 : vector<1x128xf32> to vector<8x128xf32>
    %212 = arith.mulf %210, %211 : vector<8x128xf32>
    %213 = arith.addf %207, %212 : vector<8x128xf32>
    %214 = arith.addf %132, %213 : vector<8x128xf32>
    %c0_130 = arith.constant 0 : index
    %c0_131 = arith.constant 0 : index
    %c4_132 = arith.constant 4 : index
    %c1_133 = arith.constant 1 : index
    %c0_134 = arith.constant 0 : index
    %215 = vector.load %arg1[%c0_130, %c0_131, %c4_132, %c1_133, %c0_134] : memref<1x4x9x9x1xbf16, #tpu.memory_space<vmem>>, vector<1x1x1x8x1xbf16>
    %216 = vector.shape_cast %215 : vector<1x1x1x8x1xbf16> to vector<8x1xbf16>
    %cst_135 = arith.constant 0.000000e+00 : f32
    %217 = vector.broadcast %cst_135 : f32 to vector<8x128xf32>
    %218 = arith.extf %216 : vector<8x1xbf16> to vector<8x1xf32>
    %219 = arith.extf %174 : vector<1x128xbf16> to vector<1x128xf32>
    %220 = vector.broadcast %218 : vector<8x1xf32> to vector<8x128xf32>
    %221 = vector.broadcast %219 : vector<1x128xf32> to vector<8x128xf32>
    %222 = arith.mulf %220, %221 : vector<8x128xf32>
    %223 = arith.addf %217, %222 : vector<8x128xf32>
    %224 = arith.addf %142, %223 : vector<8x128xf32>
    %c0_136 = arith.constant 0 : index
    %c0_137 = arith.constant 0 : index
    %c5_138 = arith.constant 5 : index
    %c1_139 = arith.constant 1 : index
    %c0_140 = arith.constant 0 : index
    %225 = vector.load %arg1[%c0_136, %c0_137, %c5_138, %c1_139, %c0_140] : memref<1x4x9x9x1xbf16, #tpu.memory_space<vmem>>, vector<1x1x1x8x1xbf16>
    %226 = vector.shape_cast %225 : vector<1x1x1x8x1xbf16> to vector<8x1xbf16>
    %cst_141 = arith.constant 0.000000e+00 : f32
    %227 = vector.broadcast %cst_141 : f32 to vector<8x128xf32>
    %228 = arith.extf %226 : vector<8x1xbf16> to vector<8x1xf32>
    %229 = arith.extf %174 : vector<1x128xbf16> to vector<1x128xf32>
    %230 = vector.broadcast %228 : vector<8x1xf32> to vector<8x128xf32>
    %231 = vector.broadcast %229 : vector<1x128xf32> to vector<8x128xf32>
    %232 = arith.mulf %230, %231 : vector<8x128xf32>
    %233 = arith.addf %227, %232 : vector<8x128xf32>
    %234 = arith.addf %152, %233 : vector<8x128xf32>
    %c0_142 = arith.constant 0 : index
    %c0_143 = arith.constant 0 : index
    %c6_144 = arith.constant 6 : index
    %c1_145 = arith.constant 1 : index
    %c0_146 = arith.constant 0 : index
    %235 = vector.load %arg1[%c0_142, %c0_143, %c6_144, %c1_145, %c0_146] : memref<1x4x9x9x1xbf16, #tpu.memory_space<vmem>>, vector<1x1x1x8x1xbf16>
    %236 = vector.shape_cast %235 : vector<1x1x1x8x1xbf16> to vector<8x1xbf16>
    %cst_147 = arith.constant 0.000000e+00 : f32
    %237 = vector.broadcast %cst_147 : f32 to vector<8x128xf32>
    %238 = arith.extf %236 : vector<8x1xbf16> to vector<8x1xf32>
    %239 = arith.extf %174 : vector<1x128xbf16> to vector<1x128xf32>
    %240 = vector.broadcast %238 : vector<8x1xf32> to vector<8x128xf32>
    %241 = vector.broadcast %239 : vector<1x128xf32> to vector<8x128xf32>
    %242 = arith.mulf %240, %241 : vector<8x128xf32>
    %243 = arith.addf %237, %242 : vector<8x128xf32>
    %244 = arith.addf %162, %243 : vector<8x128xf32>
    %c0_148 = arith.constant 0 : index
    %c0_149 = arith.constant 0 : index
    %c7_150 = arith.constant 7 : index
    %c1_151 = arith.constant 1 : index
    %c0_152 = arith.constant 0 : index
    %245 = vector.load %arg1[%c0_148, %c0_149, %c7_150, %c1_151, %c0_152] : memref<1x4x9x9x1xbf16, #tpu.memory_space<vmem>>, vector<1x1x1x8x1xbf16>
    %246 = vector.shape_cast %245 : vector<1x1x1x8x1xbf16> to vector<8x1xbf16>
    %cst_153 = arith.constant 0.000000e+00 : f32
    %247 = vector.broadcast %cst_153 : f32 to vector<8x128xf32>
    %248 = arith.extf %246 : vector<8x1xbf16> to vector<8x1xf32>
    %249 = arith.extf %174 : vector<1x128xbf16> to vector<1x128xf32>
    %250 = vector.broadcast %248 : vector<8x1xf32> to vector<8x128xf32>
    %251 = vector.broadcast %249 : vector<1x128xf32> to vector<8x128xf32>
    %252 = arith.mulf %250, %251 : vector<8x128xf32>
    %253 = arith.addf %247, %252 : vector<8x128xf32>
    %254 = arith.addf %172, %253 : vector<8x128xf32>
    %c3_154 = arith.constant 3 : index
    %c0_155 = arith.constant 0 : index
    %c0_156 = arith.constant 0 : index
    %255 = vector.load %arg2[%c3_154, %c0_155, %c0_156] : memref<9x1x128xbf16, #tpu.memory_space<vmem>>, vector<1x1x128xbf16>
    %256 = vector.shape_cast %255 : vector<1x1x128xbf16> to vector<1x128xbf16>
    %c0_157 = arith.constant 0 : index
    %c2_158 = arith.constant 2 : index
    %c0_159 = arith.constant 0 : index
    %c0_160 = arith.constant 0 : index
    %c0_161 = arith.constant 0 : index
    %257 = vector.load %arg1[%c0_157, %c2_158, %c0_159, %c0_160, %c0_161] : memref<1x4x9x9x1xbf16, #tpu.memory_space<vmem>>, vector<1x1x1x8x1xbf16>
    %258 = vector.shape_cast %257 : vector<1x1x1x8x1xbf16> to vector<8x1xbf16>
    %cst_162 = arith.constant 0.000000e+00 : f32
    %259 = vector.broadcast %cst_162 : f32 to vector<8x128xf32>
    %260 = arith.extf %258 : vector<8x1xbf16> to vector<8x1xf32>
    %261 = arith.extf %256 : vector<1x128xbf16> to vector<1x128xf32>
    %262 = vector.broadcast %260 : vector<8x1xf32> to vector<8x128xf32>
    %263 = vector.broadcast %261 : vector<1x128xf32> to vector<8x128xf32>
    %264 = arith.mulf %262, %263 : vector<8x128xf32>
    %265 = arith.addf %259, %264 : vector<8x128xf32>
    %266 = arith.addf %184, %265 : vector<8x128xf32>
    %c0_163 = arith.constant 0 : index
    %c2_164 = arith.constant 2 : index
    %c1_165 = arith.constant 1 : index
    %c0_166 = arith.constant 0 : index
    %c0_167 = arith.constant 0 : index
    %267 = vector.load %arg1[%c0_163, %c2_164, %c1_165, %c0_166, %c0_167] : memref<1x4x9x9x1xbf16, #tpu.memory_space<vmem>>, vector<1x1x1x8x1xbf16>
    %268 = vector.shape_cast %267 : vector<1x1x1x8x1xbf16> to vector<8x1xbf16>
    %cst_168 = arith.constant 0.000000e+00 : f32
    %269 = vector.broadcast %cst_168 : f32 to vector<8x128xf32>
    %270 = arith.extf %268 : vector<8x1xbf16> to vector<8x1xf32>
    %271 = arith.extf %256 : vector<1x128xbf16> to vector<1x128xf32>
    %272 = vector.broadcast %270 : vector<8x1xf32> to vector<8x128xf32>
    %273 = vector.broadcast %271 : vector<1x128xf32> to vector<8x128xf32>
    %274 = arith.mulf %272, %273 : vector<8x128xf32>
    %275 = arith.addf %269, %274 : vector<8x128xf32>
    %276 = arith.addf %194, %275 : vector<8x128xf32>
    %c0_169 = arith.constant 0 : index
    %c2_170 = arith.constant 2 : index
    %c2_171 = arith.constant 2 : index
    %c0_172 = arith.constant 0 : index
    %c0_173 = arith.constant 0 : index
    %277 = vector.load %arg1[%c0_169, %c2_170, %c2_171, %c0_172, %c0_173] : memref<1x4x9x9x1xbf16, #tpu.memory_space<vmem>>, vector<1x1x1x8x1xbf16>
    %278 = vector.shape_cast %277 : vector<1x1x1x8x1xbf16> to vector<8x1xbf16>
    %cst_174 = arith.constant 0.000000e+00 : f32
    %279 = vector.broadcast %cst_174 : f32 to vector<8x128xf32>
    %280 = arith.extf %278 : vector<8x1xbf16> to vector<8x1xf32>
    %281 = arith.extf %256 : vector<1x128xbf16> to vector<1x128xf32>
    %282 = vector.broadcast %280 : vector<8x1xf32> to vector<8x128xf32>
    %283 = vector.broadcast %281 : vector<1x128xf32> to vector<8x128xf32>
    %284 = arith.mulf %282, %283 : vector<8x128xf32>
    %285 = arith.addf %279, %284 : vector<8x128xf32>
    %286 = arith.addf %204, %285 : vector<8x128xf32>
    %c0_175 = arith.constant 0 : index
    %c2_176 = arith.constant 2 : index
    %c3_177 = arith.constant 3 : index
    %c0_178 = arith.constant 0 : index
    %c0_179 = arith.constant 0 : index
    %287 = vector.load %arg1[%c0_175, %c2_176, %c3_177, %c0_178, %c0_179] : memref<1x4x9x9x1xbf16, #tpu.memory_space<vmem>>, vector<1x1x1x8x1xbf16>
    %288 = vector.shape_cast %287 : vector<1x1x1x8x1xbf16> to vector<8x1xbf16>
    %cst_180 = arith.constant 0.000000e+00 : f32
    %289 = vector.broadcast %cst_180 : f32 to vector<8x128xf32>
    %290 = arith.extf %288 : vector<8x1xbf16> to vector<8x1xf32>
    %291 = arith.extf %256 : vector<1x128xbf16> to vector<1x128xf32>
    %292 = vector.broadcast %290 : vector<8x1xf32> to vector<8x128xf32>
    %293 = vector.broadcast %291 : vector<1x128xf32> to vector<8x128xf32>
    %294 = arith.mulf %292, %293 : vector<8x128xf32>
    %295 = arith.addf %289, %294 : vector<8x128xf32>
    %296 = arith.addf %214, %295 : vector<8x128xf32>
    %c0_181 = arith.constant 0 : index
    %c2_182 = arith.constant 2 : index
    %c4_183 = arith.constant 4 : index
    %c0_184 = arith.constant 0 : index
    %c0_185 = arith.constant 0 : index
    %297 = vector.load %arg1[%c0_181, %c2_182, %c4_183, %c0_184, %c0_185] : memref<1x4x9x9x1xbf16, #tpu.memory_space<vmem>>, vector<1x1x1x8x1xbf16>
    %298 = vector.shape_cast %297 : vector<1x1x1x8x1xbf16> to vector<8x1xbf16>
    %cst_186 = arith.constant 0.000000e+00 : f32
    %299 = vector.broadcast %cst_186 : f32 to vector<8x128xf32>
    %300 = arith.extf %298 : vector<8x1xbf16> to vector<8x1xf32>
    %301 = arith.extf %256 : vector<1x128xbf16> to vector<1x128xf32>
    %302 = vector.broadcast %300 : vector<8x1xf32> to vector<8x128xf32>
    %303 = vector.broadcast %301 : vector<1x128xf32> to vector<8x128xf32>
    %304 = arith.mulf %302, %303 : vector<8x128xf32>
    %305 = arith.addf %299, %304 : vector<8x128xf32>
    %306 = arith.addf %224, %305 : vector<8x128xf32>
    %c0_187 = arith.constant 0 : index
    %c2_188 = arith.constant 2 : index
    %c5_189 = arith.constant 5 : index
    %c0_190 = arith.constant 0 : index
    %c0_191 = arith.constant 0 : index
    %307 = vector.load %arg1[%c0_187, %c2_188, %c5_189, %c0_190, %c0_191] : memref<1x4x9x9x1xbf16, #tpu.memory_space<vmem>>, vector<1x1x1x8x1xbf16>
    %308 = vector.shape_cast %307 : vector<1x1x1x8x1xbf16> to vector<8x1xbf16>
    %cst_192 = arith.constant 0.000000e+00 : f32
    %309 = vector.broadcast %cst_192 : f32 to vector<8x128xf32>
    %310 = arith.extf %308 : vector<8x1xbf16> to vector<8x1xf32>
    %311 = arith.extf %256 : vector<1x128xbf16> to vector<1x128xf32>
    %312 = vector.broadcast %310 : vector<8x1xf32> to vector<8x128xf32>
    %313 = vector.broadcast %311 : vector<1x128xf32> to vector<8x128xf32>
    %314 = arith.mulf %312, %313 : vector<8x128xf32>
    %315 = arith.addf %309, %314 : vector<8x128xf32>
    %316 = arith.addf %234, %315 : vector<8x128xf32>
    %c0_193 = arith.constant 0 : index
    %c2_194 = arith.constant 2 : index
    %c6_195 = arith.constant 6 : index
    %c0_196 = arith.constant 0 : index
    %c0_197 = arith.constant 0 : index
    %317 = vector.load %arg1[%c0_193, %c2_194, %c6_195, %c0_196, %c0_197] : memref<1x4x9x9x1xbf16, #tpu.memory_space<vmem>>, vector<1x1x1x8x1xbf16>
    %318 = vector.shape_cast %317 : vector<1x1x1x8x1xbf16> to vector<8x1xbf16>
    %cst_198 = arith.constant 0.000000e+00 : f32
    %319 = vector.broadcast %cst_198 : f32 to vector<8x128xf32>
    %320 = arith.extf %318 : vector<8x1xbf16> to vector<8x1xf32>
    %321 = arith.extf %256 : vector<1x128xbf16> to vector<1x128xf32>
    %322 = vector.broadcast %320 : vector<8x1xf32> to vector<8x128xf32>
    %323 = vector.broadcast %321 : vector<1x128xf32> to vector<8x128xf32>
    %324 = arith.mulf %322, %323 : vector<8x128xf32>
    %325 = arith.addf %319, %324 : vector<8x128xf32>
    %326 = arith.addf %244, %325 : vector<8x128xf32>
    %c0_199 = arith.constant 0 : index
    %c2_200 = arith.constant 2 : index
    %c7_201 = arith.constant 7 : index
    %c0_202 = arith.constant 0 : index
    %c0_203 = arith.constant 0 : index
    %327 = vector.load %arg1[%c0_199, %c2_200, %c7_201, %c0_202, %c0_203] : memref<1x4x9x9x1xbf16, #tpu.memory_space<vmem>>, vector<1x1x1x8x1xbf16>
    %328 = vector.shape_cast %327 : vector<1x1x1x8x1xbf16> to vector<8x1xbf16>
    %cst_204 = arith.constant 0.000000e+00 : f32
    %329 = vector.broadcast %cst_204 : f32 to vector<8x128xf32>
    %330 = arith.extf %328 : vector<8x1xbf16> to vector<8x1xf32>
    %331 = arith.extf %256 : vector<1x128xbf16> to vector<1x128xf32>
    %332 = vector.broadcast %330 : vector<8x1xf32> to vector<8x128xf32>
    %333 = vector.broadcast %331 : vector<1x128xf32> to vector<8x128xf32>
    %334 = arith.mulf %332, %333 : vector<8x128xf32>
    %335 = arith.addf %329, %334 : vector<8x128xf32>
    %336 = arith.addf %254, %335 : vector<8x128xf32>
    %c4_205 = arith.constant 4 : index
    %c0_206 = arith.constant 0 : index
    %c0_207 = arith.constant 0 : index
    %337 = vector.load %arg2[%c4_205, %c0_206, %c0_207] : memref<9x1x128xbf16, #tpu.memory_space<vmem>>, vector<1x1x128xbf16>
    %338 = vector.shape_cast %337 : vector<1x1x128xbf16> to vector<1x128xbf16>
    %c0_208 = arith.constant 0 : index
    %c3_209 = arith.constant 3 : index
    %c0_210 = arith.constant 0 : index
    %c0_211 = arith.constant 0 : index
    %c0_212 = arith.constant 0 : index
    %339 = vector.load %arg1[%c0_208, %c3_209, %c0_210, %c0_211, %c0_212] : memref<1x4x9x9x1xbf16, #tpu.memory_space<vmem>>, vector<1x1x1x8x1xbf16>
    %340 = vector.shape_cast %339 : vector<1x1x1x8x1xbf16> to vector<8x1xbf16>
    %cst_213 = arith.constant 0.000000e+00 : f32
    %341 = vector.broadcast %cst_213 : f32 to vector<8x128xf32>
    %342 = arith.extf %340 : vector<8x1xbf16> to vector<8x1xf32>
    %343 = arith.extf %338 : vector<1x128xbf16> to vector<1x128xf32>
    %344 = vector.broadcast %342 : vector<8x1xf32> to vector<8x128xf32>
    %345 = vector.broadcast %343 : vector<1x128xf32> to vector<8x128xf32>
    %346 = arith.mulf %344, %345 : vector<8x128xf32>
    %347 = arith.addf %341, %346 : vector<8x128xf32>
    %348 = arith.addf %266, %347 : vector<8x128xf32>
    %c0_214 = arith.constant 0 : index
    %c3_215 = arith.constant 3 : index
    %c1_216 = arith.constant 1 : index
    %c0_217 = arith.constant 0 : index
    %c0_218 = arith.constant 0 : index
    %349 = vector.load %arg1[%c0_214, %c3_215, %c1_216, %c0_217, %c0_218] : memref<1x4x9x9x1xbf16, #tpu.memory_space<vmem>>, vector<1x1x1x8x1xbf16>
    %350 = vector.shape_cast %349 : vector<1x1x1x8x1xbf16> to vector<8x1xbf16>
    %cst_219 = arith.constant 0.000000e+00 : f32
    %351 = vector.broadcast %cst_219 : f32 to vector<8x128xf32>
    %352 = arith.extf %350 : vector<8x1xbf16> to vector<8x1xf32>
    %353 = arith.extf %338 : vector<1x128xbf16> to vector<1x128xf32>
    %354 = vector.broadcast %352 : vector<8x1xf32> to vector<8x128xf32>
    %355 = vector.broadcast %353 : vector<1x128xf32> to vector<8x128xf32>
    %356 = arith.mulf %354, %355 : vector<8x128xf32>
    %357 = arith.addf %351, %356 : vector<8x128xf32>
    %358 = arith.addf %276, %357 : vector<8x128xf32>
    %c0_220 = arith.constant 0 : index
    %c3_221 = arith.constant 3 : index
    %c2_222 = arith.constant 2 : index
    %c0_223 = arith.constant 0 : index
    %c0_224 = arith.constant 0 : index
    %359 = vector.load %arg1[%c0_220, %c3_221, %c2_222, %c0_223, %c0_224] : memref<1x4x9x9x1xbf16, #tpu.memory_space<vmem>>, vector<1x1x1x8x1xbf16>
    %360 = vector.shape_cast %359 : vector<1x1x1x8x1xbf16> to vector<8x1xbf16>
    %cst_225 = arith.constant 0.000000e+00 : f32
    %361 = vector.broadcast %cst_225 : f32 to vector<8x128xf32>
    %362 = arith.extf %360 : vector<8x1xbf16> to vector<8x1xf32>
    %363 = arith.extf %338 : vector<1x128xbf16> to vector<1x128xf32>
    %364 = vector.broadcast %362 : vector<8x1xf32> to vector<8x128xf32>
    %365 = vector.broadcast %363 : vector<1x128xf32> to vector<8x128xf32>
    %366 = arith.mulf %364, %365 : vector<8x128xf32>
    %367 = arith.addf %361, %366 : vector<8x128xf32>
    %368 = arith.addf %286, %367 : vector<8x128xf32>
    %c0_226 = arith.constant 0 : index
    %c3_227 = arith.constant 3 : index
    %c3_228 = arith.constant 3 : index
    %c0_229 = arith.constant 0 : index
    %c0_230 = arith.constant 0 : index
    %369 = vector.load %arg1[%c0_226, %c3_227, %c3_228, %c0_229, %c0_230] : memref<1x4x9x9x1xbf16, #tpu.memory_space<vmem>>, vector<1x1x1x8x1xbf16>
    %370 = vector.shape_cast %369 : vector<1x1x1x8x1xbf16> to vector<8x1xbf16>
    %cst_231 = arith.constant 0.000000e+00 : f32
    %371 = vector.broadcast %cst_231 : f32 to vector<8x128xf32>
    %372 = arith.extf %370 : vector<8x1xbf16> to vector<8x1xf32>
    %373 = arith.extf %338 : vector<1x128xbf16> to vector<1x128xf32>
    %374 = vector.broadcast %372 : vector<8x1xf32> to vector<8x128xf32>
    %375 = vector.broadcast %373 : vector<1x128xf32> to vector<8x128xf32>
    %376 = arith.mulf %374, %375 : vector<8x128xf32>
    %377 = arith.addf %371, %376 : vector<8x128xf32>
    %378 = arith.addf %296, %377 : vector<8x128xf32>
    %c0_232 = arith.constant 0 : index
    %c3_233 = arith.constant 3 : index
    %c4_234 = arith.constant 4 : index
    %c0_235 = arith.constant 0 : index
    %c0_236 = arith.constant 0 : index
    %379 = vector.load %arg1[%c0_232, %c3_233, %c4_234, %c0_235, %c0_236] : memref<1x4x9x9x1xbf16, #tpu.memory_space<vmem>>, vector<1x1x1x8x1xbf16>
    %380 = vector.shape_cast %379 : vector<1x1x1x8x1xbf16> to vector<8x1xbf16>
    %cst_237 = arith.constant 0.000000e+00 : f32
    %381 = vector.broadcast %cst_237 : f32 to vector<8x128xf32>
    %382 = arith.extf %380 : vector<8x1xbf16> to vector<8x1xf32>
    %383 = arith.extf %338 : vector<1x128xbf16> to vector<1x128xf32>
    %384 = vector.broadcast %382 : vector<8x1xf32> to vector<8x128xf32>
    %385 = vector.broadcast %383 : vector<1x128xf32> to vector<8x128xf32>
    %386 = arith.mulf %384, %385 : vector<8x128xf32>
    %387 = arith.addf %381, %386 : vector<8x128xf32>
    %388 = arith.addf %306, %387 : vector<8x128xf32>
    %c0_238 = arith.constant 0 : index
    %c3_239 = arith.constant 3 : index
    %c5_240 = arith.constant 5 : index
    %c0_241 = arith.constant 0 : index
    %c0_242 = arith.constant 0 : index
    %389 = vector.load %arg1[%c0_238, %c3_239, %c5_240, %c0_241, %c0_242] : memref<1x4x9x9x1xbf16, #tpu.memory_space<vmem>>, vector<1x1x1x8x1xbf16>
    %390 = vector.shape_cast %389 : vector<1x1x1x8x1xbf16> to vector<8x1xbf16>
    %cst_243 = arith.constant 0.000000e+00 : f32
    %391 = vector.broadcast %cst_243 : f32 to vector<8x128xf32>
    %392 = arith.extf %390 : vector<8x1xbf16> to vector<8x1xf32>
    %393 = arith.extf %338 : vector<1x128xbf16> to vector<1x128xf32>
    %394 = vector.broadcast %392 : vector<8x1xf32> to vector<8x128xf32>
    %395 = vector.broadcast %393 : vector<1x128xf32> to vector<8x128xf32>
    %396 = arith.mulf %394, %395 : vector<8x128xf32>
    %397 = arith.addf %391, %396 : vector<8x128xf32>
    %398 = arith.addf %316, %397 : vector<8x128xf32>
    %c0_244 = arith.constant 0 : index
    %c3_245 = arith.constant 3 : index
    %c6_246 = arith.constant 6 : index
    %c0_247 = arith.constant 0 : index
    %c0_248 = arith.constant 0 : index
    %399 = vector.load %arg1[%c0_244, %c3_245, %c6_246, %c0_247, %c0_248] : memref<1x4x9x9x1xbf16, #tpu.memory_space<vmem>>, vector<1x1x1x8x1xbf16>
    %400 = vector.shape_cast %399 : vector<1x1x1x8x1xbf16> to vector<8x1xbf16>
    %cst_249 = arith.constant 0.000000e+00 : f32
    %401 = vector.broadcast %cst_249 : f32 to vector<8x128xf32>
    %402 = arith.extf %400 : vector<8x1xbf16> to vector<8x1xf32>
    %403 = arith.extf %338 : vector<1x128xbf16> to vector<1x128xf32>
    %404 = vector.broadcast %402 : vector<8x1xf32> to vector<8x128xf32>
    %405 = vector.broadcast %403 : vector<1x128xf32> to vector<8x128xf32>
    %406 = arith.mulf %404, %405 : vector<8x128xf32>
    %407 = arith.addf %401, %406 : vector<8x128xf32>
    %408 = arith.addf %326, %407 : vector<8x128xf32>
    %c0_250 = arith.constant 0 : index
    %c3_251 = arith.constant 3 : index
    %c7_252 = arith.constant 7 : index
    %c0_253 = arith.constant 0 : index
    %c0_254 = arith.constant 0 : index
    %409 = vector.load %arg1[%c0_250, %c3_251, %c7_252, %c0_253, %c0_254] : memref<1x4x9x9x1xbf16, #tpu.memory_space<vmem>>, vector<1x1x1x8x1xbf16>
    %410 = vector.shape_cast %409 : vector<1x1x1x8x1xbf16> to vector<8x1xbf16>
    %cst_255 = arith.constant 0.000000e+00 : f32
    %411 = vector.broadcast %cst_255 : f32 to vector<8x128xf32>
    %412 = arith.extf %410 : vector<8x1xbf16> to vector<8x1xf32>
    %413 = arith.extf %338 : vector<1x128xbf16> to vector<1x128xf32>
    %414 = vector.broadcast %412 : vector<8x1xf32> to vector<8x128xf32>
    %415 = vector.broadcast %413 : vector<1x128xf32> to vector<8x128xf32>
    %416 = arith.mulf %414, %415 : vector<8x128xf32>
    %417 = arith.addf %411, %416 : vector<8x128xf32>
    %418 = arith.addf %336, %417 : vector<8x128xf32>
    %c5_256 = arith.constant 5 : index
    %c0_257 = arith.constant 0 : index
    %c0_258 = arith.constant 0 : index
    %419 = vector.load %arg2[%c5_256, %c0_257, %c0_258] : memref<9x1x128xbf16, #tpu.memory_space<vmem>>, vector<1x1x128xbf16>
    %420 = vector.shape_cast %419 : vector<1x1x128xbf16> to vector<1x128xbf16>
    %c0_259 = arith.constant 0 : index
    %c2_260 = arith.constant 2 : index
    %c0_261 = arith.constant 0 : index
    %c1_262 = arith.constant 1 : index
    %c0_263 = arith.constant 0 : index
    %421 = vector.load %arg1[%c0_259, %c2_260, %c0_261, %c1_262, %c0_263] : memref<1x4x9x9x1xbf16, #tpu.memory_space<vmem>>, vector<1x1x1x8x1xbf16>
    %422 = vector.shape_cast %421 : vector<1x1x1x8x1xbf16> to vector<8x1xbf16>
    %cst_264 = arith.constant 0.000000e+00 : f32
    %423 = vector.broadcast %cst_264 : f32 to vector<8x128xf32>
    %424 = arith.extf %422 : vector<8x1xbf16> to vector<8x1xf32>
    %425 = arith.extf %420 : vector<1x128xbf16> to vector<1x128xf32>
    %426 = vector.broadcast %424 : vector<8x1xf32> to vector<8x128xf32>
    %427 = vector.broadcast %425 : vector<1x128xf32> to vector<8x128xf32>
    %428 = arith.mulf %426, %427 : vector<8x128xf32>
    %429 = arith.addf %423, %428 : vector<8x128xf32>
    %430 = arith.addf %348, %429 : vector<8x128xf32>
    %c0_265 = arith.constant 0 : index
    %c2_266 = arith.constant 2 : index
    %c1_267 = arith.constant 1 : index
    %c1_268 = arith.constant 1 : index
    %c0_269 = arith.constant 0 : index
    %431 = vector.load %arg1[%c0_265, %c2_266, %c1_267, %c1_268, %c0_269] : memref<1x4x9x9x1xbf16, #tpu.memory_space<vmem>>, vector<1x1x1x8x1xbf16>
    %432 = vector.shape_cast %431 : vector<1x1x1x8x1xbf16> to vector<8x1xbf16>
    %cst_270 = arith.constant 0.000000e+00 : f32
    %433 = vector.broadcast %cst_270 : f32 to vector<8x128xf32>
    %434 = arith.extf %432 : vector<8x1xbf16> to vector<8x1xf32>
    %435 = arith.extf %420 : vector<1x128xbf16> to vector<1x128xf32>
    %436 = vector.broadcast %434 : vector<8x1xf32> to vector<8x128xf32>
    %437 = vector.broadcast %435 : vector<1x128xf32> to vector<8x128xf32>
    %438 = arith.mulf %436, %437 : vector<8x128xf32>
    %439 = arith.addf %433, %438 : vector<8x128xf32>
    %440 = arith.addf %358, %439 : vector<8x128xf32>
    %c0_271 = arith.constant 0 : index
    %c2_272 = arith.constant 2 : index
    %c2_273 = arith.constant 2 : index
    %c1_274 = arith.constant 1 : index
    %c0_275 = arith.constant 0 : index
    %441 = vector.load %arg1[%c0_271, %c2_272, %c2_273, %c1_274, %c0_275] : memref<1x4x9x9x1xbf16, #tpu.memory_space<vmem>>, vector<1x1x1x8x1xbf16>
    %442 = vector.shape_cast %441 : vector<1x1x1x8x1xbf16> to vector<8x1xbf16>
    %cst_276 = arith.constant 0.000000e+00 : f32
    %443 = vector.broadcast %cst_276 : f32 to vector<8x128xf32>
    %444 = arith.extf %442 : vector<8x1xbf16> to vector<8x1xf32>
    %445 = arith.extf %420 : vector<1x128xbf16> to vector<1x128xf32>
    %446 = vector.broadcast %444 : vector<8x1xf32> to vector<8x128xf32>
    %447 = vector.broadcast %445 : vector<1x128xf32> to vector<8x128xf32>
    %448 = arith.mulf %446, %447 : vector<8x128xf32>
    %449 = arith.addf %443, %448 : vector<8x128xf32>
    %450 = arith.addf %368, %449 : vector<8x128xf32>
    %c0_277 = arith.constant 0 : index
    %c2_278 = arith.constant 2 : index
    %c3_279 = arith.constant 3 : index
    %c1_280 = arith.constant 1 : index
    %c0_281 = arith.constant 0 : index
    %451 = vector.load %arg1[%c0_277, %c2_278, %c3_279, %c1_280, %c0_281] : memref<1x4x9x9x1xbf16, #tpu.memory_space<vmem>>, vector<1x1x1x8x1xbf16>
    %452 = vector.shape_cast %451 : vector<1x1x1x8x1xbf16> to vector<8x1xbf16>
    %cst_282 = arith.constant 0.000000e+00 : f32
    %453 = vector.broadcast %cst_282 : f32 to vector<8x128xf32>
    %454 = arith.extf %452 : vector<8x1xbf16> to vector<8x1xf32>
    %455 = arith.extf %420 : vector<1x128xbf16> to vector<1x128xf32>
    %456 = vector.broadcast %454 : vector<8x1xf32> to vector<8x128xf32>
    %457 = vector.broadcast %455 : vector<1x128xf32> to vector<8x128xf32>
    %458 = arith.mulf %456, %457 : vector<8x128xf32>
    %459 = arith.addf %453, %458 : vector<8x128xf32>
    %460 = arith.addf %378, %459 : vector<8x128xf32>
    %c0_283 = arith.constant 0 : index
    %c2_284 = arith.constant 2 : index
    %c4_285 = arith.constant 4 : index
    %c1_286 = arith.constant 1 : index
    %c0_287 = arith.constant 0 : index
    %461 = vector.load %arg1[%c0_283, %c2_284, %c4_285, %c1_286, %c0_287] : memref<1x4x9x9x1xbf16, #tpu.memory_space<vmem>>, vector<1x1x1x8x1xbf16>
    %462 = vector.shape_cast %461 : vector<1x1x1x8x1xbf16> to vector<8x1xbf16>
    %cst_288 = arith.constant 0.000000e+00 : f32
    %463 = vector.broadcast %cst_288 : f32 to vector<8x128xf32>
    %464 = arith.extf %462 : vector<8x1xbf16> to vector<8x1xf32>
    %465 = arith.extf %420 : vector<1x128xbf16> to vector<1x128xf32>
    %466 = vector.broadcast %464 : vector<8x1xf32> to vector<8x128xf32>
    %467 = vector.broadcast %465 : vector<1x128xf32> to vector<8x128xf32>
    %468 = arith.mulf %466, %467 : vector<8x128xf32>
    %469 = arith.addf %463, %468 : vector<8x128xf32>
    %470 = arith.addf %388, %469 : vector<8x128xf32>
    %c0_289 = arith.constant 0 : index
    %c2_290 = arith.constant 2 : index
    %c5_291 = arith.constant 5 : index
    %c1_292 = arith.constant 1 : index
    %c0_293 = arith.constant 0 : index
    %471 = vector.load %arg1[%c0_289, %c2_290, %c5_291, %c1_292, %c0_293] : memref<1x4x9x9x1xbf16, #tpu.memory_space<vmem>>, vector<1x1x1x8x1xbf16>
    %472 = vector.shape_cast %471 : vector<1x1x1x8x1xbf16> to vector<8x1xbf16>
    %cst_294 = arith.constant 0.000000e+00 : f32
    %473 = vector.broadcast %cst_294 : f32 to vector<8x128xf32>
    %474 = arith.extf %472 : vector<8x1xbf16> to vector<8x1xf32>
    %475 = arith.extf %420 : vector<1x128xbf16> to vector<1x128xf32>
    %476 = vector.broadcast %474 : vector<8x1xf32> to vector<8x128xf32>
    %477 = vector.broadcast %475 : vector<1x128xf32> to vector<8x128xf32>
    %478 = arith.mulf %476, %477 : vector<8x128xf32>
    %479 = arith.addf %473, %478 : vector<8x128xf32>
    %480 = arith.addf %398, %479 : vector<8x128xf32>
    %c0_295 = arith.constant 0 : index
    %c2_296 = arith.constant 2 : index
    %c6_297 = arith.constant 6 : index
    %c1_298 = arith.constant 1 : index
    %c0_299 = arith.constant 0 : index
    %481 = vector.load %arg1[%c0_295, %c2_296, %c6_297, %c1_298, %c0_299] : memref<1x4x9x9x1xbf16, #tpu.memory_space<vmem>>, vector<1x1x1x8x1xbf16>
    %482 = vector.shape_cast %481 : vector<1x1x1x8x1xbf16> to vector<8x1xbf16>
    %cst_300 = arith.constant 0.000000e+00 : f32
    %483 = vector.broadcast %cst_300 : f32 to vector<8x128xf32>
    %484 = arith.extf %482 : vector<8x1xbf16> to vector<8x1xf32>
    %485 = arith.extf %420 : vector<1x128xbf16> to vector<1x128xf32>
    %486 = vector.broadcast %484 : vector<8x1xf32> to vector<8x128xf32>
    %487 = vector.broadcast %485 : vector<1x128xf32> to vector<8x128xf32>
    %488 = arith.mulf %486, %487 : vector<8x128xf32>
    %489 = arith.addf %483, %488 : vector<8x128xf32>
    %490 = arith.addf %408, %489 : vector<8x128xf32>
    %c0_301 = arith.constant 0 : index
    %c2_302 = arith.constant 2 : index
    %c7_303 = arith.constant 7 : index
    %c1_304 = arith.constant 1 : index
    %c0_305 = arith.constant 0 : index
    %491 = vector.load %arg1[%c0_301, %c2_302, %c7_303, %c1_304, %c0_305] : memref<1x4x9x9x1xbf16, #tpu.memory_space<vmem>>, vector<1x1x1x8x1xbf16>
    %492 = vector.shape_cast %491 : vector<1x1x1x8x1xbf16> to vector<8x1xbf16>
    %cst_306 = arith.constant 0.000000e+00 : f32
    %493 = vector.broadcast %cst_306 : f32 to vector<8x128xf32>
    %494 = arith.extf %492 : vector<8x1xbf16> to vector<8x1xf32>
    %495 = arith.extf %420 : vector<1x128xbf16> to vector<1x128xf32>
    %496 = vector.broadcast %494 : vector<8x1xf32> to vector<8x128xf32>
    %497 = vector.broadcast %495 : vector<1x128xf32> to vector<8x128xf32>
    %498 = arith.mulf %496, %497 : vector<8x128xf32>
    %499 = arith.addf %493, %498 : vector<8x128xf32>
    %500 = arith.addf %418, %499 : vector<8x128xf32>
    %c6_307 = arith.constant 6 : index
    %c0_308 = arith.constant 0 : index
    %c0_309 = arith.constant 0 : index
    %501 = vector.load %arg2[%c6_307, %c0_308, %c0_309] : memref<9x1x128xbf16, #tpu.memory_space<vmem>>, vector<1x1x128xbf16>
    %502 = vector.shape_cast %501 : vector<1x1x128xbf16> to vector<1x128xbf16>
    %c0_310 = arith.constant 0 : index
    %c0_311 = arith.constant 0 : index
    %c1_312 = arith.constant 1 : index
    %c0_313 = arith.constant 0 : index
    %c0_314 = arith.constant 0 : index
    %503 = vector.load %arg1[%c0_310, %c0_311, %c1_312, %c0_313, %c0_314] : memref<1x4x9x9x1xbf16, #tpu.memory_space<vmem>>, vector<1x1x1x8x1xbf16>
    %504 = vector.shape_cast %503 : vector<1x1x1x8x1xbf16> to vector<8x1xbf16>
    %cst_315 = arith.constant 0.000000e+00 : f32
    %505 = vector.broadcast %cst_315 : f32 to vector<8x128xf32>
    %506 = arith.extf %504 : vector<8x1xbf16> to vector<8x1xf32>
    %507 = arith.extf %502 : vector<1x128xbf16> to vector<1x128xf32>
    %508 = vector.broadcast %506 : vector<8x1xf32> to vector<8x128xf32>
    %509 = vector.broadcast %507 : vector<1x128xf32> to vector<8x128xf32>
    %510 = arith.mulf %508, %509 : vector<8x128xf32>
    %511 = arith.addf %505, %510 : vector<8x128xf32>
    %512 = arith.addf %430, %511 : vector<8x128xf32>
    %c0_316 = arith.constant 0 : index
    %c0_317 = arith.constant 0 : index
    %c2_318 = arith.constant 2 : index
    %c0_319 = arith.constant 0 : index
    %c0_320 = arith.constant 0 : index
    %513 = vector.load %arg1[%c0_316, %c0_317, %c2_318, %c0_319, %c0_320] : memref<1x4x9x9x1xbf16, #tpu.memory_space<vmem>>, vector<1x1x1x8x1xbf16>
    %514 = vector.shape_cast %513 : vector<1x1x1x8x1xbf16> to vector<8x1xbf16>
    %cst_321 = arith.constant 0.000000e+00 : f32
    %515 = vector.broadcast %cst_321 : f32 to vector<8x128xf32>
    %516 = arith.extf %514 : vector<8x1xbf16> to vector<8x1xf32>
    %517 = arith.extf %502 : vector<1x128xbf16> to vector<1x128xf32>
    %518 = vector.broadcast %516 : vector<8x1xf32> to vector<8x128xf32>
    %519 = vector.broadcast %517 : vector<1x128xf32> to vector<8x128xf32>
    %520 = arith.mulf %518, %519 : vector<8x128xf32>
    %521 = arith.addf %515, %520 : vector<8x128xf32>
    %522 = arith.addf %440, %521 : vector<8x128xf32>
    %c0_322 = arith.constant 0 : index
    %c0_323 = arith.constant 0 : index
    %c3_324 = arith.constant 3 : index
    %c0_325 = arith.constant 0 : index
    %c0_326 = arith.constant 0 : index
    %523 = vector.load %arg1[%c0_322, %c0_323, %c3_324, %c0_325, %c0_326] : memref<1x4x9x9x1xbf16, #tpu.memory_space<vmem>>, vector<1x1x1x8x1xbf16>
    %524 = vector.shape_cast %523 : vector<1x1x1x8x1xbf16> to vector<8x1xbf16>
    %cst_327 = arith.constant 0.000000e+00 : f32
    %525 = vector.broadcast %cst_327 : f32 to vector<8x128xf32>
    %526 = arith.extf %524 : vector<8x1xbf16> to vector<8x1xf32>
    %527 = arith.extf %502 : vector<1x128xbf16> to vector<1x128xf32>
    %528 = vector.broadcast %526 : vector<8x1xf32> to vector<8x128xf32>
    %529 = vector.broadcast %527 : vector<1x128xf32> to vector<8x128xf32>
    %530 = arith.mulf %528, %529 : vector<8x128xf32>
    %531 = arith.addf %525, %530 : vector<8x128xf32>
    %532 = arith.addf %450, %531 : vector<8x128xf32>
    %c0_328 = arith.constant 0 : index
    %c0_329 = arith.constant 0 : index
    %c4_330 = arith.constant 4 : index
    %c0_331 = arith.constant 0 : index
    %c0_332 = arith.constant 0 : index
    %533 = vector.load %arg1[%c0_328, %c0_329, %c4_330, %c0_331, %c0_332] : memref<1x4x9x9x1xbf16, #tpu.memory_space<vmem>>, vector<1x1x1x8x1xbf16>
    %534 = vector.shape_cast %533 : vector<1x1x1x8x1xbf16> to vector<8x1xbf16>
    %cst_333 = arith.constant 0.000000e+00 : f32
    %535 = vector.broadcast %cst_333 : f32 to vector<8x128xf32>
    %536 = arith.extf %534 : vector<8x1xbf16> to vector<8x1xf32>
    %537 = arith.extf %502 : vector<1x128xbf16> to vector<1x128xf32>
    %538 = vector.broadcast %536 : vector<8x1xf32> to vector<8x128xf32>
    %539 = vector.broadcast %537 : vector<1x128xf32> to vector<8x128xf32>
    %540 = arith.mulf %538, %539 : vector<8x128xf32>
    %541 = arith.addf %535, %540 : vector<8x128xf32>
    %542 = arith.addf %460, %541 : vector<8x128xf32>
    %c0_334 = arith.constant 0 : index
    %c0_335 = arith.constant 0 : index
    %c5_336 = arith.constant 5 : index
    %c0_337 = arith.constant 0 : index
    %c0_338 = arith.constant 0 : index
    %543 = vector.load %arg1[%c0_334, %c0_335, %c5_336, %c0_337, %c0_338] : memref<1x4x9x9x1xbf16, #tpu.memory_space<vmem>>, vector<1x1x1x8x1xbf16>
    %544 = vector.shape_cast %543 : vector<1x1x1x8x1xbf16> to vector<8x1xbf16>
    %cst_339 = arith.constant 0.000000e+00 : f32
    %545 = vector.broadcast %cst_339 : f32 to vector<8x128xf32>
    %546 = arith.extf %544 : vector<8x1xbf16> to vector<8x1xf32>
    %547 = arith.extf %502 : vector<1x128xbf16> to vector<1x128xf32>
    %548 = vector.broadcast %546 : vector<8x1xf32> to vector<8x128xf32>
    %549 = vector.broadcast %547 : vector<1x128xf32> to vector<8x128xf32>
    %550 = arith.mulf %548, %549 : vector<8x128xf32>
    %551 = arith.addf %545, %550 : vector<8x128xf32>
    %552 = arith.addf %470, %551 : vector<8x128xf32>
    %c0_340 = arith.constant 0 : index
    %c0_341 = arith.constant 0 : index
    %c6_342 = arith.constant 6 : index
    %c0_343 = arith.constant 0 : index
    %c0_344 = arith.constant 0 : index
    %553 = vector.load %arg1[%c0_340, %c0_341, %c6_342, %c0_343, %c0_344] : memref<1x4x9x9x1xbf16, #tpu.memory_space<vmem>>, vector<1x1x1x8x1xbf16>
    %554 = vector.shape_cast %553 : vector<1x1x1x8x1xbf16> to vector<8x1xbf16>
    %cst_345 = arith.constant 0.000000e+00 : f32
    %555 = vector.broadcast %cst_345 : f32 to vector<8x128xf32>
    %556 = arith.extf %554 : vector<8x1xbf16> to vector<8x1xf32>
    %557 = arith.extf %502 : vector<1x128xbf16> to vector<1x128xf32>
    %558 = vector.broadcast %556 : vector<8x1xf32> to vector<8x128xf32>
    %559 = vector.broadcast %557 : vector<1x128xf32> to vector<8x128xf32>
    %560 = arith.mulf %558, %559 : vector<8x128xf32>
    %561 = arith.addf %555, %560 : vector<8x128xf32>
    %562 = arith.addf %480, %561 : vector<8x128xf32>
    %c0_346 = arith.constant 0 : index
    %c0_347 = arith.constant 0 : index
    %c7_348 = arith.constant 7 : index
    %c0_349 = arith.constant 0 : index
    %c0_350 = arith.constant 0 : index
    %563 = vector.load %arg1[%c0_346, %c0_347, %c7_348, %c0_349, %c0_350] : memref<1x4x9x9x1xbf16, #tpu.memory_space<vmem>>, vector<1x1x1x8x1xbf16>
    %564 = vector.shape_cast %563 : vector<1x1x1x8x1xbf16> to vector<8x1xbf16>
    %cst_351 = arith.constant 0.000000e+00 : f32
    %565 = vector.broadcast %cst_351 : f32 to vector<8x128xf32>
    %566 = arith.extf %564 : vector<8x1xbf16> to vector<8x1xf32>
    %567 = arith.extf %502 : vector<1x128xbf16> to vector<1x128xf32>
    %568 = vector.broadcast %566 : vector<8x1xf32> to vector<8x128xf32>
    %569 = vector.broadcast %567 : vector<1x128xf32> to vector<8x128xf32>
    %570 = arith.mulf %568, %569 : vector<8x128xf32>
    %571 = arith.addf %565, %570 : vector<8x128xf32>
    %572 = arith.addf %490, %571 : vector<8x128xf32>
    %c0_352 = arith.constant 0 : index
    %c0_353 = arith.constant 0 : index
    %c8 = arith.constant 8 : index
    %c0_354 = arith.constant 0 : index
    %c0_355 = arith.constant 0 : index
    %573 = vector.load %arg1[%c0_352, %c0_353, %c8, %c0_354, %c0_355] : memref<1x4x9x9x1xbf16, #tpu.memory_space<vmem>>, vector<1x1x1x8x1xbf16>
    %574 = vector.shape_cast %573 : vector<1x1x1x8x1xbf16> to vector<8x1xbf16>
    %cst_356 = arith.constant 0.000000e+00 : f32
    %575 = vector.broadcast %cst_356 : f32 to vector<8x128xf32>
    %576 = arith.extf %574 : vector<8x1xbf16> to vector<8x1xf32>
    %577 = arith.extf %502 : vector<1x128xbf16> to vector<1x128xf32>
    %578 = vector.broadcast %576 : vector<8x1xf32> to vector<8x128xf32>
    %579 = vector.broadcast %577 : vector<1x128xf32> to vector<8x128xf32>
    %580 = arith.mulf %578, %579 : vector<8x128xf32>
    %581 = arith.addf %575, %580 : vector<8x128xf32>
    %582 = arith.addf %500, %581 : vector<8x128xf32>
    %c7_357 = arith.constant 7 : index
    %c0_358 = arith.constant 0 : index
    %c0_359 = arith.constant 0 : index
    %583 = vector.load %arg2[%c7_357, %c0_358, %c0_359] : memref<9x1x128xbf16, #tpu.memory_space<vmem>>, vector<1x1x128xbf16>
    %584 = vector.shape_cast %583 : vector<1x1x128xbf16> to vector<1x128xbf16>
    %c0_360 = arith.constant 0 : index
    %c1_361 = arith.constant 1 : index
    %c1_362 = arith.constant 1 : index
    %c0_363 = arith.constant 0 : index
    %c0_364 = arith.constant 0 : index
    %585 = vector.load %arg1[%c0_360, %c1_361, %c1_362, %c0_363, %c0_364] : memref<1x4x9x9x1xbf16, #tpu.memory_space<vmem>>, vector<1x1x1x8x1xbf16>
    %586 = vector.shape_cast %585 : vector<1x1x1x8x1xbf16> to vector<8x1xbf16>
    %cst_365 = arith.constant 0.000000e+00 : f32
    %587 = vector.broadcast %cst_365 : f32 to vector<8x128xf32>
    %588 = arith.extf %586 : vector<8x1xbf16> to vector<8x1xf32>
    %589 = arith.extf %584 : vector<1x128xbf16> to vector<1x128xf32>
    %590 = vector.broadcast %588 : vector<8x1xf32> to vector<8x128xf32>
    %591 = vector.broadcast %589 : vector<1x128xf32> to vector<8x128xf32>
    %592 = arith.mulf %590, %591 : vector<8x128xf32>
    %593 = arith.addf %587, %592 : vector<8x128xf32>
    %594 = arith.addf %512, %593 : vector<8x128xf32>
    %c0_366 = arith.constant 0 : index
    %c1_367 = arith.constant 1 : index
    %c2_368 = arith.constant 2 : index
    %c0_369 = arith.constant 0 : index
    %c0_370 = arith.constant 0 : index
    %595 = vector.load %arg1[%c0_366, %c1_367, %c2_368, %c0_369, %c0_370] : memref<1x4x9x9x1xbf16, #tpu.memory_space<vmem>>, vector<1x1x1x8x1xbf16>
    %596 = vector.shape_cast %595 : vector<1x1x1x8x1xbf16> to vector<8x1xbf16>
    %cst_371 = arith.constant 0.000000e+00 : f32
    %597 = vector.broadcast %cst_371 : f32 to vector<8x128xf32>
    %598 = arith.extf %596 : vector<8x1xbf16> to vector<8x1xf32>
    %599 = arith.extf %584 : vector<1x128xbf16> to vector<1x128xf32>
    %600 = vector.broadcast %598 : vector<8x1xf32> to vector<8x128xf32>
    %601 = vector.broadcast %599 : vector<1x128xf32> to vector<8x128xf32>
    %602 = arith.mulf %600, %601 : vector<8x128xf32>
    %603 = arith.addf %597, %602 : vector<8x128xf32>
    %604 = arith.addf %522, %603 : vector<8x128xf32>
    %c0_372 = arith.constant 0 : index
    %c1_373 = arith.constant 1 : index
    %c3_374 = arith.constant 3 : index
    %c0_375 = arith.constant 0 : index
    %c0_376 = arith.constant 0 : index
    %605 = vector.load %arg1[%c0_372, %c1_373, %c3_374, %c0_375, %c0_376] : memref<1x4x9x9x1xbf16, #tpu.memory_space<vmem>>, vector<1x1x1x8x1xbf16>
    %606 = vector.shape_cast %605 : vector<1x1x1x8x1xbf16> to vector<8x1xbf16>
    %cst_377 = arith.constant 0.000000e+00 : f32
    %607 = vector.broadcast %cst_377 : f32 to vector<8x128xf32>
    %608 = arith.extf %606 : vector<8x1xbf16> to vector<8x1xf32>
    %609 = arith.extf %584 : vector<1x128xbf16> to vector<1x128xf32>
    %610 = vector.broadcast %608 : vector<8x1xf32> to vector<8x128xf32>
    %611 = vector.broadcast %609 : vector<1x128xf32> to vector<8x128xf32>
    %612 = arith.mulf %610, %611 : vector<8x128xf32>
    %613 = arith.addf %607, %612 : vector<8x128xf32>
    %614 = arith.addf %532, %613 : vector<8x128xf32>
    %c0_378 = arith.constant 0 : index
    %c1_379 = arith.constant 1 : index
    %c4_380 = arith.constant 4 : index
    %c0_381 = arith.constant 0 : index
    %c0_382 = arith.constant 0 : index
    %615 = vector.load %arg1[%c0_378, %c1_379, %c4_380, %c0_381, %c0_382] : memref<1x4x9x9x1xbf16, #tpu.memory_space<vmem>>, vector<1x1x1x8x1xbf16>
    %616 = vector.shape_cast %615 : vector<1x1x1x8x1xbf16> to vector<8x1xbf16>
    %cst_383 = arith.constant 0.000000e+00 : f32
    %617 = vector.broadcast %cst_383 : f32 to vector<8x128xf32>
    %618 = arith.extf %616 : vector<8x1xbf16> to vector<8x1xf32>
    %619 = arith.extf %584 : vector<1x128xbf16> to vector<1x128xf32>
    %620 = vector.broadcast %618 : vector<8x1xf32> to vector<8x128xf32>
    %621 = vector.broadcast %619 : vector<1x128xf32> to vector<8x128xf32>
    %622 = arith.mulf %620, %621 : vector<8x128xf32>
    %623 = arith.addf %617, %622 : vector<8x128xf32>
    %624 = arith.addf %542, %623 : vector<8x128xf32>
    %c0_384 = arith.constant 0 : index
    %c1_385 = arith.constant 1 : index
    %c5_386 = arith.constant 5 : index
    %c0_387 = arith.constant 0 : index
    %c0_388 = arith.constant 0 : index
    %625 = vector.load %arg1[%c0_384, %c1_385, %c5_386, %c0_387, %c0_388] : memref<1x4x9x9x1xbf16, #tpu.memory_space<vmem>>, vector<1x1x1x8x1xbf16>
    %626 = vector.shape_cast %625 : vector<1x1x1x8x1xbf16> to vector<8x1xbf16>
    %cst_389 = arith.constant 0.000000e+00 : f32
    %627 = vector.broadcast %cst_389 : f32 to vector<8x128xf32>
    %628 = arith.extf %626 : vector<8x1xbf16> to vector<8x1xf32>
    %629 = arith.extf %584 : vector<1x128xbf16> to vector<1x128xf32>
    %630 = vector.broadcast %628 : vector<8x1xf32> to vector<8x128xf32>
    %631 = vector.broadcast %629 : vector<1x128xf32> to vector<8x128xf32>
    %632 = arith.mulf %630, %631 : vector<8x128xf32>
    %633 = arith.addf %627, %632 : vector<8x128xf32>
    %634 = arith.addf %552, %633 : vector<8x128xf32>
    %c0_390 = arith.constant 0 : index
    %c1_391 = arith.constant 1 : index
    %c6_392 = arith.constant 6 : index
    %c0_393 = arith.constant 0 : index
    %c0_394 = arith.constant 0 : index
    %635 = vector.load %arg1[%c0_390, %c1_391, %c6_392, %c0_393, %c0_394] : memref<1x4x9x9x1xbf16, #tpu.memory_space<vmem>>, vector<1x1x1x8x1xbf16>
    %636 = vector.shape_cast %635 : vector<1x1x1x8x1xbf16> to vector<8x1xbf16>
    %cst_395 = arith.constant 0.000000e+00 : f32
    %637 = vector.broadcast %cst_395 : f32 to vector<8x128xf32>
    %638 = arith.extf %636 : vector<8x1xbf16> to vector<8x1xf32>
    %639 = arith.extf %584 : vector<1x128xbf16> to vector<1x128xf32>
    %640 = vector.broadcast %638 : vector<8x1xf32> to vector<8x128xf32>
    %641 = vector.broadcast %639 : vector<1x128xf32> to vector<8x128xf32>
    %642 = arith.mulf %640, %641 : vector<8x128xf32>
    %643 = arith.addf %637, %642 : vector<8x128xf32>
    %644 = arith.addf %562, %643 : vector<8x128xf32>
    %c0_396 = arith.constant 0 : index
    %c1_397 = arith.constant 1 : index
    %c7_398 = arith.constant 7 : index
    %c0_399 = arith.constant 0 : index
    %c0_400 = arith.constant 0 : index
    %645 = vector.load %arg1[%c0_396, %c1_397, %c7_398, %c0_399, %c0_400] : memref<1x4x9x9x1xbf16, #tpu.memory_space<vmem>>, vector<1x1x1x8x1xbf16>
    %646 = vector.shape_cast %645 : vector<1x1x1x8x1xbf16> to vector<8x1xbf16>
    %cst_401 = arith.constant 0.000000e+00 : f32
    %647 = vector.broadcast %cst_401 : f32 to vector<8x128xf32>
    %648 = arith.extf %646 : vector<8x1xbf16> to vector<8x1xf32>
    %649 = arith.extf %584 : vector<1x128xbf16> to vector<1x128xf32>
    %650 = vector.broadcast %648 : vector<8x1xf32> to vector<8x128xf32>
    %651 = vector.broadcast %649 : vector<1x128xf32> to vector<8x128xf32>
    %652 = arith.mulf %650, %651 : vector<8x128xf32>
    %653 = arith.addf %647, %652 : vector<8x128xf32>
    %654 = arith.addf %572, %653 : vector<8x128xf32>
    %c0_402 = arith.constant 0 : index
    %c1_403 = arith.constant 1 : index
    %c8_404 = arith.constant 8 : index
    %c0_405 = arith.constant 0 : index
    %c0_406 = arith.constant 0 : index
    %655 = vector.load %arg1[%c0_402, %c1_403, %c8_404, %c0_405, %c0_406] : memref<1x4x9x9x1xbf16, #tpu.memory_space<vmem>>, vector<1x1x1x8x1xbf16>
    %656 = vector.shape_cast %655 : vector<1x1x1x8x1xbf16> to vector<8x1xbf16>
    %cst_407 = arith.constant 0.000000e+00 : f32
    %657 = vector.broadcast %cst_407 : f32 to vector<8x128xf32>
    %658 = arith.extf %656 : vector<8x1xbf16> to vector<8x1xf32>
    %659 = arith.extf %584 : vector<1x128xbf16> to vector<1x128xf32>
    %660 = vector.broadcast %658 : vector<8x1xf32> to vector<8x128xf32>
    %661 = vector.broadcast %659 : vector<1x128xf32> to vector<8x128xf32>
    %662 = arith.mulf %660, %661 : vector<8x128xf32>
    %663 = arith.addf %657, %662 : vector<8x128xf32>
    %664 = arith.addf %582, %663 : vector<8x128xf32>
    %c8_408 = arith.constant 8 : index
    %c0_409 = arith.constant 0 : index
    %c0_410 = arith.constant 0 : index
    %665 = vector.load %arg2[%c8_408, %c0_409, %c0_410] : memref<9x1x128xbf16, #tpu.memory_space<vmem>>, vector<1x1x128xbf16>
    %666 = vector.shape_cast %665 : vector<1x1x128xbf16> to vector<1x128xbf16>
    %c0_411 = arith.constant 0 : index
    %c0_412 = arith.constant 0 : index
    %c1_413 = arith.constant 1 : index
    %c1_414 = arith.constant 1 : index
    %c0_415 = arith.constant 0 : index
    %667 = vector.load %arg1[%c0_411, %c0_412, %c1_413, %c1_414, %c0_415] : memref<1x4x9x9x1xbf16, #tpu.memory_space<vmem>>, vector<1x1x1x8x1xbf16>
    %668 = vector.shape_cast %667 : vector<1x1x1x8x1xbf16> to vector<8x1xbf16>
    %cst_416 = arith.constant 0.000000e+00 : f32
    %669 = vector.broadcast %cst_416 : f32 to vector<8x128xf32>
    %670 = arith.extf %668 : vector<8x1xbf16> to vector<8x1xf32>
    %671 = arith.extf %666 : vector<1x128xbf16> to vector<1x128xf32>
    %672 = vector.broadcast %670 : vector<8x1xf32> to vector<8x128xf32>
    %673 = vector.broadcast %671 : vector<1x128xf32> to vector<8x128xf32>
    %674 = arith.mulf %672, %673 : vector<8x128xf32>
    %675 = arith.addf %669, %674 : vector<8x128xf32>
    %676 = arith.addf %594, %675 : vector<8x128xf32>
    %c0_417 = arith.constant 0 : index
    %c0_418 = arith.constant 0 : index
    %c2_419 = arith.constant 2 : index
    %c1_420 = arith.constant 1 : index
    %c0_421 = arith.constant 0 : index
    %677 = vector.load %arg1[%c0_417, %c0_418, %c2_419, %c1_420, %c0_421] : memref<1x4x9x9x1xbf16, #tpu.memory_space<vmem>>, vector<1x1x1x8x1xbf16>
    %678 = vector.shape_cast %677 : vector<1x1x1x8x1xbf16> to vector<8x1xbf16>
    %cst_422 = arith.constant 0.000000e+00 : f32
    %679 = vector.broadcast %cst_422 : f32 to vector<8x128xf32>
    %680 = arith.extf %678 : vector<8x1xbf16> to vector<8x1xf32>
    %681 = arith.extf %666 : vector<1x128xbf16> to vector<1x128xf32>
    %682 = vector.broadcast %680 : vector<8x1xf32> to vector<8x128xf32>
    %683 = vector.broadcast %681 : vector<1x128xf32> to vector<8x128xf32>
    %684 = arith.mulf %682, %683 : vector<8x128xf32>
    %685 = arith.addf %679, %684 : vector<8x128xf32>
    %686 = arith.addf %604, %685 : vector<8x128xf32>
    %c0_423 = arith.constant 0 : index
    %c0_424 = arith.constant 0 : index
    %c3_425 = arith.constant 3 : index
    %c1_426 = arith.constant 1 : index
    %c0_427 = arith.constant 0 : index
    %687 = vector.load %arg1[%c0_423, %c0_424, %c3_425, %c1_426, %c0_427] : memref<1x4x9x9x1xbf16, #tpu.memory_space<vmem>>, vector<1x1x1x8x1xbf16>
    %688 = vector.shape_cast %687 : vector<1x1x1x8x1xbf16> to vector<8x1xbf16>
    %cst_428 = arith.constant 0.000000e+00 : f32
    %689 = vector.broadcast %cst_428 : f32 to vector<8x128xf32>
    %690 = arith.extf %688 : vector<8x1xbf16> to vector<8x1xf32>
    %691 = arith.extf %666 : vector<1x128xbf16> to vector<1x128xf32>
    %692 = vector.broadcast %690 : vector<8x1xf32> to vector<8x128xf32>
    %693 = vector.broadcast %691 : vector<1x128xf32> to vector<8x128xf32>
    %694 = arith.mulf %692, %693 : vector<8x128xf32>
    %695 = arith.addf %689, %694 : vector<8x128xf32>
    %696 = arith.addf %614, %695 : vector<8x128xf32>
    %c0_429 = arith.constant 0 : index
    %c0_430 = arith.constant 0 : index
    %c4_431 = arith.constant 4 : index
    %c1_432 = arith.constant 1 : index
    %c0_433 = arith.constant 0 : index
    %697 = vector.load %arg1[%c0_429, %c0_430, %c4_431, %c1_432, %c0_433] : memref<1x4x9x9x1xbf16, #tpu.memory_space<vmem>>, vector<1x1x1x8x1xbf16>
    %698 = vector.shape_cast %697 : vector<1x1x1x8x1xbf16> to vector<8x1xbf16>
    %cst_434 = arith.constant 0.000000e+00 : f32
    %699 = vector.broadcast %cst_434 : f32 to vector<8x128xf32>
    %700 = arith.extf %698 : vector<8x1xbf16> to vector<8x1xf32>
    %701 = arith.extf %666 : vector<1x128xbf16> to vector<1x128xf32>
    %702 = vector.broadcast %700 : vector<8x1xf32> to vector<8x128xf32>
    %703 = vector.broadcast %701 : vector<1x128xf32> to vector<8x128xf32>
    %704 = arith.mulf %702, %703 : vector<8x128xf32>
    %705 = arith.addf %699, %704 : vector<8x128xf32>
    %706 = arith.addf %624, %705 : vector<8x128xf32>
    %c0_435 = arith.constant 0 : index
    %c0_436 = arith.constant 0 : index
    %c5_437 = arith.constant 5 : index
    %c1_438 = arith.constant 1 : index
    %c0_439 = arith.constant 0 : index
    %707 = vector.load %arg1[%c0_435, %c0_436, %c5_437, %c1_438, %c0_439] : memref<1x4x9x9x1xbf16, #tpu.memory_space<vmem>>, vector<1x1x1x8x1xbf16>
    %708 = vector.shape_cast %707 : vector<1x1x1x8x1xbf16> to vector<8x1xbf16>
    %cst_440 = arith.constant 0.000000e+00 : f32
    %709 = vector.broadcast %cst_440 : f32 to vector<8x128xf32>
    %710 = arith.extf %708 : vector<8x1xbf16> to vector<8x1xf32>
    %711 = arith.extf %666 : vector<1x128xbf16> to vector<1x128xf32>
    %712 = vector.broadcast %710 : vector<8x1xf32> to vector<8x128xf32>
    %713 = vector.broadcast %711 : vector<1x128xf32> to vector<8x128xf32>
    %714 = arith.mulf %712, %713 : vector<8x128xf32>
    %715 = arith.addf %709, %714 : vector<8x128xf32>
    %716 = arith.addf %634, %715 : vector<8x128xf32>
    %c0_441 = arith.constant 0 : index
    %c0_442 = arith.constant 0 : index
    %c6_443 = arith.constant 6 : index
    %c1_444 = arith.constant 1 : index
    %c0_445 = arith.constant 0 : index
    %717 = vector.load %arg1[%c0_441, %c0_442, %c6_443, %c1_444, %c0_445] : memref<1x4x9x9x1xbf16, #tpu.memory_space<vmem>>, vector<1x1x1x8x1xbf16>
    %718 = vector.shape_cast %717 : vector<1x1x1x8x1xbf16> to vector<8x1xbf16>
    %cst_446 = arith.constant 0.000000e+00 : f32
    %719 = vector.broadcast %cst_446 : f32 to vector<8x128xf32>
    %720 = arith.extf %718 : vector<8x1xbf16> to vector<8x1xf32>
    %721 = arith.extf %666 : vector<1x128xbf16> to vector<1x128xf32>
    %722 = vector.broadcast %720 : vector<8x1xf32> to vector<8x128xf32>
    %723 = vector.broadcast %721 : vector<1x128xf32> to vector<8x128xf32>
    %724 = arith.mulf %722, %723 : vector<8x128xf32>
    %725 = arith.addf %719, %724 : vector<8x128xf32>
    %726 = arith.addf %644, %725 : vector<8x128xf32>
    %c0_447 = arith.constant 0 : index
    %c0_448 = arith.constant 0 : index
    %c7_449 = arith.constant 7 : index
    %c1_450 = arith.constant 1 : index
    %c0_451 = arith.constant 0 : index
    %727 = vector.load %arg1[%c0_447, %c0_448, %c7_449, %c1_450, %c0_451] : memref<1x4x9x9x1xbf16, #tpu.memory_space<vmem>>, vector<1x1x1x8x1xbf16>
    %728 = vector.shape_cast %727 : vector<1x1x1x8x1xbf16> to vector<8x1xbf16>
    %cst_452 = arith.constant 0.000000e+00 : f32
    %729 = vector.broadcast %cst_452 : f32 to vector<8x128xf32>
    %730 = arith.extf %728 : vector<8x1xbf16> to vector<8x1xf32>
    %731 = arith.extf %666 : vector<1x128xbf16> to vector<1x128xf32>
    %732 = vector.broadcast %730 : vector<8x1xf32> to vector<8x128xf32>
    %733 = vector.broadcast %731 : vector<1x128xf32> to vector<8x128xf32>
    %734 = arith.mulf %732, %733 : vector<8x128xf32>
    %735 = arith.addf %729, %734 : vector<8x128xf32>
    %736 = arith.addf %654, %735 : vector<8x128xf32>
    %c0_453 = arith.constant 0 : index
    %c0_454 = arith.constant 0 : index
    %c8_455 = arith.constant 8 : index
    %c1_456 = arith.constant 1 : index
    %c0_457 = arith.constant 0 : index
    %737 = vector.load %arg1[%c0_453, %c0_454, %c8_455, %c1_456, %c0_457] : memref<1x4x9x9x1xbf16, #tpu.memory_space<vmem>>, vector<1x1x1x8x1xbf16>
    %738 = vector.shape_cast %737 : vector<1x1x1x8x1xbf16> to vector<8x1xbf16>
    %cst_458 = arith.constant 0.000000e+00 : f32
    %739 = vector.broadcast %cst_458 : f32 to vector<8x128xf32>
    %740 = arith.extf %738 : vector<8x1xbf16> to vector<8x1xf32>
    %741 = arith.extf %666 : vector<1x128xbf16> to vector<1x128xf32>
    %742 = vector.broadcast %740 : vector<8x1xf32> to vector<8x128xf32>
    %743 = vector.broadcast %741 : vector<1x128xf32> to vector<8x128xf32>
    %744 = arith.mulf %742, %743 : vector<8x128xf32>
    %745 = arith.addf %739, %744 : vector<8x128xf32>
    %746 = arith.addf %664, %745 : vector<8x128xf32>
    %747 = vector.broadcast %0 : vector<1x128xf32> to vector<8x128xf32>
    %748 = arith.addf %676, %747 : vector<8x128xf32>
    %cst_459 = arith.constant 0.000000e+00 : f32
    %749 = vector.broadcast %cst_459 : f32 to vector<8x128xf32>
    %750 = arith.maximumf %748, %749 : vector<8x128xf32>
    %751 = vector.broadcast %0 : vector<1x128xf32> to vector<8x128xf32>
    %752 = arith.addf %686, %751 : vector<8x128xf32>
    %cst_460 = arith.constant 0.000000e+00 : f32
    %753 = vector.broadcast %cst_460 : f32 to vector<8x128xf32>
    %754 = arith.maximumf %752, %753 : vector<8x128xf32>
    %755 = vector.broadcast %0 : vector<1x128xf32> to vector<8x128xf32>
    %756 = arith.addf %696, %755 : vector<8x128xf32>
    %cst_461 = arith.constant 0.000000e+00 : f32
    %757 = vector.broadcast %cst_461 : f32 to vector<8x128xf32>
    %758 = arith.maximumf %756, %757 : vector<8x128xf32>
    %759 = vector.broadcast %0 : vector<1x128xf32> to vector<8x128xf32>
    %760 = arith.addf %706, %759 : vector<8x128xf32>
    %cst_462 = arith.constant 0.000000e+00 : f32
    %761 = vector.broadcast %cst_462 : f32 to vector<8x128xf32>
    %762 = arith.maximumf %760, %761 : vector<8x128xf32>
    %763 = vector.broadcast %0 : vector<1x128xf32> to vector<8x128xf32>
    %764 = arith.addf %716, %763 : vector<8x128xf32>
    %cst_463 = arith.constant 0.000000e+00 : f32
    %765 = vector.broadcast %cst_463 : f32 to vector<8x128xf32>
    %766 = arith.maximumf %764, %765 : vector<8x128xf32>
    %767 = vector.broadcast %0 : vector<1x128xf32> to vector<8x128xf32>
    %768 = arith.addf %726, %767 : vector<8x128xf32>
    %cst_464 = arith.constant 0.000000e+00 : f32
    %769 = vector.broadcast %cst_464 : f32 to vector<8x128xf32>
    %770 = arith.maximumf %768, %769 : vector<8x128xf32>
    %771 = vector.broadcast %0 : vector<1x128xf32> to vector<8x128xf32>
    %772 = arith.addf %736, %771 : vector<8x128xf32>
    %cst_465 = arith.constant 0.000000e+00 : f32
    %773 = vector.broadcast %cst_465 : f32 to vector<8x128xf32>
    %774 = arith.maximumf %772, %773 : vector<8x128xf32>
    %775 = vector.broadcast %0 : vector<1x128xf32> to vector<8x128xf32>
    %776 = arith.addf %746, %775 : vector<8x128xf32>
    %cst_466 = arith.constant 0.000000e+00 : f32
    %777 = vector.broadcast %cst_466 : f32 to vector<8x128xf32>
    %778 = arith.maximumf %776, %777 : vector<8x128xf32>
    %779 = arith.truncf %750 : vector<8x128xf32> to vector<8x128xbf16>
    %c0_467 = arith.constant 0 : index
    %c0_468 = arith.constant 0 : index
    %c0_469 = arith.constant 0 : index
    %c0_470 = arith.constant 0 : index
    %780 = vector.load %arg4[%c0_467, %c0_468, %c0_469, %c0_470] : memref<1x8x8x128xbf16, #tpu.memory_space<vmem>>, vector<1x1x8x128xbf16>
    %781 = vector.shape_cast %780 : vector<1x1x8x128xbf16> to vector<8x128xbf16>
    %782 = vector.shape_cast %779 : vector<8x128xbf16> to vector<1x1x8x128xbf16>
    tpu.vector_store %arg4[%c0_467, %c0_468, %c0_469, %c0_470], %782 {strides = array<i32>} : memref<1x8x8x128xbf16, #tpu.memory_space<vmem>>, vector<1x1x8x128xbf16>,
    %783 = arith.truncf %754 : vector<8x128xf32> to vector<8x128xbf16>
    %c0_471 = arith.constant 0 : index
    %c1_472 = arith.constant 1 : index
    %c0_473 = arith.constant 0 : index
    %c0_474 = arith.constant 0 : index
    %784 = vector.load %arg4[%c0_471, %c1_472, %c0_473, %c0_474] : memref<1x8x8x128xbf16, #tpu.memory_space<vmem>>, vector<1x1x8x128xbf16>
    %785 = vector.shape_cast %784 : vector<1x1x8x128xbf16> to vector<8x128xbf16>
    %786 = vector.shape_cast %783 : vector<8x128xbf16> to vector<1x1x8x128xbf16>
    tpu.vector_store %arg4[%c0_471, %c1_472, %c0_473, %c0_474], %786 {strides = array<i32>} : memref<1x8x8x128xbf16, #tpu.memory_space<vmem>>, vector<1x1x8x128xbf16>,
    %787 = arith.truncf %758 : vector<8x128xf32> to vector<8x128xbf16>
    %c0_475 = arith.constant 0 : index
    %c2_476 = arith.constant 2 : index
    %c0_477 = arith.constant 0 : index
    %c0_478 = arith.constant 0 : index
    %788 = vector.load %arg4[%c0_475, %c2_476, %c0_477, %c0_478] : memref<1x8x8x128xbf16, #tpu.memory_space<vmem>>, vector<1x1x8x128xbf16>
    %789 = vector.shape_cast %788 : vector<1x1x8x128xbf16> to vector<8x128xbf16>
    %790 = vector.shape_cast %787 : vector<8x128xbf16> to vector<1x1x8x128xbf16>
    tpu.vector_store %arg4[%c0_475, %c2_476, %c0_477, %c0_478], %790 {strides = array<i32>} : memref<1x8x8x128xbf16, #tpu.memory_space<vmem>>, vector<1x1x8x128xbf16>,
    %791 = arith.truncf %762 : vector<8x128xf32> to vector<8x128xbf16>
    %c0_479 = arith.constant 0 : index
    %c3_480 = arith.constant 3 : index
    %c0_481 = arith.constant 0 : index
    %c0_482 = arith.constant 0 : index
    %792 = vector.load %arg4[%c0_479, %c3_480, %c0_481, %c0_482] : memref<1x8x8x128xbf16, #tpu.memory_space<vmem>>, vector<1x1x8x128xbf16>
    %793 = vector.shape_cast %792 : vector<1x1x8x128xbf16> to vector<8x128xbf16>
    %794 = vector.shape_cast %791 : vector<8x128xbf16> to vector<1x1x8x128xbf16>
    tpu.vector_store %arg4[%c0_479, %c3_480, %c0_481, %c0_482], %794 {strides = array<i32>} : memref<1x8x8x128xbf16, #tpu.memory_space<vmem>>, vector<1x1x8x128xbf16>,
    %795 = arith.truncf %766 : vector<8x128xf32> to vector<8x128xbf16>
    %c0_483 = arith.constant 0 : index
    %c4_484 = arith.constant 4 : index
    %c0_485 = arith.constant 0 : index
    %c0_486 = arith.constant 0 : index
    %796 = vector.load %arg4[%c0_483, %c4_484, %c0_485, %c0_486] : memref<1x8x8x128xbf16, #tpu.memory_space<vmem>>, vector<1x1x8x128xbf16>
    %797 = vector.shape_cast %796 : vector<1x1x8x128xbf16> to vector<8x128xbf16>
    %798 = vector.shape_cast %795 : vector<8x128xbf16> to vector<1x1x8x128xbf16>
    tpu.vector_store %arg4[%c0_483, %c4_484, %c0_485, %c0_486], %798 {strides = array<i32>} : memref<1x8x8x128xbf16, #tpu.memory_space<vmem>>, vector<1x1x8x128xbf16>,
    %799 = arith.truncf %770 : vector<8x128xf32> to vector<8x128xbf16>
    %c0_487 = arith.constant 0 : index
    %c5_488 = arith.constant 5 : index
    %c0_489 = arith.constant 0 : index
    %c0_490 = arith.constant 0 : index
    %800 = vector.load %arg4[%c0_487, %c5_488, %c0_489, %c0_490] : memref<1x8x8x128xbf16, #tpu.memory_space<vmem>>, vector<1x1x8x128xbf16>
    %801 = vector.shape_cast %800 : vector<1x1x8x128xbf16> to vector<8x128xbf16>
    %802 = vector.shape_cast %799 : vector<8x128xbf16> to vector<1x1x8x128xbf16>
    tpu.vector_store %arg4[%c0_487, %c5_488, %c0_489, %c0_490], %802 {strides = array<i32>} : memref<1x8x8x128xbf16, #tpu.memory_space<vmem>>, vector<1x1x8x128xbf16>,
    %803 = arith.truncf %774 : vector<8x128xf32> to vector<8x128xbf16>
    %c0_491 = arith.constant 0 : index
    %c6_492 = arith.constant 6 : index
    %c0_493 = arith.constant 0 : index
    %c0_494 = arith.constant 0 : index
    %804 = vector.load %arg4[%c0_491, %c6_492, %c0_493, %c0_494] : memref<1x8x8x128xbf16, #tpu.memory_space<vmem>>, vector<1x1x8x128xbf16>
    %805 = vector.shape_cast %804 : vector<1x1x8x128xbf16> to vector<8x128xbf16>
    %806 = vector.shape_cast %803 : vector<8x128xbf16> to vector<1x1x8x128xbf16>
    tpu.vector_store %arg4[%c0_491, %c6_492, %c0_493, %c0_494], %806 {strides = array<i32>} : memref<1x8x8x128xbf16, #tpu.memory_space<vmem>>, vector<1x1x8x128xbf16>,
    %807 = arith.truncf %778 : vector<8x128xf32> to vector<8x128xbf16>
    %c0_495 = arith.constant 0 : index
    %c7_496 = arith.constant 7 : index
    %c0_497 = arith.constant 0 : index
    %c0_498 = arith.constant 0 : index
    %808 = vector.load %arg4[%c0_495, %c7_496, %c0_497, %c0_498] : memref<1x8x8x128xbf16, #tpu.memory_space<vmem>>, vector<1x1x8x128xbf16>
    %809 = vector.shape_cast %808 : vector<1x1x8x128xbf16> to vector<8x128xbf16>
    %810 = vector.shape_cast %807 : vector<8x128xbf16> to vector<1x1x8x128xbf16>
    tpu.vector_store %arg4[%c0_495, %c7_496, %c0_497, %c0_498], %810 {strides = array<i32>} : memref<1x8x8x128xbf16, #tpu.memory_space<vmem>>, vector<1x1x8x128xbf16>,
    return
  }
  func.func @transform_0(%arg0: i32) -> (i32, i32, i32, i32, i32) {
    %c0_i32 = arith.constant 0 : i32
    %c0_i32_0 = arith.constant 0 : i32
    %c0_i32_1 = arith.constant 0 : i32
    %c0_i32_2 = arith.constant 0 : i32
    %c0_i32_3 = arith.constant 0 : i32
    return %arg0, %c0_i32, %c0_i32_0, %c0_i32_1, %c0_i32_2 : i32, i32, i32, i32, i32
  }
  func.func @transform_1(%arg0: i32) -> (i32, i32, i32) {
    %c0_i32 = arith.constant 0 : i32
    %c0_i32_0 = arith.constant 0 : i32
    %c0_i32_1 = arith.constant 0 : i32
    %c0_i32_2 = arith.constant 0 : i32
    return %c0_i32, %c0_i32_0, %c0_i32_1 : i32, i32, i32
  }
  func.func @transform_2(%arg0: i32) -> (i32, i32) {
    %c0_i32 = arith.constant 0 : i32
    %c0_i32_0 = arith.constant 0 : i32
    %c0_i32_1 = arith.constant 0 : i32
    return %c0_i32, %c0_i32_0 : i32, i32
  }
  func.func @transform_3(%arg0: i32) -> (i32, i32, i32, i32) {
    %c0_i32 = arith.constant 0 : i32
    %c0_i32_0 = arith.constant 0 : i32
    %c0_i32_1 = arith.constant 0 : i32
    %c0_i32_2 = arith.constant 0 : i32
    return %arg0, %c0_i32, %c0_i32_0, %c0_i32_1 : i32, i32, i32, i32
  }
}

module attributes {stable_mosaic.version = 11 : i64} {
  func.func @_conv_kernel(%arg0: i32, %arg1: memref<1x4x5x5x128xbf16, #tpu.memory_space<vmem>>, %arg2: memref<9x128x128xbf16, #tpu.memory_space<vmem>>, %arg3: memref<1x128xf32, #tpu.memory_space<vmem>>, %arg4: memref<1x1x128xf32, #tpu.memory_space<vmem>>) attributes {dimension_semantics = [#tpu.dimension_semantics<parallel>], iteration_bounds = array<i64: 4>, scalar_prefetch = 0 : i64, scratch_operands = 0 : i64, tpu.core_type = #tpu.core_type<tc>, window_params = [{transform_indices = @transform_0, window_bounds = array<i64: 1, 4, 5, 5, 128>}, {pipeline_mode = #tpu.pipeline_mode<synchronous>, transform_indices = @transform_1, window_bounds = array<i64: 9, 128, 128>}, {pipeline_mode = #tpu.pipeline_mode<synchronous>, transform_indices = @transform_2, window_bounds = array<i64: 1, 128>}, {transform_indices = @transform_3, window_bounds = array<i64: 1, 1, 128>}]} {
    %c0 = arith.constant 0 : index
    %c0_0 = arith.constant 0 : index
    %0 = vector.load %arg3[%c0, %c0_0] : memref<1x128xf32, #tpu.memory_space<vmem>>, vector<1x128xf32>
    %cst = arith.constant 0.000000e+00 : f32
    %1 = vector.broadcast %cst : f32 to vector<4x128xf32>
    %cst_1 = arith.constant 0.000000e+00 : f32
    %2 = vector.broadcast %cst_1 : f32 to vector<4x128xf32>
    %cst_2 = arith.constant 0.000000e+00 : f32
    %3 = vector.broadcast %cst_2 : f32 to vector<4x128xf32>
    %cst_3 = arith.constant 0.000000e+00 : f32
    %4 = vector.broadcast %cst_3 : f32 to vector<4x128xf32>
    %c0_4 = arith.constant 0 : index
    %c0_5 = arith.constant 0 : index
    %c0_6 = arith.constant 0 : index
    %5 = vector.load %arg2[%c0_4, %c0_5, %c0_6] : memref<9x128x128xbf16, #tpu.memory_space<vmem>>, vector<1x128x128xbf16>
    %6 = vector.shape_cast %5 : vector<1x128x128xbf16> to vector<128x128xbf16>
    %c0_7 = arith.constant 0 : index
    %c0_8 = arith.constant 0 : index
    %c0_9 = arith.constant 0 : index
    %c0_10 = arith.constant 0 : index
    %c0_11 = arith.constant 0 : index
    %7 = vector.load %arg1[%c0_7, %c0_8, %c0_9, %c0_10, %c0_11] : memref<1x4x5x5x128xbf16, #tpu.memory_space<vmem>>, vector<1x1x1x4x128xbf16>
    %8 = vector.shape_cast %7 : vector<1x1x1x4x128xbf16> to vector<4x128xbf16>
    %cst_12 = arith.constant dense<0.000000e+00> : vector<4x128xf32>
    %9 = tpu.matmul %8, %6, %cst_12 {dimension_numbers = #tpu.dot_dimension_numbers<[1], [0], [0], [1], [0, 0, 1, 1], [], []>} : vector<4x128xbf16>, vector<128x128xbf16>, vector<4x128xf32> -> vector<4x128xf32>
    %10 = arith.addf %1, %9 : vector<4x128xf32>
    %c0_13 = arith.constant 0 : index
    %c0_14 = arith.constant 0 : index
    %c1 = arith.constant 1 : index
    %c0_15 = arith.constant 0 : index
    %c0_16 = arith.constant 0 : index
    %11 = vector.load %arg1[%c0_13, %c0_14, %c1, %c0_15, %c0_16] : memref<1x4x5x5x128xbf16, #tpu.memory_space<vmem>>, vector<1x1x1x4x128xbf16>
    %12 = vector.shape_cast %11 : vector<1x1x1x4x128xbf16> to vector<4x128xbf16>
    %cst_17 = arith.constant dense<0.000000e+00> : vector<4x128xf32>
    %13 = tpu.matmul %12, %6, %cst_17 {dimension_numbers = #tpu.dot_dimension_numbers<[1], [0], [0], [1], [0, 0, 1, 1], [], []>} : vector<4x128xbf16>, vector<128x128xbf16>, vector<4x128xf32> -> vector<4x128xf32>
    %14 = arith.addf %2, %13 : vector<4x128xf32>
    %c0_18 = arith.constant 0 : index
    %c0_19 = arith.constant 0 : index
    %c2 = arith.constant 2 : index
    %c0_20 = arith.constant 0 : index
    %c0_21 = arith.constant 0 : index
    %15 = vector.load %arg1[%c0_18, %c0_19, %c2, %c0_20, %c0_21] : memref<1x4x5x5x128xbf16, #tpu.memory_space<vmem>>, vector<1x1x1x4x128xbf16>
    %16 = vector.shape_cast %15 : vector<1x1x1x4x128xbf16> to vector<4x128xbf16>
    %cst_22 = arith.constant dense<0.000000e+00> : vector<4x128xf32>
    %17 = tpu.matmul %16, %6, %cst_22 {dimension_numbers = #tpu.dot_dimension_numbers<[1], [0], [0], [1], [0, 0, 1, 1], [], []>} : vector<4x128xbf16>, vector<128x128xbf16>, vector<4x128xf32> -> vector<4x128xf32>
    %18 = arith.addf %3, %17 : vector<4x128xf32>
    %c0_23 = arith.constant 0 : index
    %c0_24 = arith.constant 0 : index
    %c3 = arith.constant 3 : index
    %c0_25 = arith.constant 0 : index
    %c0_26 = arith.constant 0 : index
    %19 = vector.load %arg1[%c0_23, %c0_24, %c3, %c0_25, %c0_26] : memref<1x4x5x5x128xbf16, #tpu.memory_space<vmem>>, vector<1x1x1x4x128xbf16>
    %20 = vector.shape_cast %19 : vector<1x1x1x4x128xbf16> to vector<4x128xbf16>
    %cst_27 = arith.constant dense<0.000000e+00> : vector<4x128xf32>
    %21 = tpu.matmul %20, %6, %cst_27 {dimension_numbers = #tpu.dot_dimension_numbers<[1], [0], [0], [1], [0, 0, 1, 1], [], []>} : vector<4x128xbf16>, vector<128x128xbf16>, vector<4x128xf32> -> vector<4x128xf32>
    %22 = arith.addf %4, %21 : vector<4x128xf32>
    %c1_28 = arith.constant 1 : index
    %c0_29 = arith.constant 0 : index
    %c0_30 = arith.constant 0 : index
    %23 = vector.load %arg2[%c1_28, %c0_29, %c0_30] : memref<9x128x128xbf16, #tpu.memory_space<vmem>>, vector<1x128x128xbf16>
    %24 = vector.shape_cast %23 : vector<1x128x128xbf16> to vector<128x128xbf16>
    %c0_31 = arith.constant 0 : index
    %c1_32 = arith.constant 1 : index
    %c0_33 = arith.constant 0 : index
    %c0_34 = arith.constant 0 : index
    %c0_35 = arith.constant 0 : index
    %25 = vector.load %arg1[%c0_31, %c1_32, %c0_33, %c0_34, %c0_35] : memref<1x4x5x5x128xbf16, #tpu.memory_space<vmem>>, vector<1x1x1x4x128xbf16>
    %26 = vector.shape_cast %25 : vector<1x1x1x4x128xbf16> to vector<4x128xbf16>
    %cst_36 = arith.constant dense<0.000000e+00> : vector<4x128xf32>
    %27 = tpu.matmul %26, %24, %cst_36 {dimension_numbers = #tpu.dot_dimension_numbers<[1], [0], [0], [1], [0, 0, 1, 1], [], []>} : vector<4x128xbf16>, vector<128x128xbf16>, vector<4x128xf32> -> vector<4x128xf32>
    %28 = arith.addf %10, %27 : vector<4x128xf32>
    %c0_37 = arith.constant 0 : index
    %c1_38 = arith.constant 1 : index
    %c1_39 = arith.constant 1 : index
    %c0_40 = arith.constant 0 : index
    %c0_41 = arith.constant 0 : index
    %29 = vector.load %arg1[%c0_37, %c1_38, %c1_39, %c0_40, %c0_41] : memref<1x4x5x5x128xbf16, #tpu.memory_space<vmem>>, vector<1x1x1x4x128xbf16>
    %30 = vector.shape_cast %29 : vector<1x1x1x4x128xbf16> to vector<4x128xbf16>
    %cst_42 = arith.constant dense<0.000000e+00> : vector<4x128xf32>
    %31 = tpu.matmul %30, %24, %cst_42 {dimension_numbers = #tpu.dot_dimension_numbers<[1], [0], [0], [1], [0, 0, 1, 1], [], []>} : vector<4x128xbf16>, vector<128x128xbf16>, vector<4x128xf32> -> vector<4x128xf32>
    %32 = arith.addf %14, %31 : vector<4x128xf32>
    %c0_43 = arith.constant 0 : index
    %c1_44 = arith.constant 1 : index
    %c2_45 = arith.constant 2 : index
    %c0_46 = arith.constant 0 : index
    %c0_47 = arith.constant 0 : index
    %33 = vector.load %arg1[%c0_43, %c1_44, %c2_45, %c0_46, %c0_47] : memref<1x4x5x5x128xbf16, #tpu.memory_space<vmem>>, vector<1x1x1x4x128xbf16>
    %34 = vector.shape_cast %33 : vector<1x1x1x4x128xbf16> to vector<4x128xbf16>
    %cst_48 = arith.constant dense<0.000000e+00> : vector<4x128xf32>
    %35 = tpu.matmul %34, %24, %cst_48 {dimension_numbers = #tpu.dot_dimension_numbers<[1], [0], [0], [1], [0, 0, 1, 1], [], []>} : vector<4x128xbf16>, vector<128x128xbf16>, vector<4x128xf32> -> vector<4x128xf32>
    %36 = arith.addf %18, %35 : vector<4x128xf32>
    %c0_49 = arith.constant 0 : index
    %c1_50 = arith.constant 1 : index
    %c3_51 = arith.constant 3 : index
    %c0_52 = arith.constant 0 : index
    %c0_53 = arith.constant 0 : index
    %37 = vector.load %arg1[%c0_49, %c1_50, %c3_51, %c0_52, %c0_53] : memref<1x4x5x5x128xbf16, #tpu.memory_space<vmem>>, vector<1x1x1x4x128xbf16>
    %38 = vector.shape_cast %37 : vector<1x1x1x4x128xbf16> to vector<4x128xbf16>
    %cst_54 = arith.constant dense<0.000000e+00> : vector<4x128xf32>
    %39 = tpu.matmul %38, %24, %cst_54 {dimension_numbers = #tpu.dot_dimension_numbers<[1], [0], [0], [1], [0, 0, 1, 1], [], []>} : vector<4x128xbf16>, vector<128x128xbf16>, vector<4x128xf32> -> vector<4x128xf32>
    %40 = arith.addf %22, %39 : vector<4x128xf32>
    %c2_55 = arith.constant 2 : index
    %c0_56 = arith.constant 0 : index
    %c0_57 = arith.constant 0 : index
    %41 = vector.load %arg2[%c2_55, %c0_56, %c0_57] : memref<9x128x128xbf16, #tpu.memory_space<vmem>>, vector<1x128x128xbf16>
    %42 = vector.shape_cast %41 : vector<1x128x128xbf16> to vector<128x128xbf16>
    %c0_58 = arith.constant 0 : index
    %c0_59 = arith.constant 0 : index
    %c0_60 = arith.constant 0 : index
    %c1_61 = arith.constant 1 : index
    %c0_62 = arith.constant 0 : index
    %43 = vector.load %arg1[%c0_58, %c0_59, %c0_60, %c1_61, %c0_62] : memref<1x4x5x5x128xbf16, #tpu.memory_space<vmem>>, vector<1x1x1x4x128xbf16>
    %44 = vector.shape_cast %43 : vector<1x1x1x4x128xbf16> to vector<4x128xbf16>
    %cst_63 = arith.constant dense<0.000000e+00> : vector<4x128xf32>
    %45 = tpu.matmul %44, %42, %cst_63 {dimension_numbers = #tpu.dot_dimension_numbers<[1], [0], [0], [1], [0, 0, 1, 1], [], []>} : vector<4x128xbf16>, vector<128x128xbf16>, vector<4x128xf32> -> vector<4x128xf32>
    %46 = arith.addf %28, %45 : vector<4x128xf32>
    %c0_64 = arith.constant 0 : index
    %c0_65 = arith.constant 0 : index
    %c1_66 = arith.constant 1 : index
    %c1_67 = arith.constant 1 : index
    %c0_68 = arith.constant 0 : index
    %47 = vector.load %arg1[%c0_64, %c0_65, %c1_66, %c1_67, %c0_68] : memref<1x4x5x5x128xbf16, #tpu.memory_space<vmem>>, vector<1x1x1x4x128xbf16>
    %48 = vector.shape_cast %47 : vector<1x1x1x4x128xbf16> to vector<4x128xbf16>
    %cst_69 = arith.constant dense<0.000000e+00> : vector<4x128xf32>
    %49 = tpu.matmul %48, %42, %cst_69 {dimension_numbers = #tpu.dot_dimension_numbers<[1], [0], [0], [1], [0, 0, 1, 1], [], []>} : vector<4x128xbf16>, vector<128x128xbf16>, vector<4x128xf32> -> vector<4x128xf32>
    %50 = arith.addf %32, %49 : vector<4x128xf32>
    %c0_70 = arith.constant 0 : index
    %c0_71 = arith.constant 0 : index
    %c2_72 = arith.constant 2 : index
    %c1_73 = arith.constant 1 : index
    %c0_74 = arith.constant 0 : index
    %51 = vector.load %arg1[%c0_70, %c0_71, %c2_72, %c1_73, %c0_74] : memref<1x4x5x5x128xbf16, #tpu.memory_space<vmem>>, vector<1x1x1x4x128xbf16>
    %52 = vector.shape_cast %51 : vector<1x1x1x4x128xbf16> to vector<4x128xbf16>
    %cst_75 = arith.constant dense<0.000000e+00> : vector<4x128xf32>
    %53 = tpu.matmul %52, %42, %cst_75 {dimension_numbers = #tpu.dot_dimension_numbers<[1], [0], [0], [1], [0, 0, 1, 1], [], []>} : vector<4x128xbf16>, vector<128x128xbf16>, vector<4x128xf32> -> vector<4x128xf32>
    %54 = arith.addf %36, %53 : vector<4x128xf32>
    %c0_76 = arith.constant 0 : index
    %c0_77 = arith.constant 0 : index
    %c3_78 = arith.constant 3 : index
    %c1_79 = arith.constant 1 : index
    %c0_80 = arith.constant 0 : index
    %55 = vector.load %arg1[%c0_76, %c0_77, %c3_78, %c1_79, %c0_80] : memref<1x4x5x5x128xbf16, #tpu.memory_space<vmem>>, vector<1x1x1x4x128xbf16>
    %56 = vector.shape_cast %55 : vector<1x1x1x4x128xbf16> to vector<4x128xbf16>
    %cst_81 = arith.constant dense<0.000000e+00> : vector<4x128xf32>
    %57 = tpu.matmul %56, %42, %cst_81 {dimension_numbers = #tpu.dot_dimension_numbers<[1], [0], [0], [1], [0, 0, 1, 1], [], []>} : vector<4x128xbf16>, vector<128x128xbf16>, vector<4x128xf32> -> vector<4x128xf32>
    %58 = arith.addf %40, %57 : vector<4x128xf32>
    %c3_82 = arith.constant 3 : index
    %c0_83 = arith.constant 0 : index
    %c0_84 = arith.constant 0 : index
    %59 = vector.load %arg2[%c3_82, %c0_83, %c0_84] : memref<9x128x128xbf16, #tpu.memory_space<vmem>>, vector<1x128x128xbf16>
    %60 = vector.shape_cast %59 : vector<1x128x128xbf16> to vector<128x128xbf16>
    %c0_85 = arith.constant 0 : index
    %c2_86 = arith.constant 2 : index
    %c0_87 = arith.constant 0 : index
    %c0_88 = arith.constant 0 : index
    %c0_89 = arith.constant 0 : index
    %61 = vector.load %arg1[%c0_85, %c2_86, %c0_87, %c0_88, %c0_89] : memref<1x4x5x5x128xbf16, #tpu.memory_space<vmem>>, vector<1x1x1x4x128xbf16>
    %62 = vector.shape_cast %61 : vector<1x1x1x4x128xbf16> to vector<4x128xbf16>
    %cst_90 = arith.constant dense<0.000000e+00> : vector<4x128xf32>
    %63 = tpu.matmul %62, %60, %cst_90 {dimension_numbers = #tpu.dot_dimension_numbers<[1], [0], [0], [1], [0, 0, 1, 1], [], []>} : vector<4x128xbf16>, vector<128x128xbf16>, vector<4x128xf32> -> vector<4x128xf32>
    %64 = arith.addf %46, %63 : vector<4x128xf32>
    %c0_91 = arith.constant 0 : index
    %c2_92 = arith.constant 2 : index
    %c1_93 = arith.constant 1 : index
    %c0_94 = arith.constant 0 : index
    %c0_95 = arith.constant 0 : index
    %65 = vector.load %arg1[%c0_91, %c2_92, %c1_93, %c0_94, %c0_95] : memref<1x4x5x5x128xbf16, #tpu.memory_space<vmem>>, vector<1x1x1x4x128xbf16>
    %66 = vector.shape_cast %65 : vector<1x1x1x4x128xbf16> to vector<4x128xbf16>
    %cst_96 = arith.constant dense<0.000000e+00> : vector<4x128xf32>
    %67 = tpu.matmul %66, %60, %cst_96 {dimension_numbers = #tpu.dot_dimension_numbers<[1], [0], [0], [1], [0, 0, 1, 1], [], []>} : vector<4x128xbf16>, vector<128x128xbf16>, vector<4x128xf32> -> vector<4x128xf32>
    %68 = arith.addf %50, %67 : vector<4x128xf32>
    %c0_97 = arith.constant 0 : index
    %c2_98 = arith.constant 2 : index
    %c2_99 = arith.constant 2 : index
    %c0_100 = arith.constant 0 : index
    %c0_101 = arith.constant 0 : index
    %69 = vector.load %arg1[%c0_97, %c2_98, %c2_99, %c0_100, %c0_101] : memref<1x4x5x5x128xbf16, #tpu.memory_space<vmem>>, vector<1x1x1x4x128xbf16>
    %70 = vector.shape_cast %69 : vector<1x1x1x4x128xbf16> to vector<4x128xbf16>
    %cst_102 = arith.constant dense<0.000000e+00> : vector<4x128xf32>
    %71 = tpu.matmul %70, %60, %cst_102 {dimension_numbers = #tpu.dot_dimension_numbers<[1], [0], [0], [1], [0, 0, 1, 1], [], []>} : vector<4x128xbf16>, vector<128x128xbf16>, vector<4x128xf32> -> vector<4x128xf32>
    %72 = arith.addf %54, %71 : vector<4x128xf32>
    %c0_103 = arith.constant 0 : index
    %c2_104 = arith.constant 2 : index
    %c3_105 = arith.constant 3 : index
    %c0_106 = arith.constant 0 : index
    %c0_107 = arith.constant 0 : index
    %73 = vector.load %arg1[%c0_103, %c2_104, %c3_105, %c0_106, %c0_107] : memref<1x4x5x5x128xbf16, #tpu.memory_space<vmem>>, vector<1x1x1x4x128xbf16>
    %74 = vector.shape_cast %73 : vector<1x1x1x4x128xbf16> to vector<4x128xbf16>
    %cst_108 = arith.constant dense<0.000000e+00> : vector<4x128xf32>
    %75 = tpu.matmul %74, %60, %cst_108 {dimension_numbers = #tpu.dot_dimension_numbers<[1], [0], [0], [1], [0, 0, 1, 1], [], []>} : vector<4x128xbf16>, vector<128x128xbf16>, vector<4x128xf32> -> vector<4x128xf32>
    %76 = arith.addf %58, %75 : vector<4x128xf32>
    %c4 = arith.constant 4 : index
    %c0_109 = arith.constant 0 : index
    %c0_110 = arith.constant 0 : index
    %77 = vector.load %arg2[%c4, %c0_109, %c0_110] : memref<9x128x128xbf16, #tpu.memory_space<vmem>>, vector<1x128x128xbf16>
    %78 = vector.shape_cast %77 : vector<1x128x128xbf16> to vector<128x128xbf16>
    %c0_111 = arith.constant 0 : index
    %c3_112 = arith.constant 3 : index
    %c0_113 = arith.constant 0 : index
    %c0_114 = arith.constant 0 : index
    %c0_115 = arith.constant 0 : index
    %79 = vector.load %arg1[%c0_111, %c3_112, %c0_113, %c0_114, %c0_115] : memref<1x4x5x5x128xbf16, #tpu.memory_space<vmem>>, vector<1x1x1x4x128xbf16>
    %80 = vector.shape_cast %79 : vector<1x1x1x4x128xbf16> to vector<4x128xbf16>
    %cst_116 = arith.constant dense<0.000000e+00> : vector<4x128xf32>
    %81 = tpu.matmul %80, %78, %cst_116 {dimension_numbers = #tpu.dot_dimension_numbers<[1], [0], [0], [1], [0, 0, 1, 1], [], []>} : vector<4x128xbf16>, vector<128x128xbf16>, vector<4x128xf32> -> vector<4x128xf32>
    %82 = arith.addf %64, %81 : vector<4x128xf32>
    %c0_117 = arith.constant 0 : index
    %c3_118 = arith.constant 3 : index
    %c1_119 = arith.constant 1 : index
    %c0_120 = arith.constant 0 : index
    %c0_121 = arith.constant 0 : index
    %83 = vector.load %arg1[%c0_117, %c3_118, %c1_119, %c0_120, %c0_121] : memref<1x4x5x5x128xbf16, #tpu.memory_space<vmem>>, vector<1x1x1x4x128xbf16>
    %84 = vector.shape_cast %83 : vector<1x1x1x4x128xbf16> to vector<4x128xbf16>
    %cst_122 = arith.constant dense<0.000000e+00> : vector<4x128xf32>
    %85 = tpu.matmul %84, %78, %cst_122 {dimension_numbers = #tpu.dot_dimension_numbers<[1], [0], [0], [1], [0, 0, 1, 1], [], []>} : vector<4x128xbf16>, vector<128x128xbf16>, vector<4x128xf32> -> vector<4x128xf32>
    %86 = arith.addf %68, %85 : vector<4x128xf32>
    %c0_123 = arith.constant 0 : index
    %c3_124 = arith.constant 3 : index
    %c2_125 = arith.constant 2 : index
    %c0_126 = arith.constant 0 : index
    %c0_127 = arith.constant 0 : index
    %87 = vector.load %arg1[%c0_123, %c3_124, %c2_125, %c0_126, %c0_127] : memref<1x4x5x5x128xbf16, #tpu.memory_space<vmem>>, vector<1x1x1x4x128xbf16>
    %88 = vector.shape_cast %87 : vector<1x1x1x4x128xbf16> to vector<4x128xbf16>
    %cst_128 = arith.constant dense<0.000000e+00> : vector<4x128xf32>
    %89 = tpu.matmul %88, %78, %cst_128 {dimension_numbers = #tpu.dot_dimension_numbers<[1], [0], [0], [1], [0, 0, 1, 1], [], []>} : vector<4x128xbf16>, vector<128x128xbf16>, vector<4x128xf32> -> vector<4x128xf32>
    %90 = arith.addf %72, %89 : vector<4x128xf32>
    %c0_129 = arith.constant 0 : index
    %c3_130 = arith.constant 3 : index
    %c3_131 = arith.constant 3 : index
    %c0_132 = arith.constant 0 : index
    %c0_133 = arith.constant 0 : index
    %91 = vector.load %arg1[%c0_129, %c3_130, %c3_131, %c0_132, %c0_133] : memref<1x4x5x5x128xbf16, #tpu.memory_space<vmem>>, vector<1x1x1x4x128xbf16>
    %92 = vector.shape_cast %91 : vector<1x1x1x4x128xbf16> to vector<4x128xbf16>
    %cst_134 = arith.constant dense<0.000000e+00> : vector<4x128xf32>
    %93 = tpu.matmul %92, %78, %cst_134 {dimension_numbers = #tpu.dot_dimension_numbers<[1], [0], [0], [1], [0, 0, 1, 1], [], []>} : vector<4x128xbf16>, vector<128x128xbf16>, vector<4x128xf32> -> vector<4x128xf32>
    %94 = arith.addf %76, %93 : vector<4x128xf32>
    %c5 = arith.constant 5 : index
    %c0_135 = arith.constant 0 : index
    %c0_136 = arith.constant 0 : index
    %95 = vector.load %arg2[%c5, %c0_135, %c0_136] : memref<9x128x128xbf16, #tpu.memory_space<vmem>>, vector<1x128x128xbf16>
    %96 = vector.shape_cast %95 : vector<1x128x128xbf16> to vector<128x128xbf16>
    %c0_137 = arith.constant 0 : index
    %c2_138 = arith.constant 2 : index
    %c0_139 = arith.constant 0 : index
    %c1_140 = arith.constant 1 : index
    %c0_141 = arith.constant 0 : index
    %97 = vector.load %arg1[%c0_137, %c2_138, %c0_139, %c1_140, %c0_141] : memref<1x4x5x5x128xbf16, #tpu.memory_space<vmem>>, vector<1x1x1x4x128xbf16>
    %98 = vector.shape_cast %97 : vector<1x1x1x4x128xbf16> to vector<4x128xbf16>
    %cst_142 = arith.constant dense<0.000000e+00> : vector<4x128xf32>
    %99 = tpu.matmul %98, %96, %cst_142 {dimension_numbers = #tpu.dot_dimension_numbers<[1], [0], [0], [1], [0, 0, 1, 1], [], []>} : vector<4x128xbf16>, vector<128x128xbf16>, vector<4x128xf32> -> vector<4x128xf32>
    %100 = arith.addf %82, %99 : vector<4x128xf32>
    %c0_143 = arith.constant 0 : index
    %c2_144 = arith.constant 2 : index
    %c1_145 = arith.constant 1 : index
    %c1_146 = arith.constant 1 : index
    %c0_147 = arith.constant 0 : index
    %101 = vector.load %arg1[%c0_143, %c2_144, %c1_145, %c1_146, %c0_147] : memref<1x4x5x5x128xbf16, #tpu.memory_space<vmem>>, vector<1x1x1x4x128xbf16>
    %102 = vector.shape_cast %101 : vector<1x1x1x4x128xbf16> to vector<4x128xbf16>
    %cst_148 = arith.constant dense<0.000000e+00> : vector<4x128xf32>
    %103 = tpu.matmul %102, %96, %cst_148 {dimension_numbers = #tpu.dot_dimension_numbers<[1], [0], [0], [1], [0, 0, 1, 1], [], []>} : vector<4x128xbf16>, vector<128x128xbf16>, vector<4x128xf32> -> vector<4x128xf32>
    %104 = arith.addf %86, %103 : vector<4x128xf32>
    %c0_149 = arith.constant 0 : index
    %c2_150 = arith.constant 2 : index
    %c2_151 = arith.constant 2 : index
    %c1_152 = arith.constant 1 : index
    %c0_153 = arith.constant 0 : index
    %105 = vector.load %arg1[%c0_149, %c2_150, %c2_151, %c1_152, %c0_153] : memref<1x4x5x5x128xbf16, #tpu.memory_space<vmem>>, vector<1x1x1x4x128xbf16>
    %106 = vector.shape_cast %105 : vector<1x1x1x4x128xbf16> to vector<4x128xbf16>
    %cst_154 = arith.constant dense<0.000000e+00> : vector<4x128xf32>
    %107 = tpu.matmul %106, %96, %cst_154 {dimension_numbers = #tpu.dot_dimension_numbers<[1], [0], [0], [1], [0, 0, 1, 1], [], []>} : vector<4x128xbf16>, vector<128x128xbf16>, vector<4x128xf32> -> vector<4x128xf32>
    %108 = arith.addf %90, %107 : vector<4x128xf32>
    %c0_155 = arith.constant 0 : index
    %c2_156 = arith.constant 2 : index
    %c3_157 = arith.constant 3 : index
    %c1_158 = arith.constant 1 : index
    %c0_159 = arith.constant 0 : index
    %109 = vector.load %arg1[%c0_155, %c2_156, %c3_157, %c1_158, %c0_159] : memref<1x4x5x5x128xbf16, #tpu.memory_space<vmem>>, vector<1x1x1x4x128xbf16>
    %110 = vector.shape_cast %109 : vector<1x1x1x4x128xbf16> to vector<4x128xbf16>
    %cst_160 = arith.constant dense<0.000000e+00> : vector<4x128xf32>
    %111 = tpu.matmul %110, %96, %cst_160 {dimension_numbers = #tpu.dot_dimension_numbers<[1], [0], [0], [1], [0, 0, 1, 1], [], []>} : vector<4x128xbf16>, vector<128x128xbf16>, vector<4x128xf32> -> vector<4x128xf32>
    %112 = arith.addf %94, %111 : vector<4x128xf32>
    %c6 = arith.constant 6 : index
    %c0_161 = arith.constant 0 : index
    %c0_162 = arith.constant 0 : index
    %113 = vector.load %arg2[%c6, %c0_161, %c0_162] : memref<9x128x128xbf16, #tpu.memory_space<vmem>>, vector<1x128x128xbf16>
    %114 = vector.shape_cast %113 : vector<1x128x128xbf16> to vector<128x128xbf16>
    %c0_163 = arith.constant 0 : index
    %c0_164 = arith.constant 0 : index
    %c1_165 = arith.constant 1 : index
    %c0_166 = arith.constant 0 : index
    %c0_167 = arith.constant 0 : index
    %115 = vector.load %arg1[%c0_163, %c0_164, %c1_165, %c0_166, %c0_167] : memref<1x4x5x5x128xbf16, #tpu.memory_space<vmem>>, vector<1x1x1x4x128xbf16>
    %116 = vector.shape_cast %115 : vector<1x1x1x4x128xbf16> to vector<4x128xbf16>
    %cst_168 = arith.constant dense<0.000000e+00> : vector<4x128xf32>
    %117 = tpu.matmul %116, %114, %cst_168 {dimension_numbers = #tpu.dot_dimension_numbers<[1], [0], [0], [1], [0, 0, 1, 1], [], []>} : vector<4x128xbf16>, vector<128x128xbf16>, vector<4x128xf32> -> vector<4x128xf32>
    %118 = arith.addf %100, %117 : vector<4x128xf32>
    %c0_169 = arith.constant 0 : index
    %c0_170 = arith.constant 0 : index
    %c2_171 = arith.constant 2 : index
    %c0_172 = arith.constant 0 : index
    %c0_173 = arith.constant 0 : index
    %119 = vector.load %arg1[%c0_169, %c0_170, %c2_171, %c0_172, %c0_173] : memref<1x4x5x5x128xbf16, #tpu.memory_space<vmem>>, vector<1x1x1x4x128xbf16>
    %120 = vector.shape_cast %119 : vector<1x1x1x4x128xbf16> to vector<4x128xbf16>
    %cst_174 = arith.constant dense<0.000000e+00> : vector<4x128xf32>
    %121 = tpu.matmul %120, %114, %cst_174 {dimension_numbers = #tpu.dot_dimension_numbers<[1], [0], [0], [1], [0, 0, 1, 1], [], []>} : vector<4x128xbf16>, vector<128x128xbf16>, vector<4x128xf32> -> vector<4x128xf32>
    %122 = arith.addf %104, %121 : vector<4x128xf32>
    %c0_175 = arith.constant 0 : index
    %c0_176 = arith.constant 0 : index
    %c3_177 = arith.constant 3 : index
    %c0_178 = arith.constant 0 : index
    %c0_179 = arith.constant 0 : index
    %123 = vector.load %arg1[%c0_175, %c0_176, %c3_177, %c0_178, %c0_179] : memref<1x4x5x5x128xbf16, #tpu.memory_space<vmem>>, vector<1x1x1x4x128xbf16>
    %124 = vector.shape_cast %123 : vector<1x1x1x4x128xbf16> to vector<4x128xbf16>
    %cst_180 = arith.constant dense<0.000000e+00> : vector<4x128xf32>
    %125 = tpu.matmul %124, %114, %cst_180 {dimension_numbers = #tpu.dot_dimension_numbers<[1], [0], [0], [1], [0, 0, 1, 1], [], []>} : vector<4x128xbf16>, vector<128x128xbf16>, vector<4x128xf32> -> vector<4x128xf32>
    %126 = arith.addf %108, %125 : vector<4x128xf32>
    %c0_181 = arith.constant 0 : index
    %c0_182 = arith.constant 0 : index
    %c4_183 = arith.constant 4 : index
    %c0_184 = arith.constant 0 : index
    %c0_185 = arith.constant 0 : index
    %127 = vector.load %arg1[%c0_181, %c0_182, %c4_183, %c0_184, %c0_185] : memref<1x4x5x5x128xbf16, #tpu.memory_space<vmem>>, vector<1x1x1x4x128xbf16>
    %128 = vector.shape_cast %127 : vector<1x1x1x4x128xbf16> to vector<4x128xbf16>
    %cst_186 = arith.constant dense<0.000000e+00> : vector<4x128xf32>
    %129 = tpu.matmul %128, %114, %cst_186 {dimension_numbers = #tpu.dot_dimension_numbers<[1], [0], [0], [1], [0, 0, 1, 1], [], []>} : vector<4x128xbf16>, vector<128x128xbf16>, vector<4x128xf32> -> vector<4x128xf32>
    %130 = arith.addf %112, %129 : vector<4x128xf32>
    %c7 = arith.constant 7 : index
    %c0_187 = arith.constant 0 : index
    %c0_188 = arith.constant 0 : index
    %131 = vector.load %arg2[%c7, %c0_187, %c0_188] : memref<9x128x128xbf16, #tpu.memory_space<vmem>>, vector<1x128x128xbf16>
    %132 = vector.shape_cast %131 : vector<1x128x128xbf16> to vector<128x128xbf16>
    %c0_189 = arith.constant 0 : index
    %c1_190 = arith.constant 1 : index
    %c1_191 = arith.constant 1 : index
    %c0_192 = arith.constant 0 : index
    %c0_193 = arith.constant 0 : index
    %133 = vector.load %arg1[%c0_189, %c1_190, %c1_191, %c0_192, %c0_193] : memref<1x4x5x5x128xbf16, #tpu.memory_space<vmem>>, vector<1x1x1x4x128xbf16>
    %134 = vector.shape_cast %133 : vector<1x1x1x4x128xbf16> to vector<4x128xbf16>
    %cst_194 = arith.constant dense<0.000000e+00> : vector<4x128xf32>
    %135 = tpu.matmul %134, %132, %cst_194 {dimension_numbers = #tpu.dot_dimension_numbers<[1], [0], [0], [1], [0, 0, 1, 1], [], []>} : vector<4x128xbf16>, vector<128x128xbf16>, vector<4x128xf32> -> vector<4x128xf32>
    %136 = arith.addf %118, %135 : vector<4x128xf32>
    %c0_195 = arith.constant 0 : index
    %c1_196 = arith.constant 1 : index
    %c2_197 = arith.constant 2 : index
    %c0_198 = arith.constant 0 : index
    %c0_199 = arith.constant 0 : index
    %137 = vector.load %arg1[%c0_195, %c1_196, %c2_197, %c0_198, %c0_199] : memref<1x4x5x5x128xbf16, #tpu.memory_space<vmem>>, vector<1x1x1x4x128xbf16>
    %138 = vector.shape_cast %137 : vector<1x1x1x4x128xbf16> to vector<4x128xbf16>
    %cst_200 = arith.constant dense<0.000000e+00> : vector<4x128xf32>
    %139 = tpu.matmul %138, %132, %cst_200 {dimension_numbers = #tpu.dot_dimension_numbers<[1], [0], [0], [1], [0, 0, 1, 1], [], []>} : vector<4x128xbf16>, vector<128x128xbf16>, vector<4x128xf32> -> vector<4x128xf32>
    %140 = arith.addf %122, %139 : vector<4x128xf32>
    %c0_201 = arith.constant 0 : index
    %c1_202 = arith.constant 1 : index
    %c3_203 = arith.constant 3 : index
    %c0_204 = arith.constant 0 : index
    %c0_205 = arith.constant 0 : index
    %141 = vector.load %arg1[%c0_201, %c1_202, %c3_203, %c0_204, %c0_205] : memref<1x4x5x5x128xbf16, #tpu.memory_space<vmem>>, vector<1x1x1x4x128xbf16>
    %142 = vector.shape_cast %141 : vector<1x1x1x4x128xbf16> to vector<4x128xbf16>
    %cst_206 = arith.constant dense<0.000000e+00> : vector<4x128xf32>
    %143 = tpu.matmul %142, %132, %cst_206 {dimension_numbers = #tpu.dot_dimension_numbers<[1], [0], [0], [1], [0, 0, 1, 1], [], []>} : vector<4x128xbf16>, vector<128x128xbf16>, vector<4x128xf32> -> vector<4x128xf32>
    %144 = arith.addf %126, %143 : vector<4x128xf32>
    %c0_207 = arith.constant 0 : index
    %c1_208 = arith.constant 1 : index
    %c4_209 = arith.constant 4 : index
    %c0_210 = arith.constant 0 : index
    %c0_211 = arith.constant 0 : index
    %145 = vector.load %arg1[%c0_207, %c1_208, %c4_209, %c0_210, %c0_211] : memref<1x4x5x5x128xbf16, #tpu.memory_space<vmem>>, vector<1x1x1x4x128xbf16>
    %146 = vector.shape_cast %145 : vector<1x1x1x4x128xbf16> to vector<4x128xbf16>
    %cst_212 = arith.constant dense<0.000000e+00> : vector<4x128xf32>
    %147 = tpu.matmul %146, %132, %cst_212 {dimension_numbers = #tpu.dot_dimension_numbers<[1], [0], [0], [1], [0, 0, 1, 1], [], []>} : vector<4x128xbf16>, vector<128x128xbf16>, vector<4x128xf32> -> vector<4x128xf32>
    %148 = arith.addf %130, %147 : vector<4x128xf32>
    %c8 = arith.constant 8 : index
    %c0_213 = arith.constant 0 : index
    %c0_214 = arith.constant 0 : index
    %149 = vector.load %arg2[%c8, %c0_213, %c0_214] : memref<9x128x128xbf16, #tpu.memory_space<vmem>>, vector<1x128x128xbf16>
    %150 = vector.shape_cast %149 : vector<1x128x128xbf16> to vector<128x128xbf16>
    %c0_215 = arith.constant 0 : index
    %c0_216 = arith.constant 0 : index
    %c1_217 = arith.constant 1 : index
    %c1_218 = arith.constant 1 : index
    %c0_219 = arith.constant 0 : index
    %151 = vector.load %arg1[%c0_215, %c0_216, %c1_217, %c1_218, %c0_219] : memref<1x4x5x5x128xbf16, #tpu.memory_space<vmem>>, vector<1x1x1x4x128xbf16>
    %152 = vector.shape_cast %151 : vector<1x1x1x4x128xbf16> to vector<4x128xbf16>
    %cst_220 = arith.constant dense<0.000000e+00> : vector<4x128xf32>
    %153 = tpu.matmul %152, %150, %cst_220 {dimension_numbers = #tpu.dot_dimension_numbers<[1], [0], [0], [1], [0, 0, 1, 1], [], []>} : vector<4x128xbf16>, vector<128x128xbf16>, vector<4x128xf32> -> vector<4x128xf32>
    %154 = arith.addf %136, %153 : vector<4x128xf32>
    %c0_221 = arith.constant 0 : index
    %c0_222 = arith.constant 0 : index
    %c2_223 = arith.constant 2 : index
    %c1_224 = arith.constant 1 : index
    %c0_225 = arith.constant 0 : index
    %155 = vector.load %arg1[%c0_221, %c0_222, %c2_223, %c1_224, %c0_225] : memref<1x4x5x5x128xbf16, #tpu.memory_space<vmem>>, vector<1x1x1x4x128xbf16>
    %156 = vector.shape_cast %155 : vector<1x1x1x4x128xbf16> to vector<4x128xbf16>
    %cst_226 = arith.constant dense<0.000000e+00> : vector<4x128xf32>
    %157 = tpu.matmul %156, %150, %cst_226 {dimension_numbers = #tpu.dot_dimension_numbers<[1], [0], [0], [1], [0, 0, 1, 1], [], []>} : vector<4x128xbf16>, vector<128x128xbf16>, vector<4x128xf32> -> vector<4x128xf32>
    %158 = arith.addf %140, %157 : vector<4x128xf32>
    %c0_227 = arith.constant 0 : index
    %c0_228 = arith.constant 0 : index
    %c3_229 = arith.constant 3 : index
    %c1_230 = arith.constant 1 : index
    %c0_231 = arith.constant 0 : index
    %159 = vector.load %arg1[%c0_227, %c0_228, %c3_229, %c1_230, %c0_231] : memref<1x4x5x5x128xbf16, #tpu.memory_space<vmem>>, vector<1x1x1x4x128xbf16>
    %160 = vector.shape_cast %159 : vector<1x1x1x4x128xbf16> to vector<4x128xbf16>
    %cst_232 = arith.constant dense<0.000000e+00> : vector<4x128xf32>
    %161 = tpu.matmul %160, %150, %cst_232 {dimension_numbers = #tpu.dot_dimension_numbers<[1], [0], [0], [1], [0, 0, 1, 1], [], []>} : vector<4x128xbf16>, vector<128x128xbf16>, vector<4x128xf32> -> vector<4x128xf32>
    %162 = arith.addf %144, %161 : vector<4x128xf32>
    %c0_233 = arith.constant 0 : index
    %c0_234 = arith.constant 0 : index
    %c4_235 = arith.constant 4 : index
    %c1_236 = arith.constant 1 : index
    %c0_237 = arith.constant 0 : index
    %163 = vector.load %arg1[%c0_233, %c0_234, %c4_235, %c1_236, %c0_237] : memref<1x4x5x5x128xbf16, #tpu.memory_space<vmem>>, vector<1x1x1x4x128xbf16>
    %164 = vector.shape_cast %163 : vector<1x1x1x4x128xbf16> to vector<4x128xbf16>
    %cst_238 = arith.constant dense<0.000000e+00> : vector<4x128xf32>
    %165 = tpu.matmul %164, %150, %cst_238 {dimension_numbers = #tpu.dot_dimension_numbers<[1], [0], [0], [1], [0, 0, 1, 1], [], []>} : vector<4x128xbf16>, vector<128x128xbf16>, vector<4x128xf32> -> vector<4x128xf32>
    %166 = arith.addf %148, %165 : vector<4x128xf32>
    %167 = vector.broadcast %0 : vector<1x128xf32> to vector<4x128xf32>
    %168 = arith.addf %154, %167 : vector<4x128xf32>
    %cst_239 = arith.constant 0.000000e+00 : f32
    %169 = vector.broadcast %cst_239 : f32 to vector<4x128xf32>
    %170 = arith.maximumf %168, %169 : vector<4x128xf32>
    %171 = vector.broadcast %0 : vector<1x128xf32> to vector<4x128xf32>
    %172 = arith.addf %158, %171 : vector<4x128xf32>
    %cst_240 = arith.constant 0.000000e+00 : f32
    %173 = vector.broadcast %cst_240 : f32 to vector<4x128xf32>
    %174 = arith.maximumf %172, %173 : vector<4x128xf32>
    %175 = vector.broadcast %0 : vector<1x128xf32> to vector<4x128xf32>
    %176 = arith.addf %162, %175 : vector<4x128xf32>
    %cst_241 = arith.constant 0.000000e+00 : f32
    %177 = vector.broadcast %cst_241 : f32 to vector<4x128xf32>
    %178 = arith.maximumf %176, %177 : vector<4x128xf32>
    %179 = vector.broadcast %0 : vector<1x128xf32> to vector<4x128xf32>
    %180 = arith.addf %166, %179 : vector<4x128xf32>
    %cst_242 = arith.constant 0.000000e+00 : f32
    %181 = vector.broadcast %cst_242 : f32 to vector<4x128xf32>
    %182 = arith.maximumf %180, %181 : vector<4x128xf32>
    %183 = arith.addf %170, %174 : vector<4x128xf32>
    %184 = arith.addf %183, %178 : vector<4x128xf32>
    %185 = arith.addf %184, %182 : vector<4x128xf32>
    %cst_243 = arith.constant dense<0.000000e+00> : vector<128xf32>
    %186 = vector.multi_reduction <add>, %185, %cst_243 [0] : vector<4x128xf32> to vector<128xf32>
    %187 = vector.shape_cast %186 : vector<128xf32> to vector<1x128xf32>
    %cst_244 = arith.constant 6.250000e-02 : f32
    %188 = vector.broadcast %cst_244 : f32 to vector<1x128xf32>
    %189 = arith.mulf %187, %188 : vector<1x128xf32>
    %c0_245 = arith.constant 0 : index
    %c0_246 = arith.constant 0 : index
    %c0_247 = arith.constant 0 : index
    %190 = vector.load %arg4[%c0_245, %c0_246, %c0_247] : memref<1x1x128xf32, #tpu.memory_space<vmem>>, vector<1x1x128xf32>
    %191 = vector.shape_cast %190 : vector<1x1x128xf32> to vector<1x128xf32>
    %192 = vector.shape_cast %189 : vector<1x128xf32> to vector<1x1x128xf32>
    tpu.vector_store %arg4[%c0_245, %c0_246, %c0_247], %192 {strides = array<i32>} : memref<1x1x128xf32, #tpu.memory_space<vmem>>, vector<1x1x128xf32>,
    return
  }
  func.func @transform_0(%arg0: i32) -> (i32, i32, i32, i32, i32) {
    %c0_i32 = arith.constant 0 : i32
    %c0_i32_0 = arith.constant 0 : i32
    %c0_i32_1 = arith.constant 0 : i32
    %c0_i32_2 = arith.constant 0 : i32
    %c0_i32_3 = arith.constant 0 : i32
    return %arg0, %c0_i32, %c0_i32_0, %c0_i32_1, %c0_i32_2 : i32, i32, i32, i32, i32
  }
  func.func @transform_1(%arg0: i32) -> (i32, i32, i32) {
    %c0_i32 = arith.constant 0 : i32
    %c0_i32_0 = arith.constant 0 : i32
    %c0_i32_1 = arith.constant 0 : i32
    %c0_i32_2 = arith.constant 0 : i32
    return %c0_i32, %c0_i32_0, %c0_i32_1 : i32, i32, i32
  }
  func.func @transform_2(%arg0: i32) -> (i32, i32) {
    %c0_i32 = arith.constant 0 : i32
    %c0_i32_0 = arith.constant 0 : i32
    %c0_i32_1 = arith.constant 0 : i32
    return %c0_i32, %c0_i32_0 : i32, i32
  }
  func.func @transform_3(%arg0: i32) -> (i32, i32, i32) {
    %c0_i32 = arith.constant 0 : i32
    %c0_i32_0 = arith.constant 0 : i32
    %c0_i32_1 = arith.constant 0 : i32
    return %arg0, %c0_i32, %c0_i32_0 : i32, i32, i32
  }
}

module attributes {stable_mosaic.version = 11 : i64} {
  func.func @_mlp_kernel(%arg0: i32, %arg1: memref<2x64xbf16, #tpu.memory_space<vmem>>, %arg2: memref<64x128xbf16, #tpu.memory_space<vmem>>, %arg3: memref<1x128xf32, #tpu.memory_space<vmem>>, %arg4: memref<128x128xbf16, #tpu.memory_space<vmem>>, %arg5: memref<1x128xf32, #tpu.memory_space<vmem>>, %arg6: memref<2x128xf32, #tpu.memory_space<vmem>>) attributes {dimension_semantics = [#tpu.dimension_semantics<arbitrary>], iteration_bounds = array<i64: 1>, scalar_prefetch = 0 : i64, scratch_operands = 0 : i64, tpu.core_type = #tpu.core_type<tc>, window_params = [{pipeline_mode = #tpu.pipeline_mode<synchronous>, transform_indices = @transform_0, window_bounds = array<i64: 2, 64>}, {pipeline_mode = #tpu.pipeline_mode<synchronous>, transform_indices = @transform_1, window_bounds = array<i64: 64, 128>}, {pipeline_mode = #tpu.pipeline_mode<synchronous>, transform_indices = @transform_2, window_bounds = array<i64: 1, 128>}, {pipeline_mode = #tpu.pipeline_mode<synchronous>, transform_indices = @transform_3, window_bounds = array<i64: 128, 128>}, {pipeline_mode = #tpu.pipeline_mode<synchronous>, transform_indices = @transform_4, window_bounds = array<i64: 1, 128>}, {pipeline_mode = #tpu.pipeline_mode<synchronous>, transform_indices = @transform_5, window_bounds = array<i64: 2, 128>}]} {
    %c0 = arith.constant 0 : index
    %c0_0 = arith.constant 0 : index
    %0 = vector.load %arg1[%c0, %c0_0] : memref<2x64xbf16, #tpu.memory_space<vmem>>, vector<2x64xbf16>
    %c0_1 = arith.constant 0 : index
    %c0_2 = arith.constant 0 : index
    %1 = vector.load %arg2[%c0_1, %c0_2] : memref<64x128xbf16, #tpu.memory_space<vmem>>, vector<64x128xbf16>
    %cst = arith.constant dense<0.000000e+00> : vector<2x128xf32>
    %2 = tpu.matmul %0, %1, %cst {dimension_numbers = #tpu.dot_dimension_numbers<[1], [0], [0], [1], [0, 0, 1, 1], [], []>} : vector<2x64xbf16>, vector<64x128xbf16>, vector<2x128xf32> -> vector<2x128xf32>
    %c0_3 = arith.constant 0 : index
    %c0_4 = arith.constant 0 : index
    %3 = vector.load %arg3[%c0_3, %c0_4] : memref<1x128xf32, #tpu.memory_space<vmem>>, vector<1x128xf32>
    %4 = vector.broadcast %3 : vector<1x128xf32> to vector<2x128xf32>
    %5 = arith.addf %2, %4 : vector<2x128xf32>
    %cst_5 = arith.constant 0.000000e+00 : f32
    %6 = vector.broadcast %cst_5 : f32 to vector<2x128xf32>
    %7 = arith.maximumf %5, %6 : vector<2x128xf32>
    %8 = arith.truncf %7 : vector<2x128xf32> to vector<2x128xbf16>
    %c0_6 = arith.constant 0 : index
    %c0_7 = arith.constant 0 : index
    %9 = vector.load %arg4[%c0_6, %c0_7] : memref<128x128xbf16, #tpu.memory_space<vmem>>, vector<128x128xbf16>
    %cst_8 = arith.constant dense<0.000000e+00> : vector<2x128xf32>
    %10 = tpu.matmul %8, %9, %cst_8 {dimension_numbers = #tpu.dot_dimension_numbers<[1], [0], [0], [1], [0, 0, 1, 1], [], []>} : vector<2x128xbf16>, vector<128x128xbf16>, vector<2x128xf32> -> vector<2x128xf32>
    %c0_9 = arith.constant 0 : index
    %c0_10 = arith.constant 0 : index
    %11 = vector.load %arg5[%c0_9, %c0_10] : memref<1x128xf32, #tpu.memory_space<vmem>>, vector<1x128xf32>
    %12 = vector.broadcast %11 : vector<1x128xf32> to vector<2x128xf32>
    %13 = arith.addf %10, %12 : vector<2x128xf32>
    %c0_11 = arith.constant 0 : index
    %c0_12 = arith.constant 0 : index
    %14 = vector.load %arg6[%c0_11, %c0_12] : memref<2x128xf32, #tpu.memory_space<vmem>>, vector<2x128xf32>
    tpu.vector_store %arg6[%c0_11, %c0_12], %13 {strides = array<i32>} : memref<2x128xf32, #tpu.memory_space<vmem>>, vector<2x128xf32>,
    return
  }
  func.func @transform_0(%arg0: i32) -> (i32, i32) {
    %c0_i32 = arith.constant 0 : i32
    %c0_i32_0 = arith.constant 0 : i32
    %c0_i32_1 = arith.constant 0 : i32
    return %c0_i32, %c0_i32_0 : i32, i32
  }
  func.func @transform_1(%arg0: i32) -> (i32, i32) {
    %c0_i32 = arith.constant 0 : i32
    %c0_i32_0 = arith.constant 0 : i32
    %c0_i32_1 = arith.constant 0 : i32
    return %c0_i32, %c0_i32_0 : i32, i32
  }
  func.func @transform_2(%arg0: i32) -> (i32, i32) {
    %c0_i32 = arith.constant 0 : i32
    %c0_i32_0 = arith.constant 0 : i32
    %c0_i32_1 = arith.constant 0 : i32
    return %c0_i32, %c0_i32_0 : i32, i32
  }
  func.func @transform_3(%arg0: i32) -> (i32, i32) {
    %c0_i32 = arith.constant 0 : i32
    %c0_i32_0 = arith.constant 0 : i32
    %c0_i32_1 = arith.constant 0 : i32
    return %c0_i32, %c0_i32_0 : i32, i32
  }
  func.func @transform_4(%arg0: i32) -> (i32, i32) {
    %c0_i32 = arith.constant 0 : i32
    %c0_i32_0 = arith.constant 0 : i32
    %c0_i32_1 = arith.constant 0 : i32
    return %c0_i32, %c0_i32_0 : i32, i32
  }
  func.func @transform_5(%arg0: i32) -> (i32, i32) {
    %c0_i32 = arith.constant 0 : i32
    %c0_i32_0 = arith.constant 0 : i32
    %c0_i32_1 = arith.constant 0 : i32
    return %c0_i32, %c0_i32_0 : i32, i32
  }
}

</mosaic_0001>

<llo_original>
// kernel: model2_apply.5
$region0: #{model2_apply.5}
  #allocation0 [shape = 'u32[]', space=smem, size = 0x4, offset = 0x4, fixed_abs, tag = 'smem constant byte address 0x4 - core index']
  #allocation1 [shape = 'u32[144,128]{1,0:T(1,128)}', space=vmem, size = 0x12000, scoped, tag = 'internal scratch']
  %s0 = inlined_call_operand.vmem [shape: bf16[4,4,9,9,1], index: 0, kind: input, shape index: {}]
  %s1 = inlined_call_operand.vmem [shape: bf16[9,1,128], index: 1, kind: input, shape index: {}]
  %s2 = inlined_call_operand.vmem [shape: f32[1,128], index: 2, kind: input, shape index: {}]
  %s3 = inlined_call_operand.vmem [shape: bf16[4,8,8,128], index: 3, kind: output, shape index: {}]
  %s4 = sld [smem:[#allocation0]]
  $region45: #{model2_apply.5} parent=0
    _
  %s6 = ssub.s32 1, %s4
  %s7 = scalar_select 0, %s6, %s4
  loop: start=0, step=1, limit=6
  $region2: #{model2_apply.5} parent=0 // loop_pre_header
    _
  $region3: #{model2_apply.5} parent=0 // loop_header
    %s9 = sphi 0, %s13
    %p10 = scmp.ge.s32.totalorder %s9, 6
    %s19 = sphi 0, %s21
    %s22 = sphi 0, %s19
    %s23 = sphi 0, %s22
    %s39 = sphi 0, %s23
    %s43 = sphi 0, %s43
    %s45 = sphi 0, %s43
    %s46 = sphi 0, %s45
    %s60 = sphi 0, %s46
    %s64 = sphi 0, %s64
    %s66 = sphi 0, %s64
    %s67 = sphi 0, %s66
    %s81 = sphi 0, %s67
    %s87 = sphi 0, %s89
    %s90 = sphi 0, %s87
    %s91 = sphi 0, %s90
    %s107 = sphi 0, %s91
  $region4: #{model2_apply.5} parent=0 // loop_header_branch
    %12 = sbr.rel (%p10) target = $region8
  $region5: #{model2_apply.5} parent=0 // loop_body
    %s14 = ssub.s32 %s9, 1
    %s15 = ssub.s32 %s9, 2
    %s16 = sadd.s32 %s9, 1
    %s17 = ssub.s32 %s9, %s16
    %p18 = scmp.eq.s32.totalorder %s17, 0
    %s20 = sadd.s32 %s19, 1
    %s21 = scalar_select %p18, %s19, %s20
    %p24 = pneg %p18
    %p25 = scmp.eq.s32.totalorder %s9, 3
    %p26 = por %p24, %p25
    %p27 = scmp.ne.s32.totalorder %s19, %s22
    %p28 = scmp.eq.s32.totalorder %s9, 0
    %p29 = por %p27, %p28
    %p30 = scmp.ne.s32.totalorder %s19, %s22
    %p31 = scmp.eq.s32.totalorder %s14, 3
    %p32 = por %p30, %p31
    %p33 = scmp.ne.s32.totalorder %s22, %s23
    %p34 = scmp.eq.s32.totalorder %s14, 0
    %p35 = por %p33, %p34
    %p36 = scmp.ne.s32.totalorder %s22, %s23
    %p37 = scmp.eq.s32.totalorder %s15, 3
    %p38 = por %p36, %p37
    %p40 = scmp.ne.s32.totalorder %s23, %s39
    %p41 = scmp.eq.s32.totalorder %s15, 0
    %p42 = por %p40, %p41
    %s44 = sadd.s32 %s43, 1
    %p47 = scmp.eq.s32.totalorder %s9, 3
    %p48 = scmp.ne.s32.totalorder %s43, %s45
    %p49 = scmp.eq.s32.totalorder %s9, 0
    %p50 = por %p48, %p49
    %p51 = scmp.ne.s32.totalorder %s43, %s45
    %p52 = scmp.eq.s32.totalorder %s14, 3
    %p53 = por %p51, %p52
    %p54 = scmp.ne.s32.totalorder %s45, %s46
    %p55 = scmp.eq.s32.totalorder %s14, 0
    %p56 = por %p54, %p55
    %p57 = scmp.ne.s32.totalorder %s45, %s46
    %p58 = scmp.eq.s32.totalorder %s15, 3
    %p59 = por %p57, %p58
    %p61 = scmp.ne.s32.totalorder %s46, %s60
    %p62 = scmp.eq.s32.totalorder %s15, 0
    %p63 = por %p61, %p62
    %s65 = sadd.s32 %s64, 1
    %p68 = scmp.eq.s32.totalorder %s9, 3
    %p69 = scmp.ne.s32.totalorder %s64, %s66
    %p70 = scmp.eq.s32.totalorder %s9, 0
    %p71 = por %p69, %p70
    %p72 = scmp.ne.s32.totalorder %s64, %s66
    %p73 = scmp.eq.s32.totalorder %s14, 3
    %p74 = por %p72, %p73
    %p75 = scmp.ne.s32.totalorder %s66, %s67
    %p76 = scmp.eq.s32.totalorder %s14, 0
    %p77 = por %p75, %p76
    %p78 = scmp.ne.s32.totalorder %s66, %s67
    %p79 = scmp.eq.s32.totalorder %s15, 3
    %p80 = por %p78, %p79
    %p82 = scmp.ne.s32.totalorder %s67, %s81
    %p83 = scmp.eq.s32.totalorder %s15, 0
    %p84 = por %p82, %p83
    %s85 = ssub.s32 %s9, %s16
    %p86 = scmp.eq.s32.totalorder %s85, 0
    %s88 = sadd.s32 %s87, 1
    %s89 = scalar_select %p86, %s87, %s88
    %p92 = pneg %p86
    %p93 = scmp.eq.s32.totalorder %s9, 3
    %p94 = por %p92, %p93
    %p95 = scmp.ne.s32.totalorder %s87, %s90
    %p96 = scmp.eq.s32.totalorder %s9, 0
    %p97 = por %p95, %p96
    %p98 = scmp.ne.s32.totalorder %s87, %s90
    %p99 = scmp.eq.s32.totalorder %s14, 3
    %p100 = por %p98, %p99
    %p101 = scmp.ne.s32.totalorder %s90, %s91
    %p102 = scmp.eq.s32.totalorder %s14, 0
    %p103 = por %p101, %p102
    %p104 = scmp.ne.s32.totalorder %s90, %s91
    %p105 = scmp.eq.s32.totalorder %s15, 3
    %p106 = por %p104, %p105
    %p108 = scmp.ne.s32.totalorder %s91, %s107
    %p109 = scmp.eq.s32.totalorder %s15, 0
    %p110 = por %p108, %p109
    %p111 = scmp.le.s32.totalorder 1, %s9
    %p112 = scmp.lt.s32.totalorder %s9, 5
    %p113 = pnand %p111, %p112
    %p114 = pneg %p113
    // Predicated region
    $region9: #{model2_apply.5} parent=5 // pred_check
      _
    $region10: #{model2_apply.5} parent=5 // pred_check_branch
      %116 = sbr.rel (%p113) target = $region12
    $region11: #{model2_apply.5} parent=5 // pred_region
      %s117 = ssub.s32 %s9, 1
      // Predicated region
      $region13: #{model2_apply.5} parent=11 // pred_check
        %p118 = pneg %p56
      $region14: #{model2_apply.5} parent=11 // pred_check_branch
        %120 = sbr.rel (%p118) target = $region16
      $region15: #{model2_apply.5} parent=11 // pred_region
        _
      $region16: #{model2_apply.5} parent=11 // pred_fallthru
        _
      // Predicated region
      $region17: #{model2_apply.5} parent=11 // pred_check
        %p121 = pneg %p77
      $region18: #{model2_apply.5} parent=11 // pred_check_branch
        %123 = sbr.rel (%p121) target = $region20
      $region19: #{model2_apply.5} parent=11 // pred_region
        _
      $region20: #{model2_apply.5} parent=11 // pred_fallthru
        _
    $region12: #{model2_apply.5} parent=5 // pred_fallthru
      _
    %p124 = scmp.lt.s32.totalorder %s9, 4
    // Predicated region
    $region21: #{model2_apply.5} parent=5 // pred_check
      %p125 = pneg %p124
    $region22: #{model2_apply.5} parent=5 // pred_check_branch
      %127 = sbr.rel (%p125) target = $region24
    $region23: #{model2_apply.5} parent=5 // pred_region
      // Predicated region
      $region25: #{model2_apply.5} parent=23 // pred_check
        %p128 = pneg %p29
      $region26: #{model2_apply.5} parent=23 // pred_check_branch
        %130 = sbr.rel (%p128) target = $region28
      $region27: #{model2_apply.5} parent=23 // pred_region
        %p131 = scmp.lt.s32.totalorder %s9, 3
        %s132 = scalar_select %p131, %s9, 3
        %s133 = smul.addr %s132, 72
        %s134 = smul.addr %s133, 4
        %s135 = scalar_lea.vmem %s0, %s134
      $region28: #{model2_apply.5} parent=23 // pred_fallthru
        _
    $region24: #{model2_apply.5} parent=5 // pred_fallthru
      _
    %p136 = scmp.le.s32.totalorder 1, %s9
    %p137 = scmp.lt.s32.totalorder %s9, 5
    %p138 = pnand %p136, %p137
    %p139 = pneg %p138
    // Predicated region
    $region29: #{model2_apply.5} parent=5 // pred_check
      _
    $region30: #{model2_apply.5} parent=5 // pred_check_branch
      %141 = sbr.rel (%p138) target = $region32
    $region31: #{model2_apply.5} parent=5 // pred_region
      %s142 = ssub.s32 %s9, 1
      %p143 = scmp.lt.s32.totalorder %s14, 3
      %s144 = scalar_select %p143, %s14, 3
      %s145 = smul.addr %s144, 72
      %s146 = smul.addr %s145, 4
      %s147 = scalar_lea.vmem %s0, %s146
      %p148 = pneg %p35
      %p149 = pneg %p32
      %p150 = pneg %p56
      %p151 = pneg %p53
      %p152 = pneg %p77
      %p153 = pneg %p74
      %p154 = pneg %p103
      %p155 = pneg %p100
      %p156 = scmp.lt.s32.totalorder %s14, 3
      %s157 = scalar_select %p156, %s14, 3
      %s158 = smul.addr %s157, 8
      %s159 = smul.addr %s158, 4
      %s160 = scalar_lea.vmem %s3, %s159
      %p161 = scmp.lt.s32.totalorder %s14, 3
      %s162 = scalar_select %p161, %s14, 3
      %s163 = smul.addr %s162, 72
      %s164 = smul.addr %s163, 4
      %s165 = scalar_lea.vmem %s0, %s164
      %p166 = scmp.lt.s32.totalorder %s14, 3
      %s167 = scalar_select %p166, %s14, 3
      %s168 = smul.addr %s167, 8
      %s169 = smul.addr %s168, 4
      %s170 = scalar_lea.vmem %s3, %s169
      %v171 = vld [vmem:[%s2] sm:$0x1]
      %v172 = vld [vmem:[%s1] sm:$0x1]
      %v173 = vld [vmem:[%s165] sm:$0xf]
      %v174 = vunpack.c.l.bf16 %v173
      %v175 = vunpack.c.l.bf16 %v172
      %177 = vset.pattern.permute.xlu0 0
      %178 = vperm.xlu0 %177, %v174
      %v179 = vpop.permute.xlu0 %178
      %v181 = vlaneseq
      %v182 = vshrl.u32 %v181, 7
      %v183 = vsub.s32 0, %v182
      %v184 = vrot.slane %v175, %v183
      %v185 = vmul.f32 %v179, %v184
      %v186 = vadd.f32 %v185, 0.0
      %v187 = vadd.f32 %v186, 0.0
      %s188 = scalar_lea.vmem %s165, 8
      %v189 = vld [vmem:[%s188] sm:$0xf]
      %v190 = vunpack.c.l.bf16 %v189
      %192 = vset.pattern.permute.xlu0 0
      %193 = vperm.xlu0 %192, %v190
      %v194 = vpop.permute.xlu0 %193
      %v196 = vmul.f32 %v194, %v184
      %v197 = vadd.f32 %v196, 0.0
      %v198 = vadd.f32 %v197, 0.0
      %s199 = scalar_lea.vmem %s165, 16
      %v200 = vld [vmem:[%s199] sm:$0xf]
      %v201 = vunpack.c.l.bf16 %v200
      %203 = vset.pattern.permute.xlu0 0
      %204 = vperm.xlu0 %203, %v201
      %v205 = vpop.permute.xlu0 %204
      %v207 = vmul.f32 %v205, %v184
      %v208 = vadd.f32 %v207, 0.0
      %v209 = vadd.f32 %v208, 0.0
      %s210 = scalar_lea.vmem %s165, 24
      %v211 = vld [vmem:[%s210] sm:$0xf]
      %v212 = vunpack.c.l.bf16 %v211
      %214 = vset.pattern.permute.xlu0 0
      %215 = vperm.xlu0 %214, %v212
      %v216 = vpop.permute.xlu0 %215
      %v218 = vmul.f32 %v216, %v184
      %v219 = vadd.f32 %v218, 0.0
      %v220 = vadd.f32 %v219, 0.0
      %s221 = scalar_lea.vmem %s165, 32
      %v222 = vld [vmem:[%s221] sm:$0xf]
      %v223 = vunpack.c.l.bf16 %v222
      %225 = vset.pattern.permute.xlu0 0
      %226 = vperm.xlu0 %225, %v223
      %v227 = vpop.permute.xlu0 %226
      %v229 = vmul.f32 %v227, %v184
      %v230 = vadd.f32 %v229, 0.0
      %v231 = vadd.f32 %v230, 0.0
      %s232 = scalar_lea.vmem %s165, 40
      %v233 = vld [vmem:[%s232] sm:$0xf]
      %v234 = vunpack.c.l.bf16 %v233
      %236 = vset.pattern.permute.xlu0 0
      %237 = vperm.xlu0 %236, %v234
      %v238 = vpop.permute.xlu0 %237
      %v240 = vmul.f32 %v238, %v184
      %v241 = vadd.f32 %v240, 0.0
      %v242 = vadd.f32 %v241, 0.0
      %s243 = scalar_lea.vmem %s165, 48
      %v244 = vld [vmem:[%s243] sm:$0xf]
      %v245 = vunpack.c.l.bf16 %v244
      %247 = vset.pattern.permute.xlu0 0
      %248 = vperm.xlu0 %247, %v245
      %v249 = vpop.permute.xlu0 %248
      %v251 = vmul.f32 %v249, %v184
      %v252 = vadd.f32 %v251, 0.0
      %v253 = vadd.f32 %v252, 0.0
      %s254 = scalar_lea.vmem %s165, 56
      %v255 = vld [vmem:[%s254] sm:$0xf]
      %v256 = vunpack.c.l.bf16 %v255
      %258 = vset.pattern.permute.xlu0 0
      %259 = vperm.xlu0 %258, %v256
      %v260 = vpop.permute.xlu0 %259
      %v262 = vmul.f32 %v260, %v184
      %v263 = vadd.f32 %v262, 0.0
      %v264 = vadd.f32 %v263, 0.0
      %s265 = scalar_lea.vmem %s1, 1
      %v266 = vld [vmem:[%s265] sm:$0x1]
      %s267 = scalar_lea.vmem %s165, 72
      %v268 = vld [vmem:[%s267] sm:$0xf]
      %v269 = vunpack.c.l.bf16 %v268
      %v270 = vunpack.c.l.bf16 %v266
      %272 = vset.pattern.permute.xlu0 0
      %273 = vperm.xlu0 %272, %v269
      %v274 = vpop.permute.xlu0 %273
      %v276 = vlaneseq
      %v277 = vshrl.u32 %v276, 7
      %v278 = vsub.s32 0, %v277
      %v279 = vrot.slane %v270, %v278
      %v280 = vmul.f32 %v274, %v279
      %v281 = vadd.f32 %v280, 0.0
      %v282 = vadd.f32 %v187, %v281
      %s283 = scalar_lea.vmem %s165, 80
      %v284 = vld [vmem:[%s283] sm:$0xf]
      %v285 = vunpack.c.l.bf16 %v284
      %287 = vset.pattern.permute.xlu0 0
      %288 = vperm.xlu0 %287, %v285
      %v289 = vpop.permute.xlu0 %288
      %v291 = vmul.f32 %v289, %v279
      %v292 = vadd.f32 %v291, 0.0
      %v293 = vadd.f32 %v198, %v292
      %s294 = scalar_lea.vmem %s165, 88
      %v295 = vld [vmem:[%s294] sm:$0xf]
      %v296 = vunpack.c.l.bf16 %v295
      %298 = vset.pattern.permute.xlu0 0
      %299 = vperm.xlu0 %298, %v296
      %v300 = vpop.permute.xlu0 %299
      %v302 = vmul.f32 %v300, %v279
      %v303 = vadd.f32 %v302, 0.0
      %v304 = vadd.f32 %v209, %v303
      %s305 = scalar_lea.vmem %s165, 96
      %v306 = vld [vmem:[%s305] sm:$0xf]
      %v307 = vunpack.c.l.bf16 %v306
      %309 = vset.pattern.permute.xlu0 0
      %310 = vperm.xlu0 %309, %v307
      %v311 = vpop.permute.xlu0 %310
      %v313 = vmul.f32 %v311, %v279
      %v314 = vadd.f32 %v313, 0.0
      %v315 = vadd.f32 %v220, %v314
      %s316 = scalar_lea.vmem %s165, 104
      %v317 = vld [vmem:[%s316] sm:$0xf]
      %v318 = vunpack.c.l.bf16 %v317
      %320 = vset.pattern.permute.xlu0 0
      %321 = vperm.xlu0 %320, %v318
      %v322 = vpop.permute.xlu0 %321
      %v324 = vmul.f32 %v322, %v279
      %v325 = vadd.f32 %v324, 0.0
      %v326 = vadd.f32 %v231, %v325
      %s327 = scalar_lea.vmem %s165, 112
      %v328 = vld [vmem:[%s327] sm:$0xf]
      %v329 = vunpack.c.l.bf16 %v328
      %331 = vset.pattern.permute.xlu0 0
      %332 = vperm.xlu0 %331, %v329
      %v333 = vpop.permute.xlu0 %332
      %v335 = vmul.f32 %v333, %v279
      %v336 = vadd.f32 %v335, 0.0
      %v337 = vadd.f32 %v242, %v336
      %s338 = scalar_lea.vmem %s165, 120
      %v339 = vld [vmem:[%s338] sm:$0xf]
      %v340 = vunpack.c.l.bf16 %v339
      %342 = vset.pattern.permute.xlu0 0
      %343 = vperm.xlu0 %342, %v340
      %v344 = vpop.permute.xlu0 %343
      %v346 = vmul.f32 %v344, %v279
      %v347 = vadd.f32 %v346, 0.0
      %v348 = vadd.f32 %v253, %v347
      %s349 = scalar_lea.vmem %s165, 128
      %v350 = vld [vmem:[%s349] sm:$0xf]
      %v351 = vunpack.c.l.bf16 %v350
      %353 = vset.pattern.permute.xlu0 0
      %354 = vperm.xlu0 %353, %v351
      %v355 = vpop.permute.xlu0 %354
      %v357 = vmul.f32 %v355, %v279
      %v358 = vadd.f32 %v357, 0.0
      %v359 = vadd.f32 %v264, %v358
      %s360 = scalar_lea.vmem %s1, 2
      %v361 = vld [vmem:[%s360] sm:$0x1]
      %v362 = vld [vmem:[%s165] sm:$0xf]
      %v363 = vld [vmem:[%s165 + $0x4] sm:$0x1]
      %v364 = vunpack.c.l.bf16 %v362
      %v365 = vunpack.c.l.bf16 %v363
      %v366 = vunpack.c.l.bf16 %v361
      %368 = vset.pattern.permute.xlu0 0
      %369 = vperm.xlu0 %368, %v364
      %v370 = vpop.permute.xlu0 %369
      %373 = vset.pattern.permute.xlu0 0
      %374 = vperm.xlu0 %373, %v365
      %v375 = vpop.permute.xlu0 %374
      %v377 = vlaneseq
      %v378 = vshrl.u32 %v377, 7
      %v379 = vsub.s32 0, %v378
      %v380 = vrot.slane %v366, %v379
      %v381 = vmul.f32 %v370, %v380
      %v382 = vmul.f32 %v375, %v380
      %v383 = vadd.f32 %v381, 0.0
      %v384 = vadd.f32 %v382, 0.0
      %vm387 = vcmask 1046528
      %v388 = vrot.slane %v383, 1
      %v389 = vrot.slane %v384, 1
      %v390 = vsel %vm387, %v388, %v389
      %v392 = vadd.f32 %v282, %v390
      %v393 = vld [vmem:[%s188] sm:$0xf]
      %v394 = vld [vmem:[%s188 + $0x4] sm:$0x1]
      %v395 = vunpack.c.l.bf16 %v393
      %v396 = vunpack.c.l.bf16 %v394
      %398 = vset.pattern.permute.xlu0 0
      %399 = vperm.xlu0 %398, %v395
      %v400 = vpop.permute.xlu0 %399
      %403 = vset.pattern.permute.xlu0 0
      %404 = vperm.xlu0 %403, %v396
      %v405 = vpop.permute.xlu0 %404
      %v407 = vmul.f32 %v400, %v380
      %v408 = vmul.f32 %v405, %v380
      %v409 = vadd.f32 %v407, 0.0
      %v410 = vadd.f32 %v408, 0.0
      %v413 = vrot.slane %v409, 1
      %v414 = vrot.slane %v410, 1
      %v415 = vsel %vm387, %v413, %v414
      %v417 = vadd.f32 %v293, %v415
      %v418 = vld [vmem:[%s199] sm:$0xf]
      %v419 = vld [vmem:[%s199 + $0x4] sm:$0x1]
      %v420 = vunpack.c.l.bf16 %v418
      %v421 = vunpack.c.l.bf16 %v419
      %423 = vset.pattern.permute.xlu0 0
      %424 = vperm.xlu0 %423, %v420
      %v425 = vpop.permute.xlu0 %424
      %428 = vset.pattern.permute.xlu0 0
      %429 = vperm.xlu0 %428, %v421
      %v430 = vpop.permute.xlu0 %429
      %v432 = vmul.f32 %v425, %v380
      %v433 = vmul.f32 %v430, %v380
      %v434 = vadd.f32 %v432, 0.0
      %v435 = vadd.f32 %v433, 0.0
      %v438 = vrot.slane %v434, 1
      %v439 = vrot.slane %v435, 1
      %v440 = vsel %vm387, %v438, %v439
      %v442 = vadd.f32 %v304, %v440
      %v443 = vld [vmem:[%s210] sm:$0xf]
      %v444 = vld [vmem:[%s210 + $0x4] sm:$0x1]
      %v445 = vunpack.c.l.bf16 %v443
      %v446 = vunpack.c.l.bf16 %v444
      %448 = vset.pattern.permute.xlu0 0
      %449 = vperm.xlu0 %448, %v445
      %v450 = vpop.permute.xlu0 %449
      %453 = vset.pattern.permute.xlu0 0
      %454 = vperm.xlu0 %453, %v446
      %v455 = vpop.permute.xlu0 %454
      %v457 = vmul.f32 %v450, %v380
      %v458 = vmul.f32 %v455, %v380
      %v459 = vadd.f32 %v457, 0.0
      %v460 = vadd.f32 %v458, 0.0
      %v463 = vrot.slane %v459, 1
      %v464 = vrot.slane %v460, 1
      %v465 = vsel %vm387, %v463, %v464
      %v467 = vadd.f32 %v315, %v465
      %v468 = vld [vmem:[%s221] sm:$0xf]
      %v469 = vld [vmem:[%s221 + $0x4] sm:$0x1]
      %v470 = vunpack.c.l.bf16 %v468
      %v471 = vunpack.c.l.bf16 %v469
      %473 = vset.pattern.permute.xlu0 0
      %474 = vperm.xlu0 %473, %v470
      %v475 = vpop.permute.xlu0 %474
      %478 = vset.pattern.permute.xlu0 0
      %479 = vperm.xlu0 %478, %v471
      %v480 = vpop.permute.xlu0 %479
      %v482 = vmul.f32 %v475, %v380
      %v483 = vmul.f32 %v480, %v380
      %v484 = vadd.f32 %v482, 0.0
      %v485 = vadd.f32 %v483, 0.0
      %v488 = vrot.slane %v484, 1
      %v489 = vrot.slane %v485, 1
      %v490 = vsel %vm387, %v488, %v489
      %v492 = vadd.f32 %v326, %v490
      %v493 = vld [vmem:[%s232] sm:$0xf]
      %v494 = vld [vmem:[%s232 + $0x4] sm:$0x1]
      %v495 = vunpack.c.l.bf16 %v493
      %v496 = vunpack.c.l.bf16 %v494
      %498 = vset.pattern.permute.xlu0 0
      %499 = vperm.xlu0 %498, %v495
      %v500 = vpop.permute.xlu0 %499
      %503 = vset.pattern.permute.xlu0 0
      %504 = vperm.xlu0 %503, %v496
      %v505 = vpop.permute.xlu0 %504
      %v507 = vmul.f32 %v500, %v380
      %v508 = vmul.f32 %v505, %v380
      %v509 = vadd.f32 %v507, 0.0
      %v510 = vadd.f32 %v508, 0.0
      %v513 = vrot.slane %v509, 1
      %v514 = vrot.slane %v510, 1
      %v515 = vsel %vm387, %v513, %v514
      %v517 = vadd.f32 %v337, %v515
      %v518 = vld [vmem:[%s243] sm:$0xf]
      %v519 = vld [vmem:[%s243 + $0x4] sm:$0x1]
      %v520 = vunpack.c.l.bf16 %v518
      %v521 = vunpack.c.l.bf16 %v519
      %523 = vset.pattern.permute.xlu0 0
      %524 = vperm.xlu0 %523, %v520
      %v525 = vpop.permute.xlu0 %524
      %528 = vset.pattern.permute.xlu0 0
      %529 = vperm.xlu0 %528, %v521
      %v530 = vpop.permute.xlu0 %529
      %v532 = vmul.f32 %v525, %v380
      %v533 = vmul.f32 %v530, %v380
      %v534 = vadd.f32 %v532, 0.0
      %v535 = vadd.f32 %v533, 0.0
      %v538 = vrot.slane %v534, 1
      %v539 = vrot.slane %v535, 1
      %v540 = vsel %vm387, %v538, %v539
      %v542 = vadd.f32 %v348, %v540
      %v543 = vld [vmem:[%s254] sm:$0xf]
      %v544 = vld [vmem:[%s254 + $0x4] sm:$0x1]
      %v545 = vunpack.c.l.bf16 %v543
      %v546 = vunpack.c.l.bf16 %v544
      %548 = vset.pattern.permute.xlu0 0
      %549 = vperm.xlu0 %548, %v545
      %v550 = vpop.permute.xlu0 %549
      %553 = vset.pattern.permute.xlu0 0
      %554 = vperm.xlu0 %553, %v546
      %v555 = vpop.permute.xlu0 %554
      %v557 = vmul.f32 %v550, %v380
      %v558 = vmul.f32 %v555, %v380
      %v559 = vadd.f32 %v557, 0.0
      %v560 = vadd.f32 %v558, 0.0
      %v563 = vrot.slane %v559, 1
      %v564 = vrot.slane %v560, 1
      %v565 = vsel %vm387, %v563, %v564
      %v567 = vadd.f32 %v359, %v565
      %s568 = scalar_lea.vmem %s1, 3
      %v569 = vld [vmem:[%s568] sm:$0x1]
      %s570 = scalar_lea.vmem %s165, 144
      %v571 = vld [vmem:[%s570] sm:$0xf]
      %v572 = vunpack.c.l.bf16 %v571
      %v573 = vunpack.c.l.bf16 %v569
      %575 = vset.pattern.permute.xlu0 0
      %576 = vperm.xlu0 %575, %v572
      %v577 = vpop.permute.xlu0 %576
      %v579 = vlaneseq
      %v580 = vshrl.u32 %v579, 7
      %v581 = vsub.s32 0, %v580
      %v582 = vrot.slane %v573, %v581
      %v583 = vmul.f32 %v577, %v582
      %v584 = vadd.f32 %v583, 0.0
      %v585 = vadd.f32 %v392, %v584
      %s586 = scalar_lea.vmem %s165, 152
      %v587 = vld [vmem:[%s586] sm:$0xf]
      %v588 = vunpack.c.l.bf16 %v587
      %590 = vset.pattern.permute.xlu0 0
      %591 = vperm.xlu0 %590, %v588
      %v592 = vpop.permute.xlu0 %591
      %v594 = vmul.f32 %v592, %v582
      %v595 = vadd.f32 %v594, 0.0
      %v596 = vadd.f32 %v417, %v595
      %s597 = scalar_lea.vmem %s165, 160
      %v598 = vld [vmem:[%s597] sm:$0xf]
      %v599 = vunpack.c.l.bf16 %v598
      %601 = vset.pattern.permute.xlu0 0
      %602 = vperm.xlu0 %601, %v599
      %v603 = vpop.permute.xlu0 %602
      %v605 = vmul.f32 %v603, %v582
      %v606 = vadd.f32 %v605, 0.0
      %v607 = vadd.f32 %v442, %v606
      %s608 = scalar_lea.vmem %s165, 168
      %v609 = vld [vmem:[%s608] sm:$0xf]
      %v610 = vunpack.c.l.bf16 %v609
      %612 = vset.pattern.permute.xlu0 0
      %613 = vperm.xlu0 %612, %v610
      %v614 = vpop.permute.xlu0 %613
      %v616 = vmul.f32 %v614, %v582
      %v617 = vadd.f32 %v616, 0.0
      %v618 = vadd.f32 %v467, %v617
      %s619 = scalar_lea.vmem %s165, 176
      %v620 = vld [vmem:[%s619] sm:$0xf]
      %v621 = vunpack.c.l.bf16 %v620
      %623 = vset.pattern.permute.xlu0 0
      %624 = vperm.xlu0 %623, %v621
      %v625 = vpop.permute.xlu0 %624
      %v627 = vmul.f32 %v625, %v582
      %v628 = vadd.f32 %v627, 0.0
      %v629 = vadd.f32 %v492, %v628
      %s630 = scalar_lea.vmem %s165, 184
      %v631 = vld [vmem:[%s630] sm:$0xf]
      %v632 = vunpack.c.l.bf16 %v631
      %634 = vset.pattern.permute.xlu0 0
      %635 = vperm.xlu0 %634, %v632
      %v636 = vpop.permute.xlu0 %635
      %v638 = vmul.f32 %v636, %v582
      %v639 = vadd.f32 %v638, 0.0
      %v640 = vadd.f32 %v517, %v639
      %s641 = scalar_lea.vmem %s165, 192
      %v642 = vld [vmem:[%s641] sm:$0xf]
      %v643 = vunpack.c.l.bf16 %v642
      %645 = vset.pattern.permute.xlu0 0
      %646 = vperm.xlu0 %645, %v643
      %v647 = vpop.permute.xlu0 %646
      %v649 = vmul.f32 %v647, %v582
      %v650 = vadd.f32 %v649, 0.0
      %v651 = vadd.f32 %v542, %v650
      %s652 = scalar_lea.vmem %s165, 200
      %v653 = vld [vmem:[%s652] sm:$0xf]
      %v654 = vunpack.c.l.bf16 %v653
      %656 = vset.pattern.permute.xlu0 0
      %657 = vperm.xlu0 %656, %v654
      %v658 = vpop.permute.xlu0 %657
      %v660 = vmul.f32 %v658, %v582
      %v661 = vadd.f32 %v660, 0.0
      %v662 = vadd.f32 %v567, %v661
      %s663 = scalar_lea.vmem %s1, 4
      %v664 = vld [vmem:[%s663] sm:$0x1]
      %s665 = scalar_lea.vmem %s165, 216
      %v666 = vld [vmem:[%s665] sm:$0xf]
      %v667 = vunpack.c.l.bf16 %v666
      %v668 = vunpack.c.l.bf16 %v664
      %670 = vset.pattern.permute.xlu0 0
      %671 = vperm.xlu0 %670, %v667
      %v672 = vpop.permute.xlu0 %671
      %v674 = vlaneseq
      %v675 = vshrl.u32 %v674, 7
      %v676 = vsub.s32 0, %v675
      %v677 = vrot.slane %v668, %v676
      %v678 = vmul.f32 %v672, %v677
      %v679 = vadd.f32 %v678, 0.0
      %v680 = vadd.f32 %v585, %v679
      %s681 = scalar_lea.vmem %s165, 224
      %v682 = vld [vmem:[%s681] sm:$0xf]
      %v683 = vunpack.c.l.bf16 %v682
      %685 = vset.pattern.permute.xlu0 0
      %686 = vperm.xlu0 %685, %v683
      %v687 = vpop.permute.xlu0 %686
      %v689 = vmul.f32 %v687, %v677
      %v690 = vadd.f32 %v689, 0.0
      %v691 = vadd.f32 %v596, %v690
      %s692 = scalar_lea.vmem %s165, 232
      %v693 = vld [vmem:[%s692] sm:$0xf]
      %v694 = vunpack.c.l.bf16 %v693
      %696 = vset.pattern.permute.xlu0 0
      %697 = vperm.xlu0 %696, %v694
      %v698 = vpop.permute.xlu0 %697
      %v700 = vmul.f32 %v698, %v677
      %v701 = vadd.f32 %v700, 0.0
      %v702 = vadd.f32 %v607, %v701
      %s703 = scalar_lea.vmem %s165, 240
      %v704 = vld [vmem:[%s703] sm:$0xf]
      %v705 = vunpack.c.l.bf16 %v704
      %707 = vset.pattern.permute.xlu0 0
      %708 = vperm.xlu0 %707, %v705
      %v709 = vpop.permute.xlu0 %708
      %v711 = vmul.f32 %v709, %v677
      %v712 = vadd.f32 %v711, 0.0
      %v713 = vadd.f32 %v618, %v712
      %s714 = scalar_lea.vmem %s165, 248
      %v715 = vld [vmem:[%s714] sm:$0xf]
      %v716 = vunpack.c.l.bf16 %v715
      %718 = vset.pattern.permute.xlu0 0
      %719 = vperm.xlu0 %718, %v716
      %v720 = vpop.permute.xlu0 %719
      %v722 = vmul.f32 %v720, %v677
      %v723 = vadd.f32 %v722, 0.0
      %v724 = vadd.f32 %v629, %v723
      %s725 = scalar_lea.vmem %s165, 256
      %v726 = vld [vmem:[%s725] sm:$0xf]
      %v727 = vunpack.c.l.bf16 %v726
      %729 = vset.pattern.permute.xlu0 0
      %730 = vperm.xlu0 %729, %v727
      %v731 = vpop.permute.xlu0 %730
      %v733 = vmul.f32 %v731, %v677
      %v734 = vadd.f32 %v733, 0.0
      %v735 = vadd.f32 %v640, %v734
      %s736 = scalar_lea.vmem %s165, 264
      %v737 = vld [vmem:[%s736] sm:$0xf]
      %v738 = vunpack.c.l.bf16 %v737
      %740 = vset.pattern.permute.xlu0 0
      %741 = vperm.xlu0 %740, %v738
      %v742 = vpop.permute.xlu0 %741
      %v744 = vmul.f32 %v742, %v677
      %v745 = vadd.f32 %v744, 0.0
      %v746 = vadd.f32 %v651, %v745
      %s747 = scalar_lea.vmem %s165, 272
      %v748 = vld [vmem:[%s747] sm:$0xf]
      %v749 = vunpack.c.l.bf16 %v748
      %751 = vset.pattern.permute.xlu0 0
      %752 = vperm.xlu0 %751, %v749
      %v753 = vpop.permute.xlu0 %752
      %v755 = vmul.f32 %v753, %v677
      %v756 = vadd.f32 %v755, 0.0
      %v757 = vadd.f32 %v662, %v756
      %s758 = scalar_lea.vmem %s1, 5
      %v759 = vld [vmem:[%s758] sm:$0x1]
      %v760 = vld [vmem:[%s570] sm:$0xf]
      %v761 = vld [vmem:[%s570 + $0x4] sm:$0x1]
      %v762 = vunpack.c.l.bf16 %v760
      %v763 = vunpack.c.l.bf16 %v761
      %v764 = vunpack.c.l.bf16 %v759
      %766 = vset.pattern.permute.xlu0 0
      %767 = vperm.xlu0 %766, %v762
      %v768 = vpop.permute.xlu0 %767
      %771 = vset.pattern.permute.xlu0 0
      %772 = vperm.xlu0 %771, %v763
      %v773 = vpop.permute.xlu0 %772
      %v775 = vlaneseq
      %v776 = vshrl.u32 %v775, 7
      %v777 = vsub.s32 0, %v776
      %v778 = vrot.slane %v764, %v777
      %v779 = vmul.f32 %v768, %v778
      %v780 = vmul.f32 %v773, %v778
      %v781 = vadd.f32 %v779, 0.0
      %v782 = vadd.f32 %v780, 0.0
      %v785 = vrot.slane %v781, 1
      %v786 = vrot.slane %v782, 1
      %v787 = vsel %vm387, %v785, %v786
      %v789 = vadd.f32 %v680, %v787
      %v790 = vld [vmem:[%s586] sm:$0xf]
      %v791 = vld [vmem:[%s586 + $0x4] sm:$0x1]
      %v792 = vunpack.c.l.bf16 %v790
      %v793 = vunpack.c.l.bf16 %v791
      %795 = vset.pattern.permute.xlu0 0
      %796 = vperm.xlu0 %795, %v792
      %v797 = vpop.permute.xlu0 %796
      %800 = vset.pattern.permute.xlu0 0
      %801 = vperm.xlu0 %800, %v793
      %v802 = vpop.permute.xlu0 %801
      %v804 = vmul.f32 %v797, %v778
      %v805 = vmul.f32 %v802, %v778
      %v806 = vadd.f32 %v804, 0.0
      %v807 = vadd.f32 %v805, 0.0
      %v810 = vrot.slane %v806, 1
      %v811 = vrot.slane %v807, 1
      %v812 = vsel %vm387, %v810, %v811
      %v814 = vadd.f32 %v691, %v812
      %v815 = vld [vmem:[%s597] sm:$0xf]
      %v816 = vld [vmem:[%s597 + $0x4] sm:$0x1]
      %v817 = vunpack.c.l.bf16 %v815
      %v818 = vunpack.c.l.bf16 %v816
      %820 = vset.pattern.permute.xlu0 0
      %821 = vperm.xlu0 %820, %v817
      %v822 = vpop.permute.xlu0 %821
      %825 = vset.pattern.permute.xlu0 0
      %826 = vperm.xlu0 %825, %v818
      %v827 = vpop.permute.xlu0 %826
      %v829 = vmul.f32 %v822, %v778
      %v830 = vmul.f32 %v827, %v778
      %v831 = vadd.f32 %v829, 0.0
      %v832 = vadd.f32 %v830, 0.0
      %v835 = vrot.slane %v831, 1
      %v836 = vrot.slane %v832, 1
      %v837 = vsel %vm387, %v835, %v836
      %v839 = vadd.f32 %v702, %v837
      %v840 = vld [vmem:[%s608] sm:$0xf]
      %v841 = vld [vmem:[%s608 + $0x4] sm:$0x1]
      %v842 = vunpack.c.l.bf16 %v840
      %v843 = vunpack.c.l.bf16 %v841
      %845 = vset.pattern.permute.xlu0 0
      %846 = vperm.xlu0 %845, %v842
      %v847 = vpop.permute.xlu0 %846
      %850 = vset.pattern.permute.xlu0 0
      %851 = vperm.xlu0 %850, %v843
      %v852 = vpop.permute.xlu0 %851
      %v854 = vmul.f32 %v847, %v778
      %v855 = vmul.f32 %v852, %v778
      %v856 = vadd.f32 %v854, 0.0
      %v857 = vadd.f32 %v855, 0.0
      %v860 = vrot.slane %v856, 1
      %v861 = vrot.slane %v857, 1
      %v862 = vsel %vm387, %v860, %v861
      %v864 = vadd.f32 %v713, %v862
      %v865 = vld [vmem:[%s619] sm:$0xf]
      %v866 = vld [vmem:[%s619 + $0x4] sm:$0x1]
      %v867 = vunpack.c.l.bf16 %v865
      %v868 = vunpack.c.l.bf16 %v866
      %870 = vset.pattern.permute.xlu0 0
      %871 = vperm.xlu0 %870, %v867
      %v872 = vpop.permute.xlu0 %871
      %875 = vset.pattern.permute.xlu0 0
      %876 = vperm.xlu0 %875, %v868
      %v877 = vpop.permute.xlu0 %876
      %v879 = vmul.f32 %v872, %v778
      %v880 = vmul.f32 %v877, %v778
      %v881 = vadd.f32 %v879, 0.0
      %v882 = vadd.f32 %v880, 0.0
      %v885 = vrot.slane %v881, 1
      %v886 = vrot.slane %v882, 1
      %v887 = vsel %vm387, %v885, %v886
      %v889 = vadd.f32 %v724, %v887
      %v890 = vld [vmem:[%s630] sm:$0xf]
      %v891 = vld [vmem:[%s630 + $0x4] sm:$0x1]
      %v892 = vunpack.c.l.bf16 %v890
      %v893 = vunpack.c.l.bf16 %v891
      %895 = vset.pattern.permute.xlu0 0
      %896 = vperm.xlu0 %895, %v892
      %v897 = vpop.permute.xlu0 %896
      %900 = vset.pattern.permute.xlu0 0
      %901 = vperm.xlu0 %900, %v893
      %v902 = vpop.permute.xlu0 %901
      %v904 = vmul.f32 %v897, %v778
      %v905 = vmul.f32 %v902, %v778
      %v906 = vadd.f32 %v904, 0.0
      %v907 = vadd.f32 %v905, 0.0
      %v910 = vrot.slane %v906, 1
      %v911 = vrot.slane %v907, 1
      %v912 = vsel %vm387, %v910, %v911
      %v914 = vadd.f32 %v735, %v912
      %v915 = vld [vmem:[%s641] sm:$0xf]
      %v916 = vld [vmem:[%s641 + $0x4] sm:$0x1]
      %v917 = vunpack.c.l.bf16 %v915
      %v918 = vunpack.c.l.bf16 %v916
      %920 = vset.pattern.permute.xlu0 0
      %921 = vperm.xlu0 %920, %v917
      %v922 = vpop.permute.xlu0 %921
      %925 = vset.pattern.permute.xlu0 0
      %926 = vperm.xlu0 %925, %v918
      %v927 = vpop.permute.xlu0 %926
      %v929 = vmul.f32 %v922, %v778
      %v930 = vmul.f32 %v927, %v778
      %v931 = vadd.f32 %v929, 0.0
      %v932 = vadd.f32 %v930, 0.0
      %v935 = vrot.slane %v931, 1
      %v936 = vrot.slane %v932, 1
      %v937 = vsel %vm387, %v935, %v936
      %v939 = vadd.f32 %v746, %v937
      %v940 = vld [vmem:[%s652] sm:$0xf]
      %v941 = vld [vmem:[%s652 + $0x4] sm:$0x1]
      %v942 = vunpack.c.l.bf16 %v940
      %v943 = vunpack.c.l.bf16 %v941
      %945 = vset.pattern.permute.xlu0 0
      %946 = vperm.xlu0 %945, %v942
      %v947 = vpop.permute.xlu0 %946
      %950 = vset.pattern.permute.xlu0 0
      %951 = vperm.xlu0 %950, %v943
      %v952 = vpop.permute.xlu0 %951
      %v954 = vmul.f32 %v947, %v778
      %v955 = vmul.f32 %v952, %v778
      %v956 = vadd.f32 %v954, 0.0
      %v957 = vadd.f32 %v955, 0.0
      %v960 = vrot.slane %v956, 1
      %v961 = vrot.slane %v957, 1
      %v962 = vsel %vm387, %v960, %v961
      %v964 = vadd.f32 %v757, %v962
      %s965 = scalar_lea.vmem %s1, 6
      %v966 = vld [vmem:[%s965] sm:$0x1]
      %v967 = vunpack.c.l.bf16 %v966
      %v968 = vlaneseq
      %v969 = vshrl.u32 %v968, 7
      %v970 = vsub.s32 0, %v969
      %v971 = vrot.slane %v967, %v970
      %v972 = vmul.f32 %v194, %v971
      %v973 = vadd.f32 %v972, 0.0
      %v974 = vadd.f32 %v789, %v973
      %v975 = vmul.f32 %v205, %v971
      %v976 = vadd.f32 %v975, 0.0
      %v977 = vadd.f32 %v814, %v976
      %v978 = vmul.f32 %v216, %v971
      %v979 = vadd.f32 %v978, 0.0
      %v980 = vadd.f32 %v839, %v979
      %v981 = vmul.f32 %v227, %v971
      %v982 = vadd.f32 %v981, 0.0
      %v983 = vadd.f32 %v864, %v982
      %v984 = vmul.f32 %v238, %v971
      %v985 = vadd.f32 %v984, 0.0
      %v986 = vadd.f32 %v889, %v985
      %v987 = vmul.f32 %v249, %v971
      %v988 = vadd.f32 %v987, 0.0
      %v989 = vadd.f32 %v914, %v988
      %v990 = vmul.f32 %v260, %v971
      %v991 = vadd.f32 %v990, 0.0
      %v992 = vadd.f32 %v939, %v991
      %s993 = scalar_lea.vmem %s165, 64
      %v994 = vld [vmem:[%s993] sm:$0xf]
      %v995 = vunpack.c.l.bf16 %v994
      %997 = vset.pattern.permute.xlu0 0
      %998 = vperm.xlu0 %997, %v995
      %v999 = vpop.permute.xlu0 %998
      %v1001 = vmul.f32 %v999, %v971
      %v1002 = vadd.f32 %v1001, 0.0
      %v1003 = vadd.f32 %v964, %v1002
      %s1004 = scalar_lea.vmem %s1, 7
      %v1005 = vld [vmem:[%s1004] sm:$0x1]
      %v1006 = vunpack.c.l.bf16 %v1005
      %v1007 = vlaneseq
      %v1008 = vshrl.u32 %v1007, 7
      %v1009 = vsub.s32 0, %v1008
      %v1010 = vrot.slane %v1006, %v1009
      %v1011 = vmul.f32 %v289, %v1010
      %v1012 = vadd.f32 %v1011, 0.0
      %v1013 = vadd.f32 %v974, %v1012
      %v1014 = vmul.f32 %v300, %v1010
      %v1015 = vadd.f32 %v1014, 0.0
      %v1016 = vadd.f32 %v977, %v1015
      %v1017 = vmul.f32 %v311, %v1010
      %v1018 = vadd.f32 %v1017, 0.0
      %v1019 = vadd.f32 %v980, %v1018
      %v1020 = vmul.f32 %v322, %v1010
      %v1021 = vadd.f32 %v1020, 0.0
      %v1022 = vadd.f32 %v983, %v1021
      %v1023 = vmul.f32 %v333, %v1010
      %v1024 = vadd.f32 %v1023, 0.0
      %v1025 = vadd.f32 %v986, %v1024
      %v1026 = vmul.f32 %v344, %v1010
      %v1027 = vadd.f32 %v1026, 0.0
      %v1028 = vadd.f32 %v989, %v1027
      %v1029 = vmul.f32 %v355, %v1010
      %v1030 = vadd.f32 %v1029, 0.0
      %v1031 = vadd.f32 %v992, %v1030
      %s1032 = scalar_lea.vmem %s165, 136
      %v1033 = vld [vmem:[%s1032] sm:$0xf]
      %v1034 = vunpack.c.l.bf16 %v1033
      %1036 = vset.pattern.permute.xlu0 0
      %1037 = vperm.xlu0 %1036, %v1034
      %v1038 = vpop.permute.xlu0 %1037
      %v1040 = vmul.f32 %v1038, %v1010
      %v1041 = vadd.f32 %v1040, 0.0
      %v1042 = vadd.f32 %v1003, %v1041
      %s1043 = scalar_lea.vmem %s1, 8
      %v1044 = vld [vmem:[%s1043] sm:$0x1]
      %v1045 = vunpack.c.l.bf16 %v1044
      %v1046 = vlaneseq
      %v1047 = vshrl.u32 %v1046, 7
      %v1048 = vsub.s32 0, %v1047
      %v1049 = vrot.slane %v1045, %v1048
      %v1050 = vmul.f32 %v400, %v1049
      %v1051 = vmul.f32 %v405, %v1049
      %v1052 = vadd.f32 %v1050, 0.0
      %v1053 = vadd.f32 %v1051, 0.0
      %v1056 = vrot.slane %v1052, 1
      %v1057 = vrot.slane %v1053, 1
      %v1058 = vsel %vm387, %v1056, %v1057
      %v1060 = vadd.f32 %v1013, %v1058
      %v1061 = vmul.f32 %v425, %v1049
      %v1062 = vmul.f32 %v430, %v1049
      %v1063 = vadd.f32 %v1061, 0.0
      %v1064 = vadd.f32 %v1062, 0.0
      %v1067 = vrot.slane %v1063, 1
      %v1068 = vrot.slane %v1064, 1
      %v1069 = vsel %vm387, %v1067, %v1068
      %v1071 = vadd.f32 %v1016, %v1069
      %v1072 = vmul.f32 %v450, %v1049
      %v1073 = vmul.f32 %v455, %v1049
      %v1074 = vadd.f32 %v1072, 0.0
      %v1075 = vadd.f32 %v1073, 0.0
      %v1078 = vrot.slane %v1074, 1
      %v1079 = vrot.slane %v1075, 1
      %v1080 = vsel %vm387, %v1078, %v1079
      %v1082 = vadd.f32 %v1019, %v1080
      %v1083 = vmul.f32 %v475, %v1049
      %v1084 = vmul.f32 %v480, %v1049
      %v1085 = vadd.f32 %v1083, 0.0
      %v1086 = vadd.f32 %v1084, 0.0
      %v1089 = vrot.slane %v1085, 1
      %v1090 = vrot.slane %v1086, 1
      %v1091 = vsel %vm387, %v1089, %v1090
      %v1093 = vadd.f32 %v1022, %v1091
      %v1094 = vmul.f32 %v500, %v1049
      %v1095 = vmul.f32 %v505, %v1049
      %v1096 = vadd.f32 %v1094, 0.0
      %v1097 = vadd.f32 %v1095, 0.0
      %v1100 = vrot.slane %v1096, 1
      %v1101 = vrot.slane %v1097, 1
      %v1102 = vsel %vm387, %v1100, %v1101
      %v1104 = vadd.f32 %v1025, %v1102
      %v1105 = vmul.f32 %v525, %v1049
      %v1106 = vmul.f32 %v530, %v1049
      %v1107 = vadd.f32 %v1105, 0.0
      %v1108 = vadd.f32 %v1106, 0.0
      %v1111 = vrot.slane %v1107, 1
      %v1112 = vrot.slane %v1108, 1
      %v1113 = vsel %vm387, %v1111, %v1112
      %v1115 = vadd.f32 %v1028, %v1113
      %v1116 = vmul.f32 %v550, %v1049
      %v1117 = vmul.f32 %v555, %v1049
      %v1118 = vadd.f32 %v1116, 0.0
      %v1119 = vadd.f32 %v1117, 0.0
      %v1122 = vrot.slane %v1118, 1
      %v1123 = vrot.slane %v1119, 1
      %v1124 = vsel %vm387, %v1122, %v1123
      %v1126 = vadd.f32 %v1031, %v1124
      %v1127 = vld [vmem:[%s993] sm:$0xf]
      %v1128 = vld [vmem:[%s993 + $0x4] sm:$0x1]
      %v1129 = vunpack.c.l.bf16 %v1127
      %v1130 = vunpack.c.l.bf16 %v1128
      %1132 = vset.pattern.permute.xlu0 0
      %1133 = vperm.xlu0 %1132, %v1129
      %v1134 = vpop.permute.xlu0 %1133
      %1137 = vset.pattern.permute.xlu0 0
      %1138 = vperm.xlu0 %1137, %v1130
      %v1139 = vpop.permute.xlu0 %1138
      %v1141 = vmul.f32 %v1134, %v1049
      %v1142 = vmul.f32 %v1139, %v1049
      %v1143 = vadd.f32 %v1141, 0.0
      %v1144 = vadd.f32 %v1142, 0.0
      %v1147 = vrot.slane %v1143, 1
      %v1148 = vrot.slane %v1144, 1
      %v1149 = vsel %vm387, %v1147, %v1148
      %v1151 = vadd.f32 %v1042, %v1149
      %v1153 = vlaneseq
      %v1154 = vshrl.u32 %v1153, 7
      %v1155 = vsub.s32 0, %v1154
      %v1156 = vrot.slane %v171, %v1155
      %v1158 = vadd.f32 %v1060, %v1156
      %v1159 = vmax.f32 %v1158, 0.0
      %v1160 = vadd.f32 %v1071, %v1156
      %v1161 = vmax.f32 %v1160, 0.0
      %v1162 = vadd.f32 %v1082, %v1156
      %v1163 = vmax.f32 %v1162, 0.0
      %v1164 = vadd.f32 %v1093, %v1156
      %v1165 = vmax.f32 %v1164, 0.0
      %v1166 = vadd.f32 %v1104, %v1156
      %v1167 = vmax.f32 %v1166, 0.0
      %v1168 = vadd.f32 %v1115, %v1156
      %v1169 = vmax.f32 %v1168, 0.0
      %v1170 = vadd.f32 %v1126, %v1156
      %v1171 = vmax.f32 %v1170, 0.0
      %v1172 = vadd.f32 %v1151, %v1156
      %v1173 = vmax.f32 %v1172, 0.0
      %v1174 = vpack.c.bf16 %v1159, %v1159
      %1175 = vst [vmem:[%s170] sm:$0xf] %v1174
      %v1176 = vpack.c.bf16 %v1161, %v1161
      %s1177 = scalar_lea.vmem %s170, 4
      %1178 = vst [vmem:[%s1177] sm:$0xf] %v1176
      %v1179 = vpack.c.bf16 %v1163, %v1163
      %s1180 = scalar_lea.vmem %s170, 8
      %1181 = vst [vmem:[%s1180] sm:$0xf] %v1179
      %v1182 = vpack.c.bf16 %v1165, %v1165
      %s1183 = scalar_lea.vmem %s170, 12
      %1184 = vst [vmem:[%s1183] sm:$0xf] %v1182
      %v1185 = vpack.c.bf16 %v1167, %v1167
      %s1186 = scalar_lea.vmem %s170, 16
      %1187 = vst [vmem:[%s1186] sm:$0xf] %v1185
      %v1188 = vpack.c.bf16 %v1169, %v1169
      %s1189 = scalar_lea.vmem %s170, 20
      %1190 = vst [vmem:[%s1189] sm:$0xf] %v1188
      %v1191 = vpack.c.bf16 %v1171, %v1171
      %s1192 = scalar_lea.vmem %s170, 24
      %1193 = vst [vmem:[%s1192] sm:$0xf] %v1191
      %v1194 = vpack.c.bf16 %v1173, %v1173
      %s1195 = scalar_lea.vmem %s170, 28
      %1196 = vst [vmem:[%s1195] sm:$0xf] %v1194
      %p1197 = scmp.lt.s32.totalorder %s14, 3
      %s1198 = scalar_select %p1197, %s14, 3
      %s1199 = smul.addr %s1198, 8
      %s1200 = smul.addr %s1199, 4
      %s1201 = scalar_lea.vmem %s3, %s1200
      // Predicated region
      $region33: #{model2_apply.5} parent=31 // pred_check
        %p1202 = pneg %p100
      $region34: #{model2_apply.5} parent=31 // pred_check_branch
        %1204 = sbr.rel (%p1202) target = $region36
      $region35: #{model2_apply.5} parent=31 // pred_region
        _
      $region36: #{model2_apply.5} parent=31 // pred_fallthru
        _
    $region32: #{model2_apply.5} parent=5 // pred_fallthru
      _
    %p1205 = scmp.le.s32.totalorder 2, %s9
    // Predicated region
    $region37: #{model2_apply.5} parent=5 // pred_check
      %p1206 = pneg %p1205
    $region38: #{model2_apply.5} parent=5 // pred_check_branch
      %1208 = sbr.rel (%p1206) target = $region40
    $region39: #{model2_apply.5} parent=5 // pred_region
      %s1209 = ssub.s32 %s9, 2
      // Predicated region
      $region41: #{model2_apply.5} parent=39 // pred_check
        %p1210 = pneg %p106
      $region42: #{model2_apply.5} parent=39 // pred_check_branch
        %1212 = sbr.rel (%p1210) target = $region44
      $region43: #{model2_apply.5} parent=39 // pred_region
        %p1213 = scmp.lt.s32.totalorder %s15, 3
        %s1214 = scalar_select %p1213, %s15, 3
        %s1215 = smul.addr %s1214, 8
        %s1216 = smul.addr %s1215, 4
        %s1217 = scalar_lea.vmem %s3, %s1216
      $region44: #{model2_apply.5} parent=39 // pred_fallthru
        _
    $region40: #{model2_apply.5} parent=5 // pred_fallthru
      _
  $region6: #{model2_apply.5} parent=0 // loop_footer
    %s13 = sadd.s32 1, %s9
  $region7: #{model2_apply.5} parent=0 // loop_footer_branch
    %8 = sbr.rel target = $region3
  $region8: #{model2_apply.5} parent=0 // loop_exit
    _

// kernel: model2_apply.9
$region0: #{model2_apply.9}
  #allocation0 [shape = 'u32[]', space=smem, size = 0x4, offset = 0x4, fixed_abs, tag = 'smem constant byte address 0x4 - core index']
  #allocation1 [shape = 'u32[144,128]{1,0:T(1,128)}', space=vmem, size = 0x12000, scoped, tag = 'internal scratch']
  %s0 = inlined_call_operand.vmem [shape: bf16[2,64], index: 0, kind: input, shape index: {}]
  %s1 = inlined_call_operand.vmem [shape: bf16[64,128], index: 1, kind: input, shape index: {}]
  %s2 = inlined_call_operand.vmem [shape: f32[1,128], index: 2, kind: input, shape index: {}]
  %s3 = inlined_call_operand.vmem [shape: bf16[128,128], index: 3, kind: input, shape index: {}]
  %s4 = inlined_call_operand.vmem [shape: f32[1,128], index: 4, kind: input, shape index: {}]
  %s5 = inlined_call_operand.hbm [shape: f32[2,128], index: 5, kind: output, shape index: {}]
  %s6 = sld [smem:[#allocation0]]
  $region30: #{model2_apply.9} parent=0
    _
  %s8 = ssub.s32 1, %s6
  %s9 = scalar_select 0, %s8, %s6
  $region1: #{model2_apply.9} parent=0
    #allocation2 [shape = 'u8[1024]{0}', space=vmem, size = 0x400, scoped, tag = 'output window, operand 0, single buffered']
    #allocation3 [shape = 's32[1]{0}', space=sflag, size = 0x4, scoped, tag = 'scoped memory for model2_apply.9']
    %10 = vsyncpa [#allocation3], 0
    // Predicated region
    $region2: #{model2_apply.9} parent=1 // pred_check
      _
    $region3: #{model2_apply.9} parent=1 // pred_check_branch
      %12 = sbr.rel (0) target = $region5
    $region4: #{model2_apply.9} parent=1 // pred_region
      _
    $region5: #{model2_apply.9} parent=1 // pred_fallthru
      _
    // Predicated region
    $region6: #{model2_apply.9} parent=1 // pred_check
      _
    $region7: #{model2_apply.9} parent=1 // pred_check_branch
      %14 = sbr.rel (0) target = $region9
    $region8: #{model2_apply.9} parent=1 // pred_region
      _
    $region9: #{model2_apply.9} parent=1 // pred_fallthru
      _
    // Predicated region
    $region10: #{model2_apply.9} parent=1 // pred_check
      _
    $region11: #{model2_apply.9} parent=1 // pred_check_branch
      %16 = sbr.rel (0) target = $region13
    $region12: #{model2_apply.9} parent=1 // pred_region
      _
    $region13: #{model2_apply.9} parent=1 // pred_fallthru
      _
    // Predicated region
    $region14: #{model2_apply.9} parent=1 // pred_check
      _
    $region15: #{model2_apply.9} parent=1 // pred_check_branch
      %18 = sbr.rel (0) target = $region17
    $region16: #{model2_apply.9} parent=1 // pred_region
      _
    $region17: #{model2_apply.9} parent=1 // pred_fallthru
      _
    // Predicated region
    $region18: #{model2_apply.9} parent=1 // pred_check
      _
    $region19: #{model2_apply.9} parent=1 // pred_check_branch
      %20 = sbr.rel (0) target = $region21
    $region20: #{model2_apply.9} parent=1 // pred_region
      _
    $region21: #{model2_apply.9} parent=1 // pred_fallthru
      _
    %v22 = vld [vmem:[%s0] sm:$0x1]
    %v23 = vld [vmem:[%s1] sm:$0xf]
    %v24 = vld [vmem:[%s1 + $0x4] sm:$0xf]
    %v25 = vld [vmem:[%s1 + $0x8] sm:$0xf]
    %v26 = vld [vmem:[%s1 + $0xc] sm:$0xf]
    %v27 = vld [vmem:[%s1 + $0x10] sm:$0xf]
    %v28 = vld [vmem:[%s1 + $0x14] sm:$0xf]
    %v29 = vld [vmem:[%s1 + $0x18] sm:$0xf]
    %v30 = vld [vmem:[%s1 + $0x1c] sm:$0xf]
    %v31 = vld [vmem:[%s2] sm:$0x1]
    %v33 = vlaneseq
    %v34 = vshrl.u32 %v33, 7
    %v35 = vsub.s32 0, %v34
    %v36 = vrot.slane %v31, %v35
    %v46 = vunpack.c.l.b16 %v23
    %v47 = vunpack.c.l.b16 %v24
    %v48 = vunpack.c.l.b16 %v25
    %v49 = vunpack.c.l.b16 %v26
    %v50 = vunpack.c.l.b16 %v27
    %v51 = vunpack.c.l.b16 %v28
    %v52 = vunpack.c.l.b16 %v29
    %v53 = vunpack.c.l.b16 %v30
    %v54 = vpack.c.b16 %v47, %v46
    %v55 = vpack.c.b16 %v49, %v48
    %v56 = vpack.c.b16 %v51, %v50
    %v57 = vpack.c.b16 %v53, %v52
    %vm62 = vcmask 523264
    %v64 = vsel %vm62, %v22, 0
    %66 = vmatprep.subr.bf16.mxu0 0
    %67 = vmatpush1.bf16.msra.mxu0 %v54
    %68 = vmatprep.subr.bf16.mxu0 0
    %69 = vmatpush1.bf16.msra.mxu0 %v55
    %70 = vmatprep.subr.bf16.mxu0 0
    %71 = vmatpush1.bf16.msra.mxu0 %v56
    %72 = vmatprep.subr.bf16.mxu0 0
    %73 = vmatpush1.bf16.msra.mxu0 %v57
    %74 = vmatprep.subr.bf16.mxu0 0
    %75 = vmatpush1.bf16.msra.mxu0 0
    %76 = vmatprep.subr.bf16.mxu0 0
    %77 = vmatpush1.bf16.msra.mxu0 0
    %78 = vmatprep.subr.bf16.mxu0 0
    %79 = vmatpush1.bf16.msra.mxu0 0
    %80 = vmatprep.subr.bf16.mxu0 0
    %81 = vmatpush1.bf16.msra.mxu0 0
    %82 = vmatprep.subr.bf16.mxu0 0
    %83 = vmatpush1.bf16.msra.mxu0 0
    %84 = vmatprep.subr.bf16.mxu0 0
    %85 = vmatpush1.bf16.msra.mxu0 0
    %86 = vmatprep.subr.bf16.mxu0 0
    %87 = vmatpush1.bf16.msra.mxu0 0
    %88 = vmatprep.subr.bf16.mxu0 0
    %89 = vmatpush1.bf16.msra.mxu0 0
    %90 = vmatprep.subr.bf16.mxu0 0
    %91 = vmatpush1.bf16.msra.mxu0 0
    %92 = vmatprep.subr.bf16.mxu0 0
    %93 = vmatpush1.bf16.msra.mxu0 0
    %94 = vmatprep.subr.bf16.mxu0 0
    %95 = vmatpush1.bf16.msra.mxu0 0
    %96 = vmatprep.subr.bf16.mxu0 0
    %97 = vmatpush1.bf16.msra.mxu0 0
    %98 = vmatprep.mubr.bf16.mxu0 0
    %99 = vmatmul.mubr.bf16.gmra.mrb[0].mxu0 %v64
    %v100 = vpop.f32.mrb[0].mxu0
    %v101 = vadd.f32 %v36, %v100
    %v102 = vpop.f32.mrb[0].mxu0
    %v103 = vpop.f32.mrb[0].mxu0
    %v104 = vpop.f32.mrb[0].mxu0
    %105 = vdwg.mxu0
    %v106 = vmax.f32 %v101, 0.0
    %v107 = vpack.c.bf16 %v106, %v106
    %v108 = vld [vmem:[%s3] sm:$0xf]
    %v109 = vld [vmem:[%s3 + $0x4] sm:$0xf]
    %v110 = vld [vmem:[%s3 + $0x8] sm:$0xf]
    %v111 = vld [vmem:[%s3 + $0xc] sm:$0xf]
    %v112 = vld [vmem:[%s3 + $0x10] sm:$0xf]
    %v113 = vld [vmem:[%s3 + $0x14] sm:$0xf]
    %v114 = vld [vmem:[%s3 + $0x18] sm:$0xf]
    %v115 = vld [vmem:[%s3 + $0x1c] sm:$0xf]
    %v116 = vld [vmem:[%s3 + $0x20] sm:$0xf]
    %v117 = vld [vmem:[%s3 + $0x24] sm:$0xf]
    %v118 = vld [vmem:[%s3 + $0x28] sm:$0xf]
    %v119 = vld [vmem:[%s3 + $0x2c] sm:$0xf]
    %v120 = vld [vmem:[%s3 + $0x30] sm:$0xf]
    %v121 = vld [vmem:[%s3 + $0x34] sm:$0xf]
    %v122 = vld [vmem:[%s3 + $0x38] sm:$0xf]
    %v123 = vld [vmem:[%s3 + $0x3c] sm:$0xf]
    %v124 = vld [vmem:[%s4] sm:$0x1]
    %v126 = vlaneseq
    %v127 = vshrl.u32 %v126, 7
    %v128 = vsub.s32 0, %v127
    %v129 = vrot.slane %v124, %v128
    %v147 = vunpack.c.l.b16 %v108
    %v148 = vunpack.c.l.b16 %v109
    %v149 = vunpack.c.l.b16 %v110
    %v150 = vunpack.c.l.b16 %v111
    %v151 = vunpack.c.l.b16 %v112
    %v152 = vunpack.c.l.b16 %v113
    %v153 = vunpack.c.l.b16 %v114
    %v154 = vunpack.c.l.b16 %v115
    %v155 = vunpack.c.l.b16 %v116
    %v156 = vunpack.c.l.b16 %v117
    %v157 = vunpack.c.l.b16 %v118
    %v158 = vunpack.c.l.b16 %v119
    %v159 = vunpack.c.l.b16 %v120
    %v160 = vunpack.c.l.b16 %v121
    %v161 = vunpack.c.l.b16 %v122
    %v162 = vunpack.c.l.b16 %v123
    %v163 = vpack.c.b16 %v148, %v147
    %v164 = vpack.c.b16 %v150, %v149
    %v165 = vpack.c.b16 %v152, %v151
    %v166 = vpack.c.b16 %v154, %v153
    %v167 = vpack.c.b16 %v156, %v155
    %v168 = vpack.c.b16 %v158, %v157
    %v169 = vpack.c.b16 %v160, %v159
    %v170 = vpack.c.b16 %v162, %v161
    %179 = vmatprep.subr.bf16.mxu0 0
    %180 = vmatpush1.bf16.msra.mxu0 %v163
    %181 = vmatprep.subr.bf16.mxu0 0
    %182 = vmatpush1.bf16.msra.mxu0 %v164
    %183 = vmatprep.subr.bf16.mxu0 0
    %184 = vmatpush1.bf16.msra.mxu0 %v165
    %185 = vmatprep.subr.bf16.mxu0 0
    %186 = vmatpush1.bf16.msra.mxu0 %v166
    %187 = vmatprep.subr.bf16.mxu0 0
    %188 = vmatpush1.bf16.msra.mxu0 %v167
    %189 = vmatprep.subr.bf16.mxu0 0
    %190 = vmatpush1.bf16.msra.mxu0 %v168
    %191 = vmatprep.subr.bf16.mxu0 0
    %192 = vmatpush1.bf16.msra.mxu0 %v169
    %193 = vmatprep.subr.bf16.mxu0 0
    %194 = vmatpush1.bf16.msra.mxu0 %v170
    %195 = vmatprep.subr.bf16.mxu0 0
    %196 = vmatpush1.bf16.msra.mxu0 0
    %197 = vmatprep.subr.bf16.mxu0 0
    %198 = vmatpush1.bf16.msra.mxu0 0
    %199 = vmatprep.subr.bf16.mxu0 0
    %200 = vmatpush1.bf16.msra.mxu0 0
    %201 = vmatprep.subr.bf16.mxu0 0
    %202 = vmatpush1.bf16.msra.mxu0 0
    %203 = vmatprep.subr.bf16.mxu0 0
    %204 = vmatpush1.bf16.msra.mxu0 0
    %205 = vmatprep.subr.bf16.mxu0 0
    %206 = vmatpush1.bf16.msra.mxu0 0
    %207 = vmatprep.subr.bf16.mxu0 0
    %208 = vmatpush1.bf16.msra.mxu0 0
    %209 = vmatprep.subr.bf16.mxu0 0
    %210 = vmatpush1.bf16.msra.mxu0 0
    %211 = vmatprep.mubr.bf16.mxu0 0
    %212 = vmatmul.mubr.bf16.gmra.mrb[0].mxu0 %v107
    %v213 = vpop.f32.mrb[0].mxu0
    %v214 = vadd.f32 %v129, %v213
    %v215 = vpop.f32.mrb[0].mxu0
    %v216 = vpop.f32.mrb[0].mxu0
    %v217 = vpop.f32.mrb[0].mxu0
    %218 = vdwg.mxu0
    %219 = vst [vmem:[#allocation2] sm:$0x3] %v214
    // Predicated region
    $region22: #{model2_apply.9} parent=1 // pred_check
      _
    $region23: #{model2_apply.9} parent=1 // pred_check_branch
      %221 = sbr.rel (0) target = $region25
    $region24: #{model2_apply.9} parent=1 // pred_region
      %s223 = ssub.s32 32, 32
      %224 = vsyncadd [#allocation3], %s223
      %s226 = sshll.u32 [#allocation2], 4
      %s227 = int_to_ptr.vmem [resolvable:$true] %s226
      %229 = dma.vmem_to_hbm [thread:$0]  %s227, 32, %s5, [#allocation3]
    $region25: #{model2_apply.9} parent=1 // pred_fallthru
      _
    // Predicated region
    $region26: #{model2_apply.9} parent=1 // pred_check
      _
    $region27: #{model2_apply.9} parent=1 // pred_check_branch
      %231 = sbr.rel (0) target = $region29
    $region28: #{model2_apply.9} parent=1 // pred_region
      %232 = dma.done [#allocation3], 32
    $region29: #{model2_apply.9} parent=1 // pred_fallthru
      _
    %233 = vsyncpa [#allocation3], 1

// kernel: model2_apply.6
$region0: #{model2_apply.6}
  #allocation0 [shape = 'u32[]', space=smem, size = 0x4, offset = 0x4, fixed_abs, tag = 'smem constant byte address 0x4 - core index']
  #allocation1 [shape = 'u32[144,128]{1,0:T(1,128)}', space=vmem, size = 0x12000, scoped, tag = 'internal scratch']
  %s0 = inlined_call_operand.vmem [shape: bf16[4,4,5,5,128], index: 0, kind: input, shape index: {}]
  %s1 = inlined_call_operand.vmem [shape: bf16[9,128,128], index: 1, kind: input, shape index: {}]
  %s2 = inlined_call_operand.vmem [shape: f32[1,128], index: 2, kind: input, shape index: {}]
  %s3 = inlined_call_operand.vmem [shape: f32[4,1,128], index: 3, kind: output, shape index: {}]
  %s4 = sld [smem:[#allocation0]]
  $region45: #{model2_apply.6} parent=0
    _
  %s6 = ssub.s32 1, %s4
  %s7 = scalar_select 0, %s6, %s4
  loop: start=0, step=1, limit=6
  $region2: #{model2_apply.6} parent=0 // loop_pre_header
    _
  $region3: #{model2_apply.6} parent=0 // loop_header
    %s9 = sphi 0, %s13
    %p10 = scmp.ge.s32.totalorder %s9, 6
    %s19 = sphi 0, %s21
    %s22 = sphi 0, %s19
    %s23 = sphi 0, %s22
    %s39 = sphi 0, %s23
    %s43 = sphi 0, %s43
    %s45 = sphi 0, %s43
    %s46 = sphi 0, %s45
    %s60 = sphi 0, %s46
    %s64 = sphi 0, %s64
    %s66 = sphi 0, %s64
    %s67 = sphi 0, %s66
    %s81 = sphi 0, %s67
    %s87 = sphi 0, %s89
    %s90 = sphi 0, %s87
    %s91 = sphi 0, %s90
    %s107 = sphi 0, %s91
  $region4: #{model2_apply.6} parent=0 // loop_header_branch
    %12 = sbr.rel (%p10) target = $region8
  $region5: #{model2_apply.6} parent=0 // loop_body
    %s14 = ssub.s32 %s9, 1
    %s15 = ssub.s32 %s9, 2
    %s16 = sadd.s32 %s9, 1
    %s17 = ssub.s32 %s9, %s16
    %p18 = scmp.eq.s32.totalorder %s17, 0
    %s20 = sadd.s32 %s19, 1
    %s21 = scalar_select %p18, %s19, %s20
    %p24 = pneg %p18
    %p25 = scmp.eq.s32.totalorder %s9, 3
    %p26 = por %p24, %p25
    %p27 = scmp.ne.s32.totalorder %s19, %s22
    %p28 = scmp.eq.s32.totalorder %s9, 0
    %p29 = por %p27, %p28
    %p30 = scmp.ne.s32.totalorder %s19, %s22
    %p31 = scmp.eq.s32.totalorder %s14, 3
    %p32 = por %p30, %p31
    %p33 = scmp.ne.s32.totalorder %s22, %s23
    %p34 = scmp.eq.s32.totalorder %s14, 0
    %p35 = por %p33, %p34
    %p36 = scmp.ne.s32.totalorder %s22, %s23
    %p37 = scmp.eq.s32.totalorder %s15, 3
    %p38 = por %p36, %p37
    %p40 = scmp.ne.s32.totalorder %s23, %s39
    %p41 = scmp.eq.s32.totalorder %s15, 0
    %p42 = por %p40, %p41
    %s44 = sadd.s32 %s43, 1
    %p47 = scmp.eq.s32.totalorder %s9, 3
    %p48 = scmp.ne.s32.totalorder %s43, %s45
    %p49 = scmp.eq.s32.totalorder %s9, 0
    %p50 = por %p48, %p49
    %p51 = scmp.ne.s32.totalorder %s43, %s45
    %p52 = scmp.eq.s32.totalorder %s14, 3
    %p53 = por %p51, %p52
    %p54 = scmp.ne.s32.totalorder %s45, %s46
    %p55 = scmp.eq.s32.totalorder %s14, 0
    %p56 = por %p54, %p55
    %p57 = scmp.ne.s32.totalorder %s45, %s46
    %p58 = scmp.eq.s32.totalorder %s15, 3
    %p59 = por %p57, %p58
    %p61 = scmp.ne.s32.totalorder %s46, %s60
    %p62 = scmp.eq.s32.totalorder %s15, 0
    %p63 = por %p61, %p62
    %s65 = sadd.s32 %s64, 1
    %p68 = scmp.eq.s32.totalorder %s9, 3
    %p69 = scmp.ne.s32.totalorder %s64, %s66
    %p70 = scmp.eq.s32.totalorder %s9, 0
    %p71 = por %p69, %p70
    %p72 = scmp.ne.s32.totalorder %s64, %s66
    %p73 = scmp.eq.s32.totalorder %s14, 3
    %p74 = por %p72, %p73
    %p75 = scmp.ne.s32.totalorder %s66, %s67
    %p76 = scmp.eq.s32.totalorder %s14, 0
    %p77 = por %p75, %p76
    %p78 = scmp.ne.s32.totalorder %s66, %s67
    %p79 = scmp.eq.s32.totalorder %s15, 3
    %p80 = por %p78, %p79
    %p82 = scmp.ne.s32.totalorder %s67, %s81
    %p83 = scmp.eq.s32.totalorder %s15, 0
    %p84 = por %p82, %p83
    %s85 = ssub.s32 %s9, %s16
    %p86 = scmp.eq.s32.totalorder %s85, 0
    %s88 = sadd.s32 %s87, 1
    %s89 = scalar_select %p86, %s87, %s88
    %p92 = pneg %p86
    %p93 = scmp.eq.s32.totalorder %s9, 3
    %p94 = por %p92, %p93
    %p95 = scmp.ne.s32.totalorder %s87, %s90
    %p96 = scmp.eq.s32.totalorder %s9, 0
    %p97 = por %p95, %p96
    %p98 = scmp.ne.s32.totalorder %s87, %s90
    %p99 = scmp.eq.s32.totalorder %s14, 3
    %p100 = por %p98, %p99
    %p101 = scmp.ne.s32.totalorder %s90, %s91
    %p102 = scmp.eq.s32.totalorder %s14, 0
    %p103 = por %p101, %p102
    %p104 = scmp.ne.s32.totalorder %s90, %s91
    %p105 = scmp.eq.s32.totalorder %s15, 3
    %p106 = por %p104, %p105
    %p108 = scmp.ne.s32.totalorder %s91, %s107
    %p109 = scmp.eq.s32.totalorder %s15, 0
    %p110 = por %p108, %p109
    %p111 = scmp.le.s32.totalorder 1, %s9
    %p112 = scmp.lt.s32.totalorder %s9, 5
    %p113 = pnand %p111, %p112
    %p114 = pneg %p113
    // Predicated region
    $region9: #{model2_apply.6} parent=5 // pred_check
      _
    $region10: #{model2_apply.6} parent=5 // pred_check_branch
      %116 = sbr.rel (%p113) target = $region12
    $region11: #{model2_apply.6} parent=5 // pred_region
      %s117 = ssub.s32 %s9, 1
      // Predicated region
      $region13: #{model2_apply.6} parent=11 // pred_check
        %p118 = pneg %p56
      $region14: #{model2_apply.6} parent=11 // pred_check_branch
        %120 = sbr.rel (%p118) target = $region16
      $region15: #{model2_apply.6} parent=11 // pred_region
        _
      $region16: #{model2_apply.6} parent=11 // pred_fallthru
        _
      // Predicated region
      $region17: #{model2_apply.6} parent=11 // pred_check
        %p121 = pneg %p77
      $region18: #{model2_apply.6} parent=11 // pred_check_branch
        %123 = sbr.rel (%p121) target = $region20
      $region19: #{model2_apply.6} parent=11 // pred_region
        _
      $region20: #{model2_apply.6} parent=11 // pred_fallthru
        _
    $region12: #{model2_apply.6} parent=5 // pred_fallthru
      _
    %p124 = scmp.lt.s32.totalorder %s9, 4
    // Predicated region
    $region21: #{model2_apply.6} parent=5 // pred_check
      %p125 = pneg %p124
    $region22: #{model2_apply.6} parent=5 // pred_check_branch
      %127 = sbr.rel (%p125) target = $region24
    $region23: #{model2_apply.6} parent=5 // pred_region
      // Predicated region
      $region25: #{model2_apply.6} parent=23 // pred_check
        %p128 = pneg %p29
      $region26: #{model2_apply.6} parent=23 // pred_check_branch
        %130 = sbr.rel (%p128) target = $region28
      $region27: #{model2_apply.6} parent=23 // pred_region
        %p131 = scmp.lt.s32.totalorder %s9, 3
        %s132 = scalar_select %p131, %s9, 3
        %s133 = smul.addr %s132, 20
        %s134 = smul.addr %s133, 4
        %s135 = scalar_lea.vmem %s0, %s134
      $region28: #{model2_apply.6} parent=23 // pred_fallthru
        _
    $region24: #{model2_apply.6} parent=5 // pred_fallthru
      _
    %p136 = scmp.le.s32.totalorder 1, %s9
    %p137 = scmp.lt.s32.totalorder %s9, 5
    %p138 = pnand %p136, %p137
    %p139 = pneg %p138
    // Predicated region
    $region29: #{model2_apply.6} parent=5 // pred_check
      _
    $region30: #{model2_apply.6} parent=5 // pred_check_branch
      %141 = sbr.rel (%p138) target = $region32
    $region31: #{model2_apply.6} parent=5 // pred_region
      %s142 = ssub.s32 %s9, 1
      %p143 = scmp.lt.s32.totalorder %s14, 3
      %s144 = scalar_select %p143, %s14, 3
      %s145 = smul.addr %s144, 20
      %s146 = smul.addr %s145, 4
      %s147 = scalar_lea.vmem %s0, %s146
      %p148 = pneg %p35
      %p149 = pneg %p32
      %p150 = pneg %p56
      %p151 = pneg %p53
      %p152 = pneg %p77
      %p153 = pneg %p74
      %p154 = pneg %p103
      %p155 = pneg %p100
      %p156 = scmp.lt.s32.totalorder %s14, 3
      %s157 = scalar_select %p156, %s14, 3
      %s158 = scalar_lea.vmem %s3, %s157
      %p159 = scmp.lt.s32.totalorder %s14, 3
      %s160 = scalar_select %p159, %s14, 3
      %s161 = smul.addr %s160, 20
      %s162 = smul.addr %s161, 4
      %s163 = scalar_lea.vmem %s0, %s162
      %p164 = scmp.lt.s32.totalorder %s14, 3
      %s165 = scalar_select %p164, %s14, 3
      %s166 = scalar_lea.vmem %s3, %s165
      %v168 = vld [vmem:[%s2] sm:$0x1]
      %v169 = vld [vmem:[%s1] sm:$0xf]
      %v170 = vld [vmem:[%s1 + $0x4] sm:$0xf]
      %v171 = vld [vmem:[%s1 + $0x8] sm:$0xf]
      %v172 = vld [vmem:[%s1 + $0xc] sm:$0xf]
      %v173 = vld [vmem:[%s1 + $0x10] sm:$0xf]
      %v174 = vld [vmem:[%s1 + $0x14] sm:$0xf]
      %v175 = vld [vmem:[%s1 + $0x18] sm:$0xf]
      %v176 = vld [vmem:[%s1 + $0x1c] sm:$0xf]
      %v177 = vld [vmem:[%s1 + $0x20] sm:$0xf]
      %v178 = vld [vmem:[%s1 + $0x24] sm:$0xf]
      %v179 = vld [vmem:[%s1 + $0x28] sm:$0xf]
      %v180 = vld [vmem:[%s1 + $0x2c] sm:$0xf]
      %v181 = vld [vmem:[%s1 + $0x30] sm:$0xf]
      %v182 = vld [vmem:[%s1 + $0x34] sm:$0xf]
      %v183 = vld [vmem:[%s1 + $0x38] sm:$0xf]
      %v184 = vld [vmem:[%s1 + $0x3c] sm:$0xf]
      %v185 = vld [vmem:[%s163] sm:$0x3]
      %s186 = scalar_lea.vmem %s163, 4
      %v187 = vld [vmem:[%s186] sm:$0x3]
      %s188 = scalar_lea.vmem %s163, 8
      %v189 = vld [vmem:[%s188] sm:$0x3]
      %s190 = scalar_lea.vmem %s163, 12
      %v191 = vld [vmem:[%s190] sm:$0x3]
      %s192 = scalar_lea.vmem %s1, 64
      %v193 = vld [vmem:[%s192] sm:$0xf]
      %v194 = vld [vmem:[%s192 + $0x4] sm:$0xf]
      %v195 = vld [vmem:[%s192 + $0x8] sm:$0xf]
      %v196 = vld [vmem:[%s192 + $0xc] sm:$0xf]
      %v197 = vld [vmem:[%s192 + $0x10] sm:$0xf]
      %v198 = vld [vmem:[%s192 + $0x14] sm:$0xf]
      %v199 = vld [vmem:[%s192 + $0x18] sm:$0xf]
      %v200 = vld [vmem:[%s192 + $0x1c] sm:$0xf]
      %v201 = vld [vmem:[%s192 + $0x20] sm:$0xf]
      %v202 = vld [vmem:[%s192 + $0x24] sm:$0xf]
      %v203 = vld [vmem:[%s192 + $0x28] sm:$0xf]
      %v204 = vld [vmem:[%s192 + $0x2c] sm:$0xf]
      %v205 = vld [vmem:[%s192 + $0x30] sm:$0xf]
      %v206 = vld [vmem:[%s192 + $0x34] sm:$0xf]
      %v207 = vld [vmem:[%s192 + $0x38] sm:$0xf]
      %v208 = vld [vmem:[%s192 + $0x3c] sm:$0xf]
      %s209 = scalar_lea.vmem %s163, 20
      %v210 = vld [vmem:[%s209] sm:$0x3]
      %v227 = vunpack.c.l.b16 %v193
      %v228 = vunpack.c.l.b16 %v194
      %v229 = vunpack.c.l.b16 %v195
      %v230 = vunpack.c.l.b16 %v196
      %v231 = vunpack.c.l.b16 %v197
      %v232 = vunpack.c.l.b16 %v198
      %v233 = vunpack.c.l.b16 %v199
      %v234 = vunpack.c.l.b16 %v200
      %v235 = vunpack.c.l.b16 %v201
      %v236 = vunpack.c.l.b16 %v202
      %v237 = vunpack.c.l.b16 %v203
      %v238 = vunpack.c.l.b16 %v204
      %v239 = vunpack.c.l.b16 %v205
      %v240 = vunpack.c.l.b16 %v206
      %v241 = vunpack.c.l.b16 %v207
      %v242 = vunpack.c.l.b16 %v208
      %v243 = vpack.c.b16 %v228, %v227
      %v244 = vpack.c.b16 %v230, %v229
      %v245 = vpack.c.b16 %v232, %v231
      %v246 = vpack.c.b16 %v234, %v233
      %v247 = vpack.c.b16 %v236, %v235
      %v248 = vpack.c.b16 %v238, %v237
      %v249 = vpack.c.b16 %v240, %v239
      %v250 = vpack.c.b16 %v242, %v241
      %259 = vmatprep.subr.bf16.mxu0 0
      %260 = vmatpush1.bf16.msra.mxu0 %v243
      %261 = vmatprep.subr.bf16.mxu0 0
      %262 = vmatpush1.bf16.msra.mxu0 %v244
      %263 = vmatprep.subr.bf16.mxu0 0
      %264 = vmatpush1.bf16.msra.mxu0 %v245
      %265 = vmatprep.subr.bf16.mxu0 0
      %266 = vmatpush1.bf16.msra.mxu0 %v246
      %267 = vmatprep.subr.bf16.mxu0 0
      %268 = vmatpush1.bf16.msra.mxu0 %v247
      %269 = vmatprep.subr.bf16.mxu0 0
      %270 = vmatpush1.bf16.msra.mxu0 %v248
      %271 = vmatprep.subr.bf16.mxu0 0
      %272 = vmatpush1.bf16.msra.mxu0 %v249
      %273 = vmatprep.subr.bf16.mxu0 0
      %274 = vmatpush1.bf16.msra.mxu0 %v250
      %275 = vmatprep.subr.bf16.mxu0 0
      %276 = vmatpush1.bf16.msra.mxu0 0
      %277 = vmatprep.subr.bf16.mxu0 0
      %278 = vmatpush1.bf16.msra.mxu0 0
      %279 = vmatprep.subr.bf16.mxu0 0
      %280 = vmatpush1.bf16.msra.mxu0 0
      %281 = vmatprep.subr.bf16.mxu0 0
      %282 = vmatpush1.bf16.msra.mxu0 0
      %283 = vmatprep.subr.bf16.mxu0 0
      %284 = vmatpush1.bf16.msra.mxu0 0
      %285 = vmatprep.subr.bf16.mxu0 0
      %286 = vmatpush1.bf16.msra.mxu0 0
      %287 = vmatprep.subr.bf16.mxu0 0
      %288 = vmatpush1.bf16.msra.mxu0 0
      %289 = vmatprep.subr.bf16.mxu0 0
      %290 = vmatpush1.bf16.msra.mxu0 0
      %291 = vmatprep.mubr.bf16.mxu0 0
      %292 = vmatmul.mubr.bf16.gmra.mrb[0].mxu0 %v210
      %v293 = vpop.f32.mrb[0].mxu0
      %v294 = vadd.f32 0.0, %v293
      %v295 = vpop.f32.mrb[0].mxu0
      %v296 = vpop.f32.mrb[0].mxu0
      %v297 = vpop.f32.mrb[0].mxu0
      %298 = vdwg.mxu0
      %v315 = vunpack.c.l.b16 %v169
      %v316 = vunpack.c.l.b16 %v170
      %v317 = vunpack.c.l.b16 %v171
      %v318 = vunpack.c.l.b16 %v172
      %v319 = vunpack.c.l.b16 %v173
      %v320 = vunpack.c.l.b16 %v174
      %v321 = vunpack.c.l.b16 %v175
      %v322 = vunpack.c.l.b16 %v176
      %v323 = vunpack.c.l.b16 %v177
      %v324 = vunpack.c.l.b16 %v178
      %v325 = vunpack.c.l.b16 %v179
      %v326 = vunpack.c.l.b16 %v180
      %v327 = vunpack.c.l.b16 %v181
      %v328 = vunpack.c.l.b16 %v182
      %v329 = vunpack.c.l.b16 %v183
      %v330 = vunpack.c.l.b16 %v184
      %v331 = vpack.c.b16 %v316, %v315
      %v332 = vpack.c.b16 %v318, %v317
      %v333 = vpack.c.b16 %v320, %v319
      %v334 = vpack.c.b16 %v322, %v321
      %v335 = vpack.c.b16 %v324, %v323
      %v336 = vpack.c.b16 %v326, %v325
      %v337 = vpack.c.b16 %v328, %v327
      %v338 = vpack.c.b16 %v330, %v329
      %347 = vmatprep.subr.bf16.mxu0 0
      %348 = vmatpush1.bf16.msra.mxu0 %v331
      %349 = vmatprep.subr.bf16.mxu0 0
      %350 = vmatpush1.bf16.msra.mxu0 %v332
      %351 = vmatprep.subr.bf16.mxu0 0
      %352 = vmatpush1.bf16.msra.mxu0 %v333
      %353 = vmatprep.subr.bf16.mxu0 0
      %354 = vmatpush1.bf16.msra.mxu0 %v334
      %355 = vmatprep.subr.bf16.mxu0 0
      %356 = vmatpush1.bf16.msra.mxu0 %v335
      %357 = vmatprep.subr.bf16.mxu0 0
      %358 = vmatpush1.bf16.msra.mxu0 %v336
      %359 = vmatprep.subr.bf16.mxu0 0
      %360 = vmatpush1.bf16.msra.mxu0 %v337
      %361 = vmatprep.subr.bf16.mxu0 0
      %362 = vmatpush1.bf16.msra.mxu0 %v338
      %363 = vmatprep.subr.bf16.mxu0 0
      %364 = vmatpush1.bf16.msra.mxu0 0
      %365 = vmatprep.subr.bf16.mxu0 0
      %366 = vmatpush1.bf16.msra.mxu0 0
      %367 = vmatprep.subr.bf16.mxu0 0
      %368 = vmatpush1.bf16.msra.mxu0 0
      %369 = vmatprep.subr.bf16.mxu0 0
      %370 = vmatpush1.bf16.msra.mxu0 0
      %371 = vmatprep.subr.bf16.mxu0 0
      %372 = vmatpush1.bf16.msra.mxu0 0
      %373 = vmatprep.subr.bf16.mxu0 0
      %374 = vmatpush1.bf16.msra.mxu0 0
      %375 = vmatprep.subr.bf16.mxu0 0
      %376 = vmatpush1.bf16.msra.mxu0 0
      %377 = vmatprep.subr.bf16.mxu0 0
      %378 = vmatpush1.bf16.msra.mxu0 0
      %379 = vmatprep.mubr.bf16.mxu0 0
      %380 = vmatmul.mubr.bf16.gmra.mrb[0].mxu0 %v185
      %v381 = vpop.f32.mrb[0].mxu0
      %v382 = vadd.f32 %v294, %v381
      %v383 = vpop.f32.mrb[0].mxu0
      %v384 = vpop.f32.mrb[0].mxu0
      %v385 = vpop.f32.mrb[0].mxu0
      %386 = vdwg.mxu0
      %s387 = scalar_lea.vmem %s163, 24
      %v388 = vld [vmem:[%s387] sm:$0x3]
      %389 = vmatprep.subr.bf16.mxu0 0
      %390 = vmatpush1.bf16.msra.mxu0 %v243
      %391 = vmatprep.subr.bf16.mxu0 0
      %392 = vmatpush1.bf16.msra.mxu0 %v244
      %393 = vmatprep.subr.bf16.mxu0 0
      %394 = vmatpush1.bf16.msra.mxu0 %v245
      %395 = vmatprep.subr.bf16.mxu0 0
      %396 = vmatpush1.bf16.msra.mxu0 %v246
      %397 = vmatprep.subr.bf16.mxu0 0
      %398 = vmatpush1.bf16.msra.mxu0 %v247
      %399 = vmatprep.subr.bf16.mxu0 0
      %400 = vmatpush1.bf16.msra.mxu0 %v248
      %401 = vmatprep.subr.bf16.mxu0 0
      %402 = vmatpush1.bf16.msra.mxu0 %v249
      %403 = vmatprep.subr.bf16.mxu0 0
      %404 = vmatpush1.bf16.msra.mxu0 %v250
      %405 = vmatprep.subr.bf16.mxu0 0
      %406 = vmatpush1.bf16.msra.mxu0 0
      %407 = vmatprep.subr.bf16.mxu0 0
      %408 = vmatpush1.bf16.msra.mxu0 0
      %409 = vmatprep.subr.bf16.mxu0 0
      %410 = vmatpush1.bf16.msra.mxu0 0
      %411 = vmatprep.subr.bf16.mxu0 0
      %412 = vmatpush1.bf16.msra.mxu0 0
      %413 = vmatprep.subr.bf16.mxu0 0
      %414 = vmatpush1.bf16.msra.mxu0 0
      %415 = vmatprep.subr.bf16.mxu0 0
      %416 = vmatpush1.bf16.msra.mxu0 0
      %417 = vmatprep.subr.bf16.mxu0 0
      %418 = vmatpush1.bf16.msra.mxu0 0
      %419 = vmatprep.subr.bf16.mxu0 0
      %420 = vmatpush1.bf16.msra.mxu0 0
      %421 = vmatprep.mubr.bf16.mxu0 0
      %422 = vmatmul.mubr.bf16.gmra.mrb[0].mxu0 %v388
      %v423 = vpop.f32.mrb[0].mxu0
      %v424 = vadd.f32 0.0, %v423
      %v425 = vpop.f32.mrb[0].mxu0
      %v426 = vpop.f32.mrb[0].mxu0
      %v427 = vpop.f32.mrb[0].mxu0
      %428 = vdwg.mxu0
      %429 = vmatprep.subr.bf16.mxu0 0
      %430 = vmatpush1.bf16.msra.mxu0 %v331
      %431 = vmatprep.subr.bf16.mxu0 0
      %432 = vmatpush1.bf16.msra.mxu0 %v332
      %433 = vmatprep.subr.bf16.mxu0 0
      %434 = vmatpush1.bf16.msra.mxu0 %v333
      %435 = vmatprep.subr.bf16.mxu0 0
      %436 = vmatpush1.bf16.msra.mxu0 %v334
      %437 = vmatprep.subr.bf16.mxu0 0
      %438 = vmatpush1.bf16.msra.mxu0 %v335
      %439 = vmatprep.subr.bf16.mxu0 0
      %440 = vmatpush1.bf16.msra.mxu0 %v336
      %441 = vmatprep.subr.bf16.mxu0 0
      %442 = vmatpush1.bf16.msra.mxu0 %v337
      %443 = vmatprep.subr.bf16.mxu0 0
      %444 = vmatpush1.bf16.msra.mxu0 %v338
      %445 = vmatprep.subr.bf16.mxu0 0
      %446 = vmatpush1.bf16.msra.mxu0 0
      %447 = vmatprep.subr.bf16.mxu0 0
      %448 = vmatpush1.bf16.msra.mxu0 0
      %449 = vmatprep.subr.bf16.mxu0 0
      %450 = vmatpush1.bf16.msra.mxu0 0
      %451 = vmatprep.subr.bf16.mxu0 0
      %452 = vmatpush1.bf16.msra.mxu0 0
      %453 = vmatprep.subr.bf16.mxu0 0
      %454 = vmatpush1.bf16.msra.mxu0 0
      %455 = vmatprep.subr.bf16.mxu0 0
      %456 = vmatpush1.bf16.msra.mxu0 0
      %457 = vmatprep.subr.bf16.mxu0 0
      %458 = vmatpush1.bf16.msra.mxu0 0
      %459 = vmatprep.subr.bf16.mxu0 0
      %460 = vmatpush1.bf16.msra.mxu0 0
      %461 = vmatprep.mubr.bf16.mxu0 0
      %462 = vmatmul.mubr.bf16.gmra.mrb[0].mxu0 %v187
      %v463 = vpop.f32.mrb[0].mxu0
      %v464 = vadd.f32 %v424, %v463
      %v465 = vpop.f32.mrb[0].mxu0
      %v466 = vpop.f32.mrb[0].mxu0
      %v467 = vpop.f32.mrb[0].mxu0
      %468 = vdwg.mxu0
      %s469 = scalar_lea.vmem %s163, 28
      %v470 = vld [vmem:[%s469] sm:$0x3]
      %471 = vmatprep.subr.bf16.mxu0 0
      %472 = vmatpush1.bf16.msra.mxu0 %v243
      %473 = vmatprep.subr.bf16.mxu0 0
      %474 = vmatpush1.bf16.msra.mxu0 %v244
      %475 = vmatprep.subr.bf16.mxu0 0
      %476 = vmatpush1.bf16.msra.mxu0 %v245
      %477 = vmatprep.subr.bf16.mxu0 0
      %478 = vmatpush1.bf16.msra.mxu0 %v246
      %479 = vmatprep.subr.bf16.mxu0 0
      %480 = vmatpush1.bf16.msra.mxu0 %v247
      %481 = vmatprep.subr.bf16.mxu0 0
      %482 = vmatpush1.bf16.msra.mxu0 %v248
      %483 = vmatprep.subr.bf16.mxu0 0
      %484 = vmatpush1.bf16.msra.mxu0 %v249
      %485 = vmatprep.subr.bf16.mxu0 0
      %486 = vmatpush1.bf16.msra.mxu0 %v250
      %487 = vmatprep.subr.bf16.mxu0 0
      %488 = vmatpush1.bf16.msra.mxu0 0
      %489 = vmatprep.subr.bf16.mxu0 0
      %490 = vmatpush1.bf16.msra.mxu0 0
      %491 = vmatprep.subr.bf16.mxu0 0
      %492 = vmatpush1.bf16.msra.mxu0 0
      %493 = vmatprep.subr.bf16.mxu0 0
      %494 = vmatpush1.bf16.msra.mxu0 0
      %495 = vmatprep.subr.bf16.mxu0 0
      %496 = vmatpush1.bf16.msra.mxu0 0
      %497 = vmatprep.subr.bf16.mxu0 0
      %498 = vmatpush1.bf16.msra.mxu0 0
      %499 = vmatprep.subr.bf16.mxu0 0
      %500 = vmatpush1.bf16.msra.mxu0 0
      %501 = vmatprep.subr.bf16.mxu0 0
      %502 = vmatpush1.bf16.msra.mxu0 0
      %503 = vmatprep.mubr.bf16.mxu0 0
      %504 = vmatmul.mubr.bf16.gmra.mrb[0].mxu0 %v470
      %v505 = vpop.f32.mrb[0].mxu0
      %v506 = vadd.f32 0.0, %v505
      %v507 = vpop.f32.mrb[0].mxu0
      %v508 = vpop.f32.mrb[0].mxu0
      %v509 = vpop.f32.mrb[0].mxu0
      %510 = vdwg.mxu0
      %511 = vmatprep.subr.bf16.mxu0 0
      %512 = vmatpush1.bf16.msra.mxu0 %v331
      %513 = vmatprep.subr.bf16.mxu0 0
      %514 = vmatpush1.bf16.msra.mxu0 %v332
      %515 = vmatprep.subr.bf16.mxu0 0
      %516 = vmatpush1.bf16.msra.mxu0 %v333
      %517 = vmatprep.subr.bf16.mxu0 0
      %518 = vmatpush1.bf16.msra.mxu0 %v334
      %519 = vmatprep.subr.bf16.mxu0 0
      %520 = vmatpush1.bf16.msra.mxu0 %v335
      %521 = vmatprep.subr.bf16.mxu0 0
      %522 = vmatpush1.bf16.msra.mxu0 %v336
      %523 = vmatprep.subr.bf16.mxu0 0
      %524 = vmatpush1.bf16.msra.mxu0 %v337
      %525 = vmatprep.subr.bf16.mxu0 0
      %526 = vmatpush1.bf16.msra.mxu0 %v338
      %527 = vmatprep.subr.bf16.mxu0 0
      %528 = vmatpush1.bf16.msra.mxu0 0
      %529 = vmatprep.subr.bf16.mxu0 0
      %530 = vmatpush1.bf16.msra.mxu0 0
      %531 = vmatprep.subr.bf16.mxu0 0
      %532 = vmatpush1.bf16.msra.mxu0 0
      %533 = vmatprep.subr.bf16.mxu0 0
      %534 = vmatpush1.bf16.msra.mxu0 0
      %535 = vmatprep.subr.bf16.mxu0 0
      %536 = vmatpush1.bf16.msra.mxu0 0
      %537 = vmatprep.subr.bf16.mxu0 0
      %538 = vmatpush1.bf16.msra.mxu0 0
      %539 = vmatprep.subr.bf16.mxu0 0
      %540 = vmatpush1.bf16.msra.mxu0 0
      %541 = vmatprep.subr.bf16.mxu0 0
      %542 = vmatpush1.bf16.msra.mxu0 0
      %543 = vmatprep.mubr.bf16.mxu0 0
      %544 = vmatmul.mubr.bf16.gmra.mrb[0].mxu0 %v189
      %v545 = vpop.f32.mrb[0].mxu0
      %v546 = vadd.f32 %v506, %v545
      %v547 = vpop.f32.mrb[0].mxu0
      %v548 = vpop.f32.mrb[0].mxu0
      %v549 = vpop.f32.mrb[0].mxu0
      %550 = vdwg.mxu0
      %s551 = scalar_lea.vmem %s163, 32
      %v552 = vld [vmem:[%s551] sm:$0x3]
      %553 = vmatprep.subr.bf16.mxu0 0
      %554 = vmatpush1.bf16.msra.mxu0 %v243
      %555 = vmatprep.subr.bf16.mxu0 0
      %556 = vmatpush1.bf16.msra.mxu0 %v244
      %557 = vmatprep.subr.bf16.mxu0 0
      %558 = vmatpush1.bf16.msra.mxu0 %v245
      %559 = vmatprep.subr.bf16.mxu0 0
      %560 = vmatpush1.bf16.msra.mxu0 %v246
      %561 = vmatprep.subr.bf16.mxu0 0
      %562 = vmatpush1.bf16.msra.mxu0 %v247
      %563 = vmatprep.subr.bf16.mxu0 0
      %564 = vmatpush1.bf16.msra.mxu0 %v248
      %565 = vmatprep.subr.bf16.mxu0 0
      %566 = vmatpush1.bf16.msra.mxu0 %v249
      %567 = vmatprep.subr.bf16.mxu0 0
      %568 = vmatpush1.bf16.msra.mxu0 %v250
      %569 = vmatprep.subr.bf16.mxu0 0
      %570 = vmatpush1.bf16.msra.mxu0 0
      %571 = vmatprep.subr.bf16.mxu0 0
      %572 = vmatpush1.bf16.msra.mxu0 0
      %573 = vmatprep.subr.bf16.mxu0 0
      %574 = vmatpush1.bf16.msra.mxu0 0
      %575 = vmatprep.subr.bf16.mxu0 0
      %576 = vmatpush1.bf16.msra.mxu0 0
      %577 = vmatprep.subr.bf16.mxu0 0
      %578 = vmatpush1.bf16.msra.mxu0 0
      %579 = vmatprep.subr.bf16.mxu0 0
      %580 = vmatpush1.bf16.msra.mxu0 0
      %581 = vmatprep.subr.bf16.mxu0 0
      %582 = vmatpush1.bf16.msra.mxu0 0
      %583 = vmatprep.subr.bf16.mxu0 0
      %584 = vmatpush1.bf16.msra.mxu0 0
      %585 = vmatprep.mubr.bf16.mxu0 0
      %586 = vmatmul.mubr.bf16.gmra.mrb[0].mxu0 %v552
      %v587 = vpop.f32.mrb[0].mxu0
      %v588 = vadd.f32 0.0, %v587
      %v589 = vpop.f32.mrb[0].mxu0
      %v590 = vpop.f32.mrb[0].mxu0
      %v591 = vpop.f32.mrb[0].mxu0
      %592 = vdwg.mxu0
      %593 = vmatprep.subr.bf16.mxu0 0
      %594 = vmatpush1.bf16.msra.mxu0 %v331
      %595 = vmatprep.subr.bf16.mxu0 0
      %596 = vmatpush1.bf16.msra.mxu0 %v332
      %597 = vmatprep.subr.bf16.mxu0 0
      %598 = vmatpush1.bf16.msra.mxu0 %v333
      %599 = vmatprep.subr.bf16.mxu0 0
      %600 = vmatpush1.bf16.msra.mxu0 %v334
      %601 = vmatprep.subr.bf16.mxu0 0
      %602 = vmatpush1.bf16.msra.mxu0 %v335
      %603 = vmatprep.subr.bf16.mxu0 0
      %604 = vmatpush1.bf16.msra.mxu0 %v336
      %605 = vmatprep.subr.bf16.mxu0 0
      %606 = vmatpush1.bf16.msra.mxu0 %v337
      %607 = vmatprep.subr.bf16.mxu0 0
      %608 = vmatpush1.bf16.msra.mxu0 %v338
      %609 = vmatprep.subr.bf16.mxu0 0
      %610 = vmatpush1.bf16.msra.mxu0 0
      %611 = vmatprep.subr.bf16.mxu0 0
      %612 = vmatpush1.bf16.msra.mxu0 0
      %613 = vmatprep.subr.bf16.mxu0 0
      %614 = vmatpush1.bf16.msra.mxu0 0
      %615 = vmatprep.subr.bf16.mxu0 0
      %616 = vmatpush1.bf16.msra.mxu0 0
      %617 = vmatprep.subr.bf16.mxu0 0
      %618 = vmatpush1.bf16.msra.mxu0 0
      %619 = vmatprep.subr.bf16.mxu0 0
      %620 = vmatpush1.bf16.msra.mxu0 0
      %621 = vmatprep.subr.bf16.mxu0 0
      %622 = vmatpush1.bf16.msra.mxu0 0
      %623 = vmatprep.subr.bf16.mxu0 0
      %624 = vmatpush1.bf16.msra.mxu0 0
      %625 = vmatprep.mubr.bf16.mxu0 0
      %626 = vmatmul.mubr.bf16.gmra.mrb[0].mxu0 %v191
      %v627 = vpop.f32.mrb[0].mxu0
      %v628 = vadd.f32 %v588, %v627
      %v629 = vpop.f32.mrb[0].mxu0
      %v630 = vpop.f32.mrb[0].mxu0
      %v631 = vpop.f32.mrb[0].mxu0
      %632 = vdwg.mxu0
      %s633 = scalar_lea.vmem %s1, 128
      %v634 = vld [vmem:[%s633] sm:$0xf]
      %v635 = vld [vmem:[%s633 + $0x4] sm:$0xf]
      %v636 = vld [vmem:[%s633 + $0x8] sm:$0xf]
      %v637 = vld [vmem:[%s633 + $0xc] sm:$0xf]
      %v638 = vld [vmem:[%s633 + $0x10] sm:$0xf]
      %v639 = vld [vmem:[%s633 + $0x14] sm:$0xf]
      %v640 = vld [vmem:[%s633 + $0x18] sm:$0xf]
      %v641 = vld [vmem:[%s633 + $0x1c] sm:$0xf]
      %v642 = vld [vmem:[%s633 + $0x20] sm:$0xf]
      %v643 = vld [vmem:[%s633 + $0x24] sm:$0xf]
      %v644 = vld [vmem:[%s633 + $0x28] sm:$0xf]
      %v645 = vld [vmem:[%s633 + $0x2c] sm:$0xf]
      %v646 = vld [vmem:[%s633 + $0x30] sm:$0xf]
      %v647 = vld [vmem:[%s633 + $0x34] sm:$0xf]
      %v648 = vld [vmem:[%s633 + $0x38] sm:$0xf]
      %v649 = vld [vmem:[%s633 + $0x3c] sm:$0xf]
      %v650 = vld [vmem:[%s163] sm:$0x7]
      %v652 = vunpack.c.l.b16 %v650
      %v653 = vpack.c.b16 %v652, %v652
      %v655 = vshrl.u32 %v653, 16
      %v657 = vshll.u32 %v653, 16
      %v659 = vrot.slane %v657, 1
      %v660 = vor.u32 %v655, %v659
      %v678 = vunpack.c.l.b16 %v634
      %v679 = vunpack.c.l.b16 %v635
      %v680 = vunpack.c.l.b16 %v636
      %v681 = vunpack.c.l.b16 %v637
      %v682 = vunpack.c.l.b16 %v638
      %v683 = vunpack.c.l.b16 %v639
      %v684 = vunpack.c.l.b16 %v640
      %v685 = vunpack.c.l.b16 %v641
      %v686 = vunpack.c.l.b16 %v642
      %v687 = vunpack.c.l.b16 %v643
      %v688 = vunpack.c.l.b16 %v644
      %v689 = vunpack.c.l.b16 %v645
      %v690 = vunpack.c.l.b16 %v646
      %v691 = vunpack.c.l.b16 %v647
      %v692 = vunpack.c.l.b16 %v648
      %v693 = vunpack.c.l.b16 %v649
      %v694 = vpack.c.b16 %v679, %v678
      %v695 = vpack.c.b16 %v681, %v680
      %v696 = vpack.c.b16 %v683, %v682
      %v697 = vpack.c.b16 %v685, %v684
      %v698 = vpack.c.b16 %v687, %v686
      %v699 = vpack.c.b16 %v689, %v688
      %v700 = vpack.c.b16 %v691, %v690
      %v701 = vpack.c.b16 %v693, %v692
      %710 = vmatprep.subr.bf16.mxu0 0
      %711 = vmatpush1.bf16.msra.mxu0 %v694
      %712 = vmatprep.subr.bf16.mxu0 0
      %713 = vmatpush1.bf16.msra.mxu0 %v695
      %714 = vmatprep.subr.bf16.mxu0 0
      %715 = vmatpush1.bf16.msra.mxu0 %v696
      %716 = vmatprep.subr.bf16.mxu0 0
      %717 = vmatpush1.bf16.msra.mxu0 %v697
      %718 = vmatprep.subr.bf16.mxu0 0
      %719 = vmatpush1.bf16.msra.mxu0 %v698
      %720 = vmatprep.subr.bf16.mxu0 0
      %721 = vmatpush1.bf16.msra.mxu0 %v699
      %722 = vmatprep.subr.bf16.mxu0 0
      %723 = vmatpush1.bf16.msra.mxu0 %v700
      %724 = vmatprep.subr.bf16.mxu0 0
      %725 = vmatpush1.bf16.msra.mxu0 %v701
      %726 = vmatprep.subr.bf16.mxu0 0
      %727 = vmatpush1.bf16.msra.mxu0 0
      %728 = vmatprep.subr.bf16.mxu0 0
      %729 = vmatpush1.bf16.msra.mxu0 0
      %730 = vmatprep.subr.bf16.mxu0 0
      %731 = vmatpush1.bf16.msra.mxu0 0
      %732 = vmatprep.subr.bf16.mxu0 0
      %733 = vmatpush1.bf16.msra.mxu0 0
      %734 = vmatprep.subr.bf16.mxu0 0
      %735 = vmatpush1.bf16.msra.mxu0 0
      %736 = vmatprep.subr.bf16.mxu0 0
      %737 = vmatpush1.bf16.msra.mxu0 0
      %738 = vmatprep.subr.bf16.mxu0 0
      %739 = vmatpush1.bf16.msra.mxu0 0
      %740 = vmatprep.subr.bf16.mxu0 0
      %741 = vmatpush1.bf16.msra.mxu0 0
      %742 = vmatprep.mubr.bf16.mxu0 0
      %743 = vmatmul.mubr.bf16.gmra.mrb[0].mxu0 %v660
      %v744 = vpop.f32.mrb[0].mxu0
      %v745 = vadd.f32 0.0, %v744
      %v746 = vpop.f32.mrb[0].mxu0
      %v747 = vpop.f32.mrb[0].mxu0
      %v748 = vpop.f32.mrb[0].mxu0
      %749 = vdwg.mxu0
      %v750 = vadd.f32 %v382, %v745
      %v751 = vld [vmem:[%s186] sm:$0x7]
      %v753 = vunpack.c.l.b16 %v751
      %v754 = vpack.c.b16 %v753, %v753
      %v756 = vshrl.u32 %v754, 16
      %v758 = vshll.u32 %v754, 16
      %v760 = vrot.slane %v758, 1
      %v761 = vor.u32 %v756, %v760
      %763 = vmatprep.subr.bf16.mxu0 0
      %764 = vmatpush1.bf16.msra.mxu0 %v694
      %765 = vmatprep.subr.bf16.mxu0 0
      %766 = vmatpush1.bf16.msra.mxu0 %v695
      %767 = vmatprep.subr.bf16.mxu0 0
      %768 = vmatpush1.bf16.msra.mxu0 %v696
      %769 = vmatprep.subr.bf16.mxu0 0
      %770 = vmatpush1.bf16.msra.mxu0 %v697
      %771 = vmatprep.subr.bf16.mxu0 0
      %772 = vmatpush1.bf16.msra.mxu0 %v698
      %773 = vmatprep.subr.bf16.mxu0 0
      %774 = vmatpush1.bf16.msra.mxu0 %v699
      %775 = vmatprep.subr.bf16.mxu0 0
      %776 = vmatpush1.bf16.msra.mxu0 %v700
      %777 = vmatprep.subr.bf16.mxu0 0
      %778 = vmatpush1.bf16.msra.mxu0 %v701
      %779 = vmatprep.subr.bf16.mxu0 0
      %780 = vmatpush1.bf16.msra.mxu0 0
      %781 = vmatprep.subr.bf16.mxu0 0
      %782 = vmatpush1.bf16.msra.mxu0 0
      %783 = vmatprep.subr.bf16.mxu0 0
      %784 = vmatpush1.bf16.msra.mxu0 0
      %785 = vmatprep.subr.bf16.mxu0 0
      %786 = vmatpush1.bf16.msra.mxu0 0
      %787 = vmatprep.subr.bf16.mxu0 0
      %788 = vmatpush1.bf16.msra.mxu0 0
      %789 = vmatprep.subr.bf16.mxu0 0
      %790 = vmatpush1.bf16.msra.mxu0 0
      %791 = vmatprep.subr.bf16.mxu0 0
      %792 = vmatpush1.bf16.msra.mxu0 0
      %793 = vmatprep.subr.bf16.mxu0 0
      %794 = vmatpush1.bf16.msra.mxu0 0
      %795 = vmatprep.mubr.bf16.mxu0 0
      %796 = vmatmul.mubr.bf16.gmra.mrb[0].mxu0 %v761
      %v797 = vpop.f32.mrb[0].mxu0
      %v798 = vadd.f32 0.0, %v797
      %v799 = vpop.f32.mrb[0].mxu0
      %v800 = vpop.f32.mrb[0].mxu0
      %v801 = vpop.f32.mrb[0].mxu0
      %802 = vdwg.mxu0
      %v803 = vadd.f32 %v464, %v798
      %v804 = vld [vmem:[%s188] sm:$0x7]
      %v806 = vunpack.c.l.b16 %v804
      %v807 = vpack.c.b16 %v806, %v806
      %v809 = vshrl.u32 %v807, 16
      %v811 = vshll.u32 %v807, 16
      %v813 = vrot.slane %v811, 1
      %v814 = vor.u32 %v809, %v813
      %816 = vmatprep.subr.bf16.mxu0 0
      %817 = vmatpush1.bf16.msra.mxu0 %v694
      %818 = vmatprep.subr.bf16.mxu0 0
      %819 = vmatpush1.bf16.msra.mxu0 %v695
      %820 = vmatprep.subr.bf16.mxu0 0
      %821 = vmatpush1.bf16.msra.mxu0 %v696
      %822 = vmatprep.subr.bf16.mxu0 0
      %823 = vmatpush1.bf16.msra.mxu0 %v697
      %824 = vmatprep.subr.bf16.mxu0 0
      %825 = vmatpush1.bf16.msra.mxu0 %v698
      %826 = vmatprep.subr.bf16.mxu0 0
      %827 = vmatpush1.bf16.msra.mxu0 %v699
      %828 = vmatprep.subr.bf16.mxu0 0
      %829 = vmatpush1.bf16.msra.mxu0 %v700
      %830 = vmatprep.subr.bf16.mxu0 0
      %831 = vmatpush1.bf16.msra.mxu0 %v701
      %832 = vmatprep.subr.bf16.mxu0 0
      %833 = vmatpush1.bf16.msra.mxu0 0
      %834 = vmatprep.subr.bf16.mxu0 0
      %835 = vmatpush1.bf16.msra.mxu0 0
      %836 = vmatprep.subr.bf16.mxu0 0
      %837 = vmatpush1.bf16.msra.mxu0 0
      %838 = vmatprep.subr.bf16.mxu0 0
      %839 = vmatpush1.bf16.msra.mxu0 0
      %840 = vmatprep.subr.bf16.mxu0 0
      %841 = vmatpush1.bf16.msra.mxu0 0
      %842 = vmatprep.subr.bf16.mxu0 0
      %843 = vmatpush1.bf16.msra.mxu0 0
      %844 = vmatprep.subr.bf16.mxu0 0
      %845 = vmatpush1.bf16.msra.mxu0 0
      %846 = vmatprep.subr.bf16.mxu0 0
      %847 = vmatpush1.bf16.msra.mxu0 0
      %848 = vmatprep.mubr.bf16.mxu0 0
      %849 = vmatmul.mubr.bf16.gmra.mrb[0].mxu0 %v814
      %v850 = vpop.f32.mrb[0].mxu0
      %v851 = vadd.f32 0.0, %v850
      %v852 = vpop.f32.mrb[0].mxu0
      %v853 = vpop.f32.mrb[0].mxu0
      %v854 = vpop.f32.mrb[0].mxu0
      %855 = vdwg.mxu0
      %v856 = vadd.f32 %v546, %v851
      %v857 = vld [vmem:[%s190] sm:$0x7]
      %v859 = vunpack.c.l.b16 %v857
      %v860 = vpack.c.b16 %v859, %v859
      %v862 = vshrl.u32 %v860, 16
      %v864 = vshll.u32 %v860, 16
      %v866 = vrot.slane %v864, 1
      %v867 = vor.u32 %v862, %v866
      %869 = vmatprep.subr.bf16.mxu0 0
      %870 = vmatpush1.bf16.msra.mxu0 %v694
      %871 = vmatprep.subr.bf16.mxu0 0
      %872 = vmatpush1.bf16.msra.mxu0 %v695
      %873 = vmatprep.subr.bf16.mxu0 0
      %874 = vmatpush1.bf16.msra.mxu0 %v696
      %875 = vmatprep.subr.bf16.mxu0 0
      %876 = vmatpush1.bf16.msra.mxu0 %v697
      %877 = vmatprep.subr.bf16.mxu0 0
      %878 = vmatpush1.bf16.msra.mxu0 %v698
      %879 = vmatprep.subr.bf16.mxu0 0
      %880 = vmatpush1.bf16.msra.mxu0 %v699
      %881 = vmatprep.subr.bf16.mxu0 0
      %882 = vmatpush1.bf16.msra.mxu0 %v700
      %883 = vmatprep.subr.bf16.mxu0 0
      %884 = vmatpush1.bf16.msra.mxu0 %v701
      %885 = vmatprep.subr.bf16.mxu0 0
      %886 = vmatpush1.bf16.msra.mxu0 0
      %887 = vmatprep.subr.bf16.mxu0 0
      %888 = vmatpush1.bf16.msra.mxu0 0
      %889 = vmatprep.subr.bf16.mxu0 0
      %890 = vmatpush1.bf16.msra.mxu0 0
      %891 = vmatprep.subr.bf16.mxu0 0
      %892 = vmatpush1.bf16.msra.mxu0 0
      %893 = vmatprep.subr.bf16.mxu0 0
      %894 = vmatpush1.bf16.msra.mxu0 0
      %895 = vmatprep.subr.bf16.mxu0 0
      %896 = vmatpush1.bf16.msra.mxu0 0
      %897 = vmatprep.subr.bf16.mxu0 0
      %898 = vmatpush1.bf16.msra.mxu0 0
      %899 = vmatprep.subr.bf16.mxu0 0
      %900 = vmatpush1.bf16.msra.mxu0 0
      %901 = vmatprep.mubr.bf16.mxu0 0
      %902 = vmatmul.mubr.bf16.gmra.mrb[0].mxu0 %v867
      %v903 = vpop.f32.mrb[0].mxu0
      %v904 = vadd.f32 0.0, %v903
      %v905 = vpop.f32.mrb[0].mxu0
      %v906 = vpop.f32.mrb[0].mxu0
      %v907 = vpop.f32.mrb[0].mxu0
      %908 = vdwg.mxu0
      %v909 = vadd.f32 %v628, %v904
      %s910 = scalar_lea.vmem %s1, 192
      %v911 = vld [vmem:[%s910] sm:$0xf]
      %v912 = vld [vmem:[%s910 + $0x4] sm:$0xf]
      %v913 = vld [vmem:[%s910 + $0x8] sm:$0xf]
      %v914 = vld [vmem:[%s910 + $0xc] sm:$0xf]
      %v915 = vld [vmem:[%s910 + $0x10] sm:$0xf]
      %v916 = vld [vmem:[%s910 + $0x14] sm:$0xf]
      %v917 = vld [vmem:[%s910 + $0x18] sm:$0xf]
      %v918 = vld [vmem:[%s910 + $0x1c] sm:$0xf]
      %v919 = vld [vmem:[%s910 + $0x20] sm:$0xf]
      %v920 = vld [vmem:[%s910 + $0x24] sm:$0xf]
      %v921 = vld [vmem:[%s910 + $0x28] sm:$0xf]
      %v922 = vld [vmem:[%s910 + $0x2c] sm:$0xf]
      %v923 = vld [vmem:[%s910 + $0x30] sm:$0xf]
      %v924 = vld [vmem:[%s910 + $0x34] sm:$0xf]
      %v925 = vld [vmem:[%s910 + $0x38] sm:$0xf]
      %v926 = vld [vmem:[%s910 + $0x3c] sm:$0xf]
      %s927 = scalar_lea.vmem %s163, 40
      %v928 = vld [vmem:[%s927] sm:$0x3]
      %v945 = vunpack.c.l.b16 %v911
      %v946 = vunpack.c.l.b16 %v912
      %v947 = vunpack.c.l.b16 %v913
      %v948 = vunpack.c.l.b16 %v914
      %v949 = vunpack.c.l.b16 %v915
      %v950 = vunpack.c.l.b16 %v916
      %v951 = vunpack.c.l.b16 %v917
      %v952 = vunpack.c.l.b16 %v918
      %v953 = vunpack.c.l.b16 %v919
      %v954 = vunpack.c.l.b16 %v920
      %v955 = vunpack.c.l.b16 %v921
      %v956 = vunpack.c.l.b16 %v922
      %v957 = vunpack.c.l.b16 %v923
      %v958 = vunpack.c.l.b16 %v924
      %v959 = vunpack.c.l.b16 %v925
      %v960 = vunpack.c.l.b16 %v926
      %v961 = vpack.c.b16 %v946, %v945
      %v962 = vpack.c.b16 %v948, %v947
      %v963 = vpack.c.b16 %v950, %v949
      %v964 = vpack.c.b16 %v952, %v951
      %v965 = vpack.c.b16 %v954, %v953
      %v966 = vpack.c.b16 %v956, %v955
      %v967 = vpack.c.b16 %v958, %v957
      %v968 = vpack.c.b16 %v960, %v959
      %977 = vmatprep.subr.bf16.mxu0 0
      %978 = vmatpush1.bf16.msra.mxu0 %v961
      %979 = vmatprep.subr.bf16.mxu0 0
      %980 = vmatpush1.bf16.msra.mxu0 %v962
      %981 = vmatprep.subr.bf16.mxu0 0
      %982 = vmatpush1.bf16.msra.mxu0 %v963
      %983 = vmatprep.subr.bf16.mxu0 0
      %984 = vmatpush1.bf16.msra.mxu0 %v964
      %985 = vmatprep.subr.bf16.mxu0 0
      %986 = vmatpush1.bf16.msra.mxu0 %v965
      %987 = vmatprep.subr.bf16.mxu0 0
      %988 = vmatpush1.bf16.msra.mxu0 %v966
      %989 = vmatprep.subr.bf16.mxu0 0
      %990 = vmatpush1.bf16.msra.mxu0 %v967
      %991 = vmatprep.subr.bf16.mxu0 0
      %992 = vmatpush1.bf16.msra.mxu0 %v968
      %993 = vmatprep.subr.bf16.mxu0 0
      %994 = vmatpush1.bf16.msra.mxu0 0
      %995 = vmatprep.subr.bf16.mxu0 0
      %996 = vmatpush1.bf16.msra.mxu0 0
      %997 = vmatprep.subr.bf16.mxu0 0
      %998 = vmatpush1.bf16.msra.mxu0 0
      %999 = vmatprep.subr.bf16.mxu0 0
      %1000 = vmatpush1.bf16.msra.mxu0 0
      %1001 = vmatprep.subr.bf16.mxu0 0
      %1002 = vmatpush1.bf16.msra.mxu0 0
      %1003 = vmatprep.subr.bf16.mxu0 0
      %1004 = vmatpush1.bf16.msra.mxu0 0
      %1005 = vmatprep.subr.bf16.mxu0 0
      %1006 = vmatpush1.bf16.msra.mxu0 0
      %1007 = vmatprep.subr.bf16.mxu0 0
      %1008 = vmatpush1.bf16.msra.mxu0 0
      %1009 = vmatprep.mubr.bf16.mxu0 0
      %1010 = vmatmul.mubr.bf16.gmra.mrb[0].mxu0 %v928
      %v1011 = vpop.f32.mrb[0].mxu0
      %v1012 = vadd.f32 0.0, %v1011
      %v1013 = vpop.f32.mrb[0].mxu0
      %v1014 = vpop.f32.mrb[0].mxu0
      %v1015 = vpop.f32.mrb[0].mxu0
      %1016 = vdwg.mxu0
      %v1017 = vadd.f32 %v750, %v1012
      %s1018 = scalar_lea.vmem %s163, 44
      %v1019 = vld [vmem:[%s1018] sm:$0x3]
      %1020 = vmatprep.subr.bf16.mxu0 0
      %1021 = vmatpush1.bf16.msra.mxu0 %v961
      %1022 = vmatprep.subr.bf16.mxu0 0
      %1023 = vmatpush1.bf16.msra.mxu0 %v962
      %1024 = vmatprep.subr.bf16.mxu0 0
      %1025 = vmatpush1.bf16.msra.mxu0 %v963
      %1026 = vmatprep.subr.bf16.mxu0 0
      %1027 = vmatpush1.bf16.msra.mxu0 %v964
      %1028 = vmatprep.subr.bf16.mxu0 0
      %1029 = vmatpush1.bf16.msra.mxu0 %v965
      %1030 = vmatprep.subr.bf16.mxu0 0
      %1031 = vmatpush1.bf16.msra.mxu0 %v966
      %1032 = vmatprep.subr.bf16.mxu0 0
      %1033 = vmatpush1.bf16.msra.mxu0 %v967
      %1034 = vmatprep.subr.bf16.mxu0 0
      %1035 = vmatpush1.bf16.msra.mxu0 %v968
      %1036 = vmatprep.subr.bf16.mxu0 0
      %1037 = vmatpush1.bf16.msra.mxu0 0
      %1038 = vmatprep.subr.bf16.mxu0 0
      %1039 = vmatpush1.bf16.msra.mxu0 0
      %1040 = vmatprep.subr.bf16.mxu0 0
      %1041 = vmatpush1.bf16.msra.mxu0 0
      %1042 = vmatprep.subr.bf16.mxu0 0
      %1043 = vmatpush1.bf16.msra.mxu0 0
      %1044 = vmatprep.subr.bf16.mxu0 0
      %1045 = vmatpush1.bf16.msra.mxu0 0
      %1046 = vmatprep.subr.bf16.mxu0 0
      %1047 = vmatpush1.bf16.msra.mxu0 0
      %1048 = vmatprep.subr.bf16.mxu0 0
      %1049 = vmatpush1.bf16.msra.mxu0 0
      %1050 = vmatprep.subr.bf16.mxu0 0
      %1051 = vmatpush1.bf16.msra.mxu0 0
      %1052 = vmatprep.mubr.bf16.mxu0 0
      %1053 = vmatmul.mubr.bf16.gmra.mrb[0].mxu0 %v1019
      %v1054 = vpop.f32.mrb[0].mxu0
      %v1055 = vadd.f32 0.0, %v1054
      %v1056 = vpop.f32.mrb[0].mxu0
      %v1057 = vpop.f32.mrb[0].mxu0
      %v1058 = vpop.f32.mrb[0].mxu0
      %1059 = vdwg.mxu0
      %v1060 = vadd.f32 %v803, %v1055
      %s1061 = scalar_lea.vmem %s163, 48
      %v1062 = vld [vmem:[%s1061] sm:$0x3]
      %1063 = vmatprep.subr.bf16.mxu0 0
      %1064 = vmatpush1.bf16.msra.mxu0 %v961
      %1065 = vmatprep.subr.bf16.mxu0 0
      %1066 = vmatpush1.bf16.msra.mxu0 %v962
      %1067 = vmatprep.subr.bf16.mxu0 0
      %1068 = vmatpush1.bf16.msra.mxu0 %v963
      %1069 = vmatprep.subr.bf16.mxu0 0
      %1070 = vmatpush1.bf16.msra.mxu0 %v964
      %1071 = vmatprep.subr.bf16.mxu0 0
      %1072 = vmatpush1.bf16.msra.mxu0 %v965
      %1073 = vmatprep.subr.bf16.mxu0 0
      %1074 = vmatpush1.bf16.msra.mxu0 %v966
      %1075 = vmatprep.subr.bf16.mxu0 0
      %1076 = vmatpush1.bf16.msra.mxu0 %v967
      %1077 = vmatprep.subr.bf16.mxu0 0
      %1078 = vmatpush1.bf16.msra.mxu0 %v968
      %1079 = vmatprep.subr.bf16.mxu0 0
      %1080 = vmatpush1.bf16.msra.mxu0 0
      %1081 = vmatprep.subr.bf16.mxu0 0
      %1082 = vmatpush1.bf16.msra.mxu0 0
      %1083 = vmatprep.subr.bf16.mxu0 0
      %1084 = vmatpush1.bf16.msra.mxu0 0
      %1085 = vmatprep.subr.bf16.mxu0 0
      %1086 = vmatpush1.bf16.msra.mxu0 0
      %1087 = vmatprep.subr.bf16.mxu0 0
      %1088 = vmatpush1.bf16.msra.mxu0 0
      %1089 = vmatprep.subr.bf16.mxu0 0
      %1090 = vmatpush1.bf16.msra.mxu0 0
      %1091 = vmatprep.subr.bf16.mxu0 0
      %1092 = vmatpush1.bf16.msra.mxu0 0
      %1093 = vmatprep.subr.bf16.mxu0 0
      %1094 = vmatpush1.bf16.msra.mxu0 0
      %1095 = vmatprep.mubr.bf16.mxu0 0
      %1096 = vmatmul.mubr.bf16.gmra.mrb[0].mxu0 %v1062
      %v1097 = vpop.f32.mrb[0].mxu0
      %v1098 = vadd.f32 0.0, %v1097
      %v1099 = vpop.f32.mrb[0].mxu0
      %v1100 = vpop.f32.mrb[0].mxu0
      %v1101 = vpop.f32.mrb[0].mxu0
      %1102 = vdwg.mxu0
      %v1103 = vadd.f32 %v856, %v1098
      %s1104 = scalar_lea.vmem %s163, 52
      %v1105 = vld [vmem:[%s1104] sm:$0x3]
      %1106 = vmatprep.subr.bf16.mxu0 0
      %1107 = vmatpush1.bf16.msra.mxu0 %v961
      %1108 = vmatprep.subr.bf16.mxu0 0
      %1109 = vmatpush1.bf16.msra.mxu0 %v962
      %1110 = vmatprep.subr.bf16.mxu0 0
      %1111 = vmatpush1.bf16.msra.mxu0 %v963
      %1112 = vmatprep.subr.bf16.mxu0 0
      %1113 = vmatpush1.bf16.msra.mxu0 %v964
      %1114 = vmatprep.subr.bf16.mxu0 0
      %1115 = vmatpush1.bf16.msra.mxu0 %v965
      %1116 = vmatprep.subr.bf16.mxu0 0
      %1117 = vmatpush1.bf16.msra.mxu0 %v966
      %1118 = vmatprep.subr.bf16.mxu0 0
      %1119 = vmatpush1.bf16.msra.mxu0 %v967
      %1120 = vmatprep.subr.bf16.mxu0 0
      %1121 = vmatpush1.bf16.msra.mxu0 %v968
      %1122 = vmatprep.subr.bf16.mxu0 0
      %1123 = vmatpush1.bf16.msra.mxu0 0
      %1124 = vmatprep.subr.bf16.mxu0 0
      %1125 = vmatpush1.bf16.msra.mxu0 0
      %1126 = vmatprep.subr.bf16.mxu0 0
      %1127 = vmatpush1.bf16.msra.mxu0 0
      %1128 = vmatprep.subr.bf16.mxu0 0
      %1129 = vmatpush1.bf16.msra.mxu0 0
      %1130 = vmatprep.subr.bf16.mxu0 0
      %1131 = vmatpush1.bf16.msra.mxu0 0
      %1132 = vmatprep.subr.bf16.mxu0 0
      %1133 = vmatpush1.bf16.msra.mxu0 0
      %1134 = vmatprep.subr.bf16.mxu0 0
      %1135 = vmatpush1.bf16.msra.mxu0 0
      %1136 = vmatprep.subr.bf16.mxu0 0
      %1137 = vmatpush1.bf16.msra.mxu0 0
      %1138 = vmatprep.mubr.bf16.mxu0 0
      %1139 = vmatmul.mubr.bf16.gmra.mrb[0].mxu0 %v1105
      %v1140 = vpop.f32.mrb[0].mxu0
      %v1141 = vadd.f32 0.0, %v1140
      %v1142 = vpop.f32.mrb[0].mxu0
      %v1143 = vpop.f32.mrb[0].mxu0
      %v1144 = vpop.f32.mrb[0].mxu0
      %1145 = vdwg.mxu0
      %v1146 = vadd.f32 %v909, %v1141
      %s1147 = scalar_lea.vmem %s1, 256
      %v1148 = vld [vmem:[%s1147] sm:$0xf]
      %v1149 = vld [vmem:[%s1147 + $0x4] sm:$0xf]
      %v1150 = vld [vmem:[%s1147 + $0x8] sm:$0xf]
      %v1151 = vld [vmem:[%s1147 + $0xc] sm:$0xf]
      %v1152 = vld [vmem:[%s1147 + $0x10] sm:$0xf]
      %v1153 = vld [vmem:[%s1147 + $0x14] sm:$0xf]
      %v1154 = vld [vmem:[%s1147 + $0x18] sm:$0xf]
      %v1155 = vld [vmem:[%s1147 + $0x1c] sm:$0xf]
      %v1156 = vld [vmem:[%s1147 + $0x20] sm:$0xf]
      %v1157 = vld [vmem:[%s1147 + $0x24] sm:$0xf]
      %v1158 = vld [vmem:[%s1147 + $0x28] sm:$0xf]
      %v1159 = vld [vmem:[%s1147 + $0x2c] sm:$0xf]
      %v1160 = vld [vmem:[%s1147 + $0x30] sm:$0xf]
      %v1161 = vld [vmem:[%s1147 + $0x34] sm:$0xf]
      %v1162 = vld [vmem:[%s1147 + $0x38] sm:$0xf]
      %v1163 = vld [vmem:[%s1147 + $0x3c] sm:$0xf]
      %s1164 = scalar_lea.vmem %s163, 60
      %v1165 = vld [vmem:[%s1164] sm:$0x3]
      %v1182 = vunpack.c.l.b16 %v1148
      %v1183 = vunpack.c.l.b16 %v1149
      %v1184 = vunpack.c.l.b16 %v1150
      %v1185 = vunpack.c.l.b16 %v1151
      %v1186 = vunpack.c.l.b16 %v1152
      %v1187 = vunpack.c.l.b16 %v1153
      %v1188 = vunpack.c.l.b16 %v1154
      %v1189 = vunpack.c.l.b16 %v1155
      %v1190 = vunpack.c.l.b16 %v1156
      %v1191 = vunpack.c.l.b16 %v1157
      %v1192 = vunpack.c.l.b16 %v1158
      %v1193 = vunpack.c.l.b16 %v1159
      %v1194 = vunpack.c.l.b16 %v1160
      %v1195 = vunpack.c.l.b16 %v1161
      %v1196 = vunpack.c.l.b16 %v1162
      %v1197 = vunpack.c.l.b16 %v1163
      %v1198 = vpack.c.b16 %v1183, %v1182
      %v1199 = vpack.c.b16 %v1185, %v1184
      %v1200 = vpack.c.b16 %v1187, %v1186
      %v1201 = vpack.c.b16 %v1189, %v1188
      %v1202 = vpack.c.b16 %v1191, %v1190
      %v1203 = vpack.c.b16 %v1193, %v1192
      %v1204 = vpack.c.b16 %v1195, %v1194
      %v1205 = vpack.c.b16 %v1197, %v1196
      %1214 = vmatprep.subr.bf16.mxu0 0
      %1215 = vmatpush1.bf16.msra.mxu0 %v1198
      %1216 = vmatprep.subr.bf16.mxu0 0
      %1217 = vmatpush1.bf16.msra.mxu0 %v1199
      %1218 = vmatprep.subr.bf16.mxu0 0
      %1219 = vmatpush1.bf16.msra.mxu0 %v1200
      %1220 = vmatprep.subr.bf16.mxu0 0
      %1221 = vmatpush1.bf16.msra.mxu0 %v1201
      %1222 = vmatprep.subr.bf16.mxu0 0
      %1223 = vmatpush1.bf16.msra.mxu0 %v1202
      %1224 = vmatprep.subr.bf16.mxu0 0
      %1225 = vmatpush1.bf16.msra.mxu0 %v1203
      %1226 = vmatprep.subr.bf16.mxu0 0
      %1227 = vmatpush1.bf16.msra.mxu0 %v1204
      %1228 = vmatprep.subr.bf16.mxu0 0
      %1229 = vmatpush1.bf16.msra.mxu0 %v1205
      %1230 = vmatprep.subr.bf16.mxu0 0
      %1231 = vmatpush1.bf16.msra.mxu0 0
      %1232 = vmatprep.subr.bf16.mxu0 0
      %1233 = vmatpush1.bf16.msra.mxu0 0
      %1234 = vmatprep.subr.bf16.mxu0 0
      %1235 = vmatpush1.bf16.msra.mxu0 0
      %1236 = vmatprep.subr.bf16.mxu0 0
      %1237 = vmatpush1.bf16.msra.mxu0 0
      %1238 = vmatprep.subr.bf16.mxu0 0
      %1239 = vmatpush1.bf16.msra.mxu0 0
      %1240 = vmatprep.subr.bf16.mxu0 0
      %1241 = vmatpush1.bf16.msra.mxu0 0
      %1242 = vmatprep.subr.bf16.mxu0 0
      %1243 = vmatpush1.bf16.msra.mxu0 0
      %1244 = vmatprep.subr.bf16.mxu0 0
      %1245 = vmatpush1.bf16.msra.mxu0 0
      %1246 = vmatprep.mubr.bf16.mxu0 0
      %1247 = vmatmul.mubr.bf16.gmra.mrb[0].mxu0 %v1165
      %v1248 = vpop.f32.mrb[0].mxu0
      %v1249 = vadd.f32 0.0, %v1248
      %v1250 = vpop.f32.mrb[0].mxu0
      %v1251 = vpop.f32.mrb[0].mxu0
      %v1252 = vpop.f32.mrb[0].mxu0
      %1253 = vdwg.mxu0
      %v1254 = vadd.f32 %v1017, %v1249
      %s1255 = scalar_lea.vmem %s163, 64
      %v1256 = vld [vmem:[%s1255] sm:$0x3]
      %1257 = vmatprep.subr.bf16.mxu0 0
      %1258 = vmatpush1.bf16.msra.mxu0 %v1198
      %1259 = vmatprep.subr.bf16.mxu0 0
      %1260 = vmatpush1.bf16.msra.mxu0 %v1199
      %1261 = vmatprep.subr.bf16.mxu0 0
      %1262 = vmatpush1.bf16.msra.mxu0 %v1200
      %1263 = vmatprep.subr.bf16.mxu0 0
      %1264 = vmatpush1.bf16.msra.mxu0 %v1201
      %1265 = vmatprep.subr.bf16.mxu0 0
      %1266 = vmatpush1.bf16.msra.mxu0 %v1202
      %1267 = vmatprep.subr.bf16.mxu0 0
      %1268 = vmatpush1.bf16.msra.mxu0 %v1203
      %1269 = vmatprep.subr.bf16.mxu0 0
      %1270 = vmatpush1.bf16.msra.mxu0 %v1204
      %1271 = vmatprep.subr.bf16.mxu0 0
      %1272 = vmatpush1.bf16.msra.mxu0 %v1205
      %1273 = vmatprep.subr.bf16.mxu0 0
      %1274 = vmatpush1.bf16.msra.mxu0 0
      %1275 = vmatprep.subr.bf16.mxu0 0
      %1276 = vmatpush1.bf16.msra.mxu0 0
      %1277 = vmatprep.subr.bf16.mxu0 0
      %1278 = vmatpush1.bf16.msra.mxu0 0
      %1279 = vmatprep.subr.bf16.mxu0 0
      %1280 = vmatpush1.bf16.msra.mxu0 0
      %1281 = vmatprep.subr.bf16.mxu0 0
      %1282 = vmatpush1.bf16.msra.mxu0 0
      %1283 = vmatprep.subr.bf16.mxu0 0
      %1284 = vmatpush1.bf16.msra.mxu0 0
      %1285 = vmatprep.subr.bf16.mxu0 0
      %1286 = vmatpush1.bf16.msra.mxu0 0
      %1287 = vmatprep.subr.bf16.mxu0 0
      %1288 = vmatpush1.bf16.msra.mxu0 0
      %1289 = vmatprep.mubr.bf16.mxu0 0
      %1290 = vmatmul.mubr.bf16.gmra.mrb[0].mxu0 %v1256
      %v1291 = vpop.f32.mrb[0].mxu0
      %v1292 = vadd.f32 0.0, %v1291
      %v1293 = vpop.f32.mrb[0].mxu0
      %v1294 = vpop.f32.mrb[0].mxu0
      %v1295 = vpop.f32.mrb[0].mxu0
      %1296 = vdwg.mxu0
      %v1297 = vadd.f32 %v1060, %v1292
      %s1298 = scalar_lea.vmem %s163, 68
      %v1299 = vld [vmem:[%s1298] sm:$0x3]
      %1300 = vmatprep.subr.bf16.mxu0 0
      %1301 = vmatpush1.bf16.msra.mxu0 %v1198
      %1302 = vmatprep.subr.bf16.mxu0 0
      %1303 = vmatpush1.bf16.msra.mxu0 %v1199
      %1304 = vmatprep.subr.bf16.mxu0 0
      %1305 = vmatpush1.bf16.msra.mxu0 %v1200
      %1306 = vmatprep.subr.bf16.mxu0 0
      %1307 = vmatpush1.bf16.msra.mxu0 %v1201
      %1308 = vmatprep.subr.bf16.mxu0 0
      %1309 = vmatpush1.bf16.msra.mxu0 %v1202
      %1310 = vmatprep.subr.bf16.mxu0 0
      %1311 = vmatpush1.bf16.msra.mxu0 %v1203
      %1312 = vmatprep.subr.bf16.mxu0 0
      %1313 = vmatpush1.bf16.msra.mxu0 %v1204
      %1314 = vmatprep.subr.bf16.mxu0 0
      %1315 = vmatpush1.bf16.msra.mxu0 %v1205
      %1316 = vmatprep.subr.bf16.mxu0 0
      %1317 = vmatpush1.bf16.msra.mxu0 0
      %1318 = vmatprep.subr.bf16.mxu0 0
      %1319 = vmatpush1.bf16.msra.mxu0 0
      %1320 = vmatprep.subr.bf16.mxu0 0
      %1321 = vmatpush1.bf16.msra.mxu0 0
      %1322 = vmatprep.subr.bf16.mxu0 0
      %1323 = vmatpush1.bf16.msra.mxu0 0
      %1324 = vmatprep.subr.bf16.mxu0 0
      %1325 = vmatpush1.bf16.msra.mxu0 0
      %1326 = vmatprep.subr.bf16.mxu0 0
      %1327 = vmatpush1.bf16.msra.mxu0 0
      %1328 = vmatprep.subr.bf16.mxu0 0
      %1329 = vmatpush1.bf16.msra.mxu0 0
      %1330 = vmatprep.subr.bf16.mxu0 0
      %1331 = vmatpush1.bf16.msra.mxu0 0
      %1332 = vmatprep.mubr.bf16.mxu0 0
      %1333 = vmatmul.mubr.bf16.gmra.mrb[0].mxu0 %v1299
      %v1334 = vpop.f32.mrb[0].mxu0
      %v1335 = vadd.f32 0.0, %v1334
      %v1336 = vpop.f32.mrb[0].mxu0
      %v1337 = vpop.f32.mrb[0].mxu0
      %v1338 = vpop.f32.mrb[0].mxu0
      %1339 = vdwg.mxu0
      %v1340 = vadd.f32 %v1103, %v1335
      %s1341 = scalar_lea.vmem %s163, 72
      %v1342 = vld [vmem:[%s1341] sm:$0x3]
      %1343 = vmatprep.subr.bf16.mxu0 0
      %1344 = vmatpush1.bf16.msra.mxu0 %v1198
      %1345 = vmatprep.subr.bf16.mxu0 0
      %1346 = vmatpush1.bf16.msra.mxu0 %v1199
      %1347 = vmatprep.subr.bf16.mxu0 0
      %1348 = vmatpush1.bf16.msra.mxu0 %v1200
      %1349 = vmatprep.subr.bf16.mxu0 0
      %1350 = vmatpush1.bf16.msra.mxu0 %v1201
      %1351 = vmatprep.subr.bf16.mxu0 0
      %1352 = vmatpush1.bf16.msra.mxu0 %v1202
      %1353 = vmatprep.subr.bf16.mxu0 0
      %1354 = vmatpush1.bf16.msra.mxu0 %v1203
      %1355 = vmatprep.subr.bf16.mxu0 0
      %1356 = vmatpush1.bf16.msra.mxu0 %v1204
      %1357 = vmatprep.subr.bf16.mxu0 0
      %1358 = vmatpush1.bf16.msra.mxu0 %v1205
      %1359 = vmatprep.subr.bf16.mxu0 0
      %1360 = vmatpush1.bf16.msra.mxu0 0
      %1361 = vmatprep.subr.bf16.mxu0 0
      %1362 = vmatpush1.bf16.msra.mxu0 0
      %1363 = vmatprep.subr.bf16.mxu0 0
      %1364 = vmatpush1.bf16.msra.mxu0 0
      %1365 = vmatprep.subr.bf16.mxu0 0
      %1366 = vmatpush1.bf16.msra.mxu0 0
      %1367 = vmatprep.subr.bf16.mxu0 0
      %1368 = vmatpush1.bf16.msra.mxu0 0
      %1369 = vmatprep.subr.bf16.mxu0 0
      %1370 = vmatpush1.bf16.msra.mxu0 0
      %1371 = vmatprep.subr.bf16.mxu0 0
      %1372 = vmatpush1.bf16.msra.mxu0 0
      %1373 = vmatprep.subr.bf16.mxu0 0
      %1374 = vmatpush1.bf16.msra.mxu0 0
      %1375 = vmatprep.mubr.bf16.mxu0 0
      %1376 = vmatmul.mubr.bf16.gmra.mrb[0].mxu0 %v1342
      %v1377 = vpop.f32.mrb[0].mxu0
      %v1378 = vadd.f32 0.0, %v1377
      %v1379 = vpop.f32.mrb[0].mxu0
      %v1380 = vpop.f32.mrb[0].mxu0
      %v1381 = vpop.f32.mrb[0].mxu0
      %1382 = vdwg.mxu0
      %v1383 = vadd.f32 %v1146, %v1378
      %s1384 = scalar_lea.vmem %s1, 320
      %v1385 = vld [vmem:[%s1384] sm:$0xf]
      %v1386 = vld [vmem:[%s1384 + $0x4] sm:$0xf]
      %v1387 = vld [vmem:[%s1384 + $0x8] sm:$0xf]
      %v1388 = vld [vmem:[%s1384 + $0xc] sm:$0xf]
      %v1389 = vld [vmem:[%s1384 + $0x10] sm:$0xf]
      %v1390 = vld [vmem:[%s1384 + $0x14] sm:$0xf]
      %v1391 = vld [vmem:[%s1384 + $0x18] sm:$0xf]
      %v1392 = vld [vmem:[%s1384 + $0x1c] sm:$0xf]
      %v1393 = vld [vmem:[%s1384 + $0x20] sm:$0xf]
      %v1394 = vld [vmem:[%s1384 + $0x24] sm:$0xf]
      %v1395 = vld [vmem:[%s1384 + $0x28] sm:$0xf]
      %v1396 = vld [vmem:[%s1384 + $0x2c] sm:$0xf]
      %v1397 = vld [vmem:[%s1384 + $0x30] sm:$0xf]
      %v1398 = vld [vmem:[%s1384 + $0x34] sm:$0xf]
      %v1399 = vld [vmem:[%s1384 + $0x38] sm:$0xf]
      %v1400 = vld [vmem:[%s1384 + $0x3c] sm:$0xf]
      %v1401 = vld [vmem:[%s927] sm:$0x7]
      %v1403 = vunpack.c.l.b16 %v1401
      %v1404 = vpack.c.b16 %v1403, %v1403
      %v1406 = vshrl.u32 %v1404, 16
      %v1408 = vshll.u32 %v1404, 16
      %v1410 = vrot.slane %v1408, 1
      %v1411 = vor.u32 %v1406, %v1410
      %v1429 = vunpack.c.l.b16 %v1385
      %v1430 = vunpack.c.l.b16 %v1386
      %v1431 = vunpack.c.l.b16 %v1387
      %v1432 = vunpack.c.l.b16 %v1388
      %v1433 = vunpack.c.l.b16 %v1389
      %v1434 = vunpack.c.l.b16 %v1390
      %v1435 = vunpack.c.l.b16 %v1391
      %v1436 = vunpack.c.l.b16 %v1392
      %v1437 = vunpack.c.l.b16 %v1393
      %v1438 = vunpack.c.l.b16 %v1394
      %v1439 = vunpack.c.l.b16 %v1395
      %v1440 = vunpack.c.l.b16 %v1396
      %v1441 = vunpack.c.l.b16 %v1397
      %v1442 = vunpack.c.l.b16 %v1398
      %v1443 = vunpack.c.l.b16 %v1399
      %v1444 = vunpack.c.l.b16 %v1400
      %v1445 = vpack.c.b16 %v1430, %v1429
      %v1446 = vpack.c.b16 %v1432, %v1431
      %v1447 = vpack.c.b16 %v1434, %v1433
      %v1448 = vpack.c.b16 %v1436, %v1435
      %v1449 = vpack.c.b16 %v1438, %v1437
      %v1450 = vpack.c.b16 %v1440, %v1439
      %v1451 = vpack.c.b16 %v1442, %v1441
      %v1452 = vpack.c.b16 %v1444, %v1443
      %1461 = vmatprep.subr.bf16.mxu0 0
      %1462 = vmatpush1.bf16.msra.mxu0 %v1445
      %1463 = vmatprep.subr.bf16.mxu0 0
      %1464 = vmatpush1.bf16.msra.mxu0 %v1446
      %1465 = vmatprep.subr.bf16.mxu0 0
      %1466 = vmatpush1.bf16.msra.mxu0 %v1447
      %1467 = vmatprep.subr.bf16.mxu0 0
      %1468 = vmatpush1.bf16.msra.mxu0 %v1448
      %1469 = vmatprep.subr.bf16.mxu0 0
      %1470 = vmatpush1.bf16.msra.mxu0 %v1449
      %1471 = vmatprep.subr.bf16.mxu0 0
      %1472 = vmatpush1.bf16.msra.mxu0 %v1450
      %1473 = vmatprep.subr.bf16.mxu0 0
      %1474 = vmatpush1.bf16.msra.mxu0 %v1451
      %1475 = vmatprep.subr.bf16.mxu0 0
      %1476 = vmatpush1.bf16.msra.mxu0 %v1452
      %1477 = vmatprep.subr.bf16.mxu0 0
      %1478 = vmatpush1.bf16.msra.mxu0 0
      %1479 = vmatprep.subr.bf16.mxu0 0
      %1480 = vmatpush1.bf16.msra.mxu0 0
      %1481 = vmatprep.subr.bf16.mxu0 0
      %1482 = vmatpush1.bf16.msra.mxu0 0
      %1483 = vmatprep.subr.bf16.mxu0 0
      %1484 = vmatpush1.bf16.msra.mxu0 0
      %1485 = vmatprep.subr.bf16.mxu0 0
      %1486 = vmatpush1.bf16.msra.mxu0 0
      %1487 = vmatprep.subr.bf16.mxu0 0
      %1488 = vmatpush1.bf16.msra.mxu0 0
      %1489 = vmatprep.subr.bf16.mxu0 0
      %1490 = vmatpush1.bf16.msra.mxu0 0
      %1491 = vmatprep.subr.bf16.mxu0 0
      %1492 = vmatpush1.bf16.msra.mxu0 0
      %1493 = vmatprep.mubr.bf16.mxu0 0
      %1494 = vmatmul.mubr.bf16.gmra.mrb[0].mxu0 %v1411
      %v1495 = vpop.f32.mrb[0].mxu0
      %v1496 = vadd.f32 0.0, %v1495
      %v1497 = vpop.f32.mrb[0].mxu0
      %v1498 = vpop.f32.mrb[0].mxu0
      %v1499 = vpop.f32.mrb[0].mxu0
      %1500 = vdwg.mxu0
      %v1501 = vadd.f32 %v1254, %v1496
      %v1502 = vld [vmem:[%s1018] sm:$0x7]
      %v1504 = vunpack.c.l.b16 %v1502
      %v1505 = vpack.c.b16 %v1504, %v1504
      %v1507 = vshrl.u32 %v1505, 16
      %v1509 = vshll.u32 %v1505, 16
      %v1511 = vrot.slane %v1509, 1
      %v1512 = vor.u32 %v1507, %v1511
      %1514 = vmatprep.subr.bf16.mxu0 0
      %1515 = vmatpush1.bf16.msra.mxu0 %v1445
      %1516 = vmatprep.subr.bf16.mxu0 0
      %1517 = vmatpush1.bf16.msra.mxu0 %v1446
      %1518 = vmatprep.subr.bf16.mxu0 0
      %1519 = vmatpush1.bf16.msra.mxu0 %v1447
      %1520 = vmatprep.subr.bf16.mxu0 0
      %1521 = vmatpush1.bf16.msra.mxu0 %v1448
      %1522 = vmatprep.subr.bf16.mxu0 0
      %1523 = vmatpush1.bf16.msra.mxu0 %v1449
      %1524 = vmatprep.subr.bf16.mxu0 0
      %1525 = vmatpush1.bf16.msra.mxu0 %v1450
      %1526 = vmatprep.subr.bf16.mxu0 0
      %1527 = vmatpush1.bf16.msra.mxu0 %v1451
      %1528 = vmatprep.subr.bf16.mxu0 0
      %1529 = vmatpush1.bf16.msra.mxu0 %v1452
      %1530 = vmatprep.subr.bf16.mxu0 0
      %1531 = vmatpush1.bf16.msra.mxu0 0
      %1532 = vmatprep.subr.bf16.mxu0 0
      %1533 = vmatpush1.bf16.msra.mxu0 0
      %1534 = vmatprep.subr.bf16.mxu0 0
      %1535 = vmatpush1.bf16.msra.mxu0 0
      %1536 = vmatprep.subr.bf16.mxu0 0
      %1537 = vmatpush1.bf16.msra.mxu0 0
      %1538 = vmatprep.subr.bf16.mxu0 0
      %1539 = vmatpush1.bf16.msra.mxu0 0
      %1540 = vmatprep.subr.bf16.mxu0 0
      %1541 = vmatpush1.bf16.msra.mxu0 0
      %1542 = vmatprep.subr.bf16.mxu0 0
      %1543 = vmatpush1.bf16.msra.mxu0 0
      %1544 = vmatprep.subr.bf16.mxu0 0
      %1545 = vmatpush1.bf16.msra.mxu0 0
      %1546 = vmatprep.mubr.bf16.mxu0 0
      %1547 = vmatmul.mubr.bf16.gmra.mrb[0].mxu0 %v1512
      %v1548 = vpop.f32.mrb[0].mxu0
      %v1549 = vadd.f32 0.0, %v1548
      %v1550 = vpop.f32.mrb[0].mxu0
      %v1551 = vpop.f32.mrb[0].mxu0
      %v1552 = vpop.f32.mrb[0].mxu0
      %1553 = vdwg.mxu0
      %v1554 = vadd.f32 %v1297, %v1549
      %v1555 = vld [vmem:[%s1061] sm:$0x7]
      %v1557 = vunpack.c.l.b16 %v1555
      %v1558 = vpack.c.b16 %v1557, %v1557
      %v1560 = vshrl.u32 %v1558, 16
      %v1562 = vshll.u32 %v1558, 16
      %v1564 = vrot.slane %v1562, 1
      %v1565 = vor.u32 %v1560, %v1564
      %1567 = vmatprep.subr.bf16.mxu0 0
      %1568 = vmatpush1.bf16.msra.mxu0 %v1445
      %1569 = vmatprep.subr.bf16.mxu0 0
      %1570 = vmatpush1.bf16.msra.mxu0 %v1446
      %1571 = vmatprep.subr.bf16.mxu0 0
      %1572 = vmatpush1.bf16.msra.mxu0 %v1447
      %1573 = vmatprep.subr.bf16.mxu0 0
      %1574 = vmatpush1.bf16.msra.mxu0 %v1448
      %1575 = vmatprep.subr.bf16.mxu0 0
      %1576 = vmatpush1.bf16.msra.mxu0 %v1449
      %1577 = vmatprep.subr.bf16.mxu0 0
      %1578 = vmatpush1.bf16.msra.mxu0 %v1450
      %1579 = vmatprep.subr.bf16.mxu0 0
      %1580 = vmatpush1.bf16.msra.mxu0 %v1451
      %1581 = vmatprep.subr.bf16.mxu0 0
      %1582 = vmatpush1.bf16.msra.mxu0 %v1452
      %1583 = vmatprep.subr.bf16.mxu0 0
      %1584 = vmatpush1.bf16.msra.mxu0 0
      %1585 = vmatprep.subr.bf16.mxu0 0
      %1586 = vmatpush1.bf16.msra.mxu0 0
      %1587 = vmatprep.subr.bf16.mxu0 0
      %1588 = vmatpush1.bf16.msra.mxu0 0
      %1589 = vmatprep.subr.bf16.mxu0 0
      %1590 = vmatpush1.bf16.msra.mxu0 0
      %1591 = vmatprep.subr.bf16.mxu0 0
      %1592 = vmatpush1.bf16.msra.mxu0 0
      %1593 = vmatprep.subr.bf16.mxu0 0
      %1594 = vmatpush1.bf16.msra.mxu0 0
      %1595 = vmatprep.subr.bf16.mxu0 0
      %1596 = vmatpush1.bf16.msra.mxu0 0
      %1597 = vmatprep.subr.bf16.mxu0 0
      %1598 = vmatpush1.bf16.msra.mxu0 0
      %1599 = vmatprep.mubr.bf16.mxu0 0
      %1600 = vmatmul.mubr.bf16.gmra.mrb[0].mxu0 %v1565
      %v1601 = vpop.f32.mrb[0].mxu0
      %v1602 = vadd.f32 0.0, %v1601
      %v1603 = vpop.f32.mrb[0].mxu0
      %v1604 = vpop.f32.mrb[0].mxu0
      %v1605 = vpop.f32.mrb[0].mxu0
      %1606 = vdwg.mxu0
      %v1607 = vadd.f32 %v1340, %v1602
      %v1608 = vld [vmem:[%s1104] sm:$0x7]
      %v1610 = vunpack.c.l.b16 %v1608
      %v1611 = vpack.c.b16 %v1610, %v1610
      %v1613 = vshrl.u32 %v1611, 16
      %v1615 = vshll.u32 %v1611, 16
      %v1617 = vrot.slane %v1615, 1
      %v1618 = vor.u32 %v1613, %v1617
      %1620 = vmatprep.subr.bf16.mxu0 0
      %1621 = vmatpush1.bf16.msra.mxu0 %v1445
      %1622 = vmatprep.subr.bf16.mxu0 0
      %1623 = vmatpush1.bf16.msra.mxu0 %v1446
      %1624 = vmatprep.subr.bf16.mxu0 0
      %1625 = vmatpush1.bf16.msra.mxu0 %v1447
      %1626 = vmatprep.subr.bf16.mxu0 0
      %1627 = vmatpush1.bf16.msra.mxu0 %v1448
      %1628 = vmatprep.subr.bf16.mxu0 0
      %1629 = vmatpush1.bf16.msra.mxu0 %v1449
      %1630 = vmatprep.subr.bf16.mxu0 0
      %1631 = vmatpush1.bf16.msra.mxu0 %v1450
      %1632 = vmatprep.subr.bf16.mxu0 0
      %1633 = vmatpush1.bf16.msra.mxu0 %v1451
      %1634 = vmatprep.subr.bf16.mxu0 0
      %1635 = vmatpush1.bf16.msra.mxu0 %v1452
      %1636 = vmatprep.subr.bf16.mxu0 0
      %1637 = vmatpush1.bf16.msra.mxu0 0
      %1638 = vmatprep.subr.bf16.mxu0 0
      %1639 = vmatpush1.bf16.msra.mxu0 0
      %1640 = vmatprep.subr.bf16.mxu0 0
      %1641 = vmatpush1.bf16.msra.mxu0 0
      %1642 = vmatprep.subr.bf16.mxu0 0
      %1643 = vmatpush1.bf16.msra.mxu0 0
      %1644 = vmatprep.subr.bf16.mxu0 0
      %1645 = vmatpush1.bf16.msra.mxu0 0
      %1646 = vmatprep.subr.bf16.mxu0 0
      %1647 = vmatpush1.bf16.msra.mxu0 0
      %1648 = vmatprep.subr.bf16.mxu0 0
      %1649 = vmatpush1.bf16.msra.mxu0 0
      %1650 = vmatprep.subr.bf16.mxu0 0
      %1651 = vmatpush1.bf16.msra.mxu0 0
      %1652 = vmatprep.mubr.bf16.mxu0 0
      %1653 = vmatmul.mubr.bf16.gmra.mrb[0].mxu0 %v1618
      %v1654 = vpop.f32.mrb[0].mxu0
      %v1655 = vadd.f32 0.0, %v1654
      %v1656 = vpop.f32.mrb[0].mxu0
      %v1657 = vpop.f32.mrb[0].mxu0
      %v1658 = vpop.f32.mrb[0].mxu0
      %1659 = vdwg.mxu0
      %v1660 = vadd.f32 %v1383, %v1655
      %s1661 = scalar_lea.vmem %s1, 384
      %v1662 = vld [vmem:[%s1661] sm:$0xf]
      %v1663 = vld [vmem:[%s1661 + $0x4] sm:$0xf]
      %v1664 = vld [vmem:[%s1661 + $0x8] sm:$0xf]
      %v1665 = vld [vmem:[%s1661 + $0xc] sm:$0xf]
      %v1666 = vld [vmem:[%s1661 + $0x10] sm:$0xf]
      %v1667 = vld [vmem:[%s1661 + $0x14] sm:$0xf]
      %v1668 = vld [vmem:[%s1661 + $0x18] sm:$0xf]
      %v1669 = vld [vmem:[%s1661 + $0x1c] sm:$0xf]
      %v1670 = vld [vmem:[%s1661 + $0x20] sm:$0xf]
      %v1671 = vld [vmem:[%s1661 + $0x24] sm:$0xf]
      %v1672 = vld [vmem:[%s1661 + $0x28] sm:$0xf]
      %v1673 = vld [vmem:[%s1661 + $0x2c] sm:$0xf]
      %v1674 = vld [vmem:[%s1661 + $0x30] sm:$0xf]
      %v1675 = vld [vmem:[%s1661 + $0x34] sm:$0xf]
      %v1676 = vld [vmem:[%s1661 + $0x38] sm:$0xf]
      %v1677 = vld [vmem:[%s1661 + $0x3c] sm:$0xf]
      %v1694 = vunpack.c.l.b16 %v1662
      %v1695 = vunpack.c.l.b16 %v1663
      %v1696 = vunpack.c.l.b16 %v1664
      %v1697 = vunpack.c.l.b16 %v1665
      %v1698 = vunpack.c.l.b16 %v1666
      %v1699 = vunpack.c.l.b16 %v1667
      %v1700 = vunpack.c.l.b16 %v1668
      %v1701 = vunpack.c.l.b16 %v1669
      %v1702 = vunpack.c.l.b16 %v1670
      %v1703 = vunpack.c.l.b16 %v1671
      %v1704 = vunpack.c.l.b16 %v1672
      %v1705 = vunpack.c.l.b16 %v1673
      %v1706 = vunpack.c.l.b16 %v1674
      %v1707 = vunpack.c.l.b16 %v1675
      %v1708 = vunpack.c.l.b16 %v1676
      %v1709 = vunpack.c.l.b16 %v1677
      %v1710 = vpack.c.b16 %v1695, %v1694
      %v1711 = vpack.c.b16 %v1697, %v1696
      %v1712 = vpack.c.b16 %v1699, %v1698
      %v1713 = vpack.c.b16 %v1701, %v1700
      %v1714 = vpack.c.b16 %v1703, %v1702
      %v1715 = vpack.c.b16 %v1705, %v1704
      %v1716 = vpack.c.b16 %v1707, %v1706
      %v1717 = vpack.c.b16 %v1709, %v1708
      %1726 = vmatprep.subr.bf16.mxu0 0
      %1727 = vmatpush1.bf16.msra.mxu0 %v1710
      %1728 = vmatprep.subr.bf16.mxu0 0
      %1729 = vmatpush1.bf16.msra.mxu0 %v1711
      %1730 = vmatprep.subr.bf16.mxu0 0
      %1731 = vmatpush1.bf16.msra.mxu0 %v1712
      %1732 = vmatprep.subr.bf16.mxu0 0
      %1733 = vmatpush1.bf16.msra.mxu0 %v1713
      %1734 = vmatprep.subr.bf16.mxu0 0
      %1735 = vmatpush1.bf16.msra.mxu0 %v1714
      %1736 = vmatprep.subr.bf16.mxu0 0
      %1737 = vmatpush1.bf16.msra.mxu0 %v1715
      %1738 = vmatprep.subr.bf16.mxu0 0
      %1739 = vmatpush1.bf16.msra.mxu0 %v1716
      %1740 = vmatprep.subr.bf16.mxu0 0
      %1741 = vmatpush1.bf16.msra.mxu0 %v1717
      %1742 = vmatprep.subr.bf16.mxu0 0
      %1743 = vmatpush1.bf16.msra.mxu0 0
      %1744 = vmatprep.subr.bf16.mxu0 0
      %1745 = vmatpush1.bf16.msra.mxu0 0
      %1746 = vmatprep.subr.bf16.mxu0 0
      %1747 = vmatpush1.bf16.msra.mxu0 0
      %1748 = vmatprep.subr.bf16.mxu0 0
      %1749 = vmatpush1.bf16.msra.mxu0 0
      %1750 = vmatprep.subr.bf16.mxu0 0
      %1751 = vmatpush1.bf16.msra.mxu0 0
      %1752 = vmatprep.subr.bf16.mxu0 0
      %1753 = vmatpush1.bf16.msra.mxu0 0
      %1754 = vmatprep.subr.bf16.mxu0 0
      %1755 = vmatpush1.bf16.msra.mxu0 0
      %1756 = vmatprep.subr.bf16.mxu0 0
      %1757 = vmatpush1.bf16.msra.mxu0 0
      %1758 = vmatprep.mubr.bf16.mxu0 0
      %1759 = vmatmul.mubr.bf16.gmra.mrb[0].mxu0 %v187
      %v1760 = vpop.f32.mrb[0].mxu0
      %v1761 = vadd.f32 0.0, %v1760
      %v1762 = vpop.f32.mrb[0].mxu0
      %v1763 = vpop.f32.mrb[0].mxu0
      %v1764 = vpop.f32.mrb[0].mxu0
      %1765 = vdwg.mxu0
      %v1766 = vadd.f32 %v1501, %v1761
      %1767 = vmatprep.subr.bf16.mxu0 0
      %1768 = vmatpush1.bf16.msra.mxu0 %v1710
      %1769 = vmatprep.subr.bf16.mxu0 0
      %1770 = vmatpush1.bf16.msra.mxu0 %v1711
      %1771 = vmatprep.subr.bf16.mxu0 0
      %1772 = vmatpush1.bf16.msra.mxu0 %v1712
      %1773 = vmatprep.subr.bf16.mxu0 0
      %1774 = vmatpush1.bf16.msra.mxu0 %v1713
      %1775 = vmatprep.subr.bf16.mxu0 0
      %1776 = vmatpush1.bf16.msra.mxu0 %v1714
      %1777 = vmatprep.subr.bf16.mxu0 0
      %1778 = vmatpush1.bf16.msra.mxu0 %v1715
      %1779 = vmatprep.subr.bf16.mxu0 0
      %1780 = vmatpush1.bf16.msra.mxu0 %v1716
      %1781 = vmatprep.subr.bf16.mxu0 0
      %1782 = vmatpush1.bf16.msra.mxu0 %v1717
      %1783 = vmatprep.subr.bf16.mxu0 0
      %1784 = vmatpush1.bf16.msra.mxu0 0
      %1785 = vmatprep.subr.bf16.mxu0 0
      %1786 = vmatpush1.bf16.msra.mxu0 0
      %1787 = vmatprep.subr.bf16.mxu0 0
      %1788 = vmatpush1.bf16.msra.mxu0 0
      %1789 = vmatprep.subr.bf16.mxu0 0
      %1790 = vmatpush1.bf16.msra.mxu0 0
      %1791 = vmatprep.subr.bf16.mxu0 0
      %1792 = vmatpush1.bf16.msra.mxu0 0
      %1793 = vmatprep.subr.bf16.mxu0 0
      %1794 = vmatpush1.bf16.msra.mxu0 0
      %1795 = vmatprep.subr.bf16.mxu0 0
      %1796 = vmatpush1.bf16.msra.mxu0 0
      %1797 = vmatprep.subr.bf16.mxu0 0
      %1798 = vmatpush1.bf16.msra.mxu0 0
      %1799 = vmatprep.mubr.bf16.mxu0 0
      %1800 = vmatmul.mubr.bf16.gmra.mrb[0].mxu0 %v189
      %v1801 = vpop.f32.mrb[0].mxu0
      %v1802 = vadd.f32 0.0, %v1801
      %v1803 = vpop.f32.mrb[0].mxu0
      %v1804 = vpop.f32.mrb[0].mxu0
      %v1805 = vpop.f32.mrb[0].mxu0
      %1806 = vdwg.mxu0
      %v1807 = vadd.f32 %v1554, %v1802
      %1808 = vmatprep.subr.bf16.mxu0 0
      %1809 = vmatpush1.bf16.msra.mxu0 %v1710
      %1810 = vmatprep.subr.bf16.mxu0 0
      %1811 = vmatpush1.bf16.msra.mxu0 %v1711
      %1812 = vmatprep.subr.bf16.mxu0 0
      %1813 = vmatpush1.bf16.msra.mxu0 %v1712
      %1814 = vmatprep.subr.bf16.mxu0 0
      %1815 = vmatpush1.bf16.msra.mxu0 %v1713
      %1816 = vmatprep.subr.bf16.mxu0 0
      %1817 = vmatpush1.bf16.msra.mxu0 %v1714
      %1818 = vmatprep.subr.bf16.mxu0 0
      %1819 = vmatpush1.bf16.msra.mxu0 %v1715
      %1820 = vmatprep.subr.bf16.mxu0 0
      %1821 = vmatpush1.bf16.msra.mxu0 %v1716
      %1822 = vmatprep.subr.bf16.mxu0 0
      %1823 = vmatpush1.bf16.msra.mxu0 %v1717
      %1824 = vmatprep.subr.bf16.mxu0 0
      %1825 = vmatpush1.bf16.msra.mxu0 0
      %1826 = vmatprep.subr.bf16.mxu0 0
      %1827 = vmatpush1.bf16.msra.mxu0 0
      %1828 = vmatprep.subr.bf16.mxu0 0
      %1829 = vmatpush1.bf16.msra.mxu0 0
      %1830 = vmatprep.subr.bf16.mxu0 0
      %1831 = vmatpush1.bf16.msra.mxu0 0
      %1832 = vmatprep.subr.bf16.mxu0 0
      %1833 = vmatpush1.bf16.msra.mxu0 0
      %1834 = vmatprep.subr.bf16.mxu0 0
      %1835 = vmatpush1.bf16.msra.mxu0 0
      %1836 = vmatprep.subr.bf16.mxu0 0
      %1837 = vmatpush1.bf16.msra.mxu0 0
      %1838 = vmatprep.subr.bf16.mxu0 0
      %1839 = vmatpush1.bf16.msra.mxu0 0
      %1840 = vmatprep.mubr.bf16.mxu0 0
      %1841 = vmatmul.mubr.bf16.gmra.mrb[0].mxu0 %v191
      %v1842 = vpop.f32.mrb[0].mxu0
      %v1843 = vadd.f32 0.0, %v1842
      %v1844 = vpop.f32.mrb[0].mxu0
      %v1845 = vpop.f32.mrb[0].mxu0
      %v1846 = vpop.f32.mrb[0].mxu0
      %1847 = vdwg.mxu0
      %v1848 = vadd.f32 %v1607, %v1843
      %s1849 = scalar_lea.vmem %s163, 16
      %v1850 = vld [vmem:[%s1849] sm:$0x3]
      %1851 = vmatprep.subr.bf16.mxu0 0
      %1852 = vmatpush1.bf16.msra.mxu0 %v1710
      %1853 = vmatprep.subr.bf16.mxu0 0
      %1854 = vmatpush1.bf16.msra.mxu0 %v1711
      %1855 = vmatprep.subr.bf16.mxu0 0
      %1856 = vmatpush1.bf16.msra.mxu0 %v1712
      %1857 = vmatprep.subr.bf16.mxu0 0
      %1858 = vmatpush1.bf16.msra.mxu0 %v1713
      %1859 = vmatprep.subr.bf16.mxu0 0
      %1860 = vmatpush1.bf16.msra.mxu0 %v1714
      %1861 = vmatprep.subr.bf16.mxu0 0
      %1862 = vmatpush1.bf16.msra.mxu0 %v1715
      %1863 = vmatprep.subr.bf16.mxu0 0
      %1864 = vmatpush1.bf16.msra.mxu0 %v1716
      %1865 = vmatprep.subr.bf16.mxu0 0
      %1866 = vmatpush1.bf16.msra.mxu0 %v1717
      %1867 = vmatprep.subr.bf16.mxu0 0
      %1868 = vmatpush1.bf16.msra.mxu0 0
      %1869 = vmatprep.subr.bf16.mxu0 0
      %1870 = vmatpush1.bf16.msra.mxu0 0
      %1871 = vmatprep.subr.bf16.mxu0 0
      %1872 = vmatpush1.bf16.msra.mxu0 0
      %1873 = vmatprep.subr.bf16.mxu0 0
      %1874 = vmatpush1.bf16.msra.mxu0 0
      %1875 = vmatprep.subr.bf16.mxu0 0
      %1876 = vmatpush1.bf16.msra.mxu0 0
      %1877 = vmatprep.subr.bf16.mxu0 0
      %1878 = vmatpush1.bf16.msra.mxu0 0
      %1879 = vmatprep.subr.bf16.mxu0 0
      %1880 = vmatpush1.bf16.msra.mxu0 0
      %1881 = vmatprep.subr.bf16.mxu0 0
      %1882 = vmatpush1.bf16.msra.mxu0 0
      %1883 = vmatprep.mubr.bf16.mxu0 0
      %1884 = vmatmul.mubr.bf16.gmra.mrb[0].mxu0 %v1850
      %v1885 = vpop.f32.mrb[0].mxu0
      %v1886 = vadd.f32 0.0, %v1885
      %v1887 = vpop.f32.mrb[0].mxu0
      %v1888 = vpop.f32.mrb[0].mxu0
      %v1889 = vpop.f32.mrb[0].mxu0
      %1890 = vdwg.mxu0
      %v1891 = vadd.f32 %v1660, %v1886
      %s1892 = scalar_lea.vmem %s1, 448
      %v1893 = vld [vmem:[%s1892] sm:$0xf]
      %v1894 = vld [vmem:[%s1892 + $0x4] sm:$0xf]
      %v1895 = vld [vmem:[%s1892 + $0x8] sm:$0xf]
      %v1896 = vld [vmem:[%s1892 + $0xc] sm:$0xf]
      %v1897 = vld [vmem:[%s1892 + $0x10] sm:$0xf]
      %v1898 = vld [vmem:[%s1892 + $0x14] sm:$0xf]
      %v1899 = vld [vmem:[%s1892 + $0x18] sm:$0xf]
      %v1900 = vld [vmem:[%s1892 + $0x1c] sm:$0xf]
      %v1901 = vld [vmem:[%s1892 + $0x20] sm:$0xf]
      %v1902 = vld [vmem:[%s1892 + $0x24] sm:$0xf]
      %v1903 = vld [vmem:[%s1892 + $0x28] sm:$0xf]
      %v1904 = vld [vmem:[%s1892 + $0x2c] sm:$0xf]
      %v1905 = vld [vmem:[%s1892 + $0x30] sm:$0xf]
      %v1906 = vld [vmem:[%s1892 + $0x34] sm:$0xf]
      %v1907 = vld [vmem:[%s1892 + $0x38] sm:$0xf]
      %v1908 = vld [vmem:[%s1892 + $0x3c] sm:$0xf]
      %v1925 = vunpack.c.l.b16 %v1893
      %v1926 = vunpack.c.l.b16 %v1894
      %v1927 = vunpack.c.l.b16 %v1895
      %v1928 = vunpack.c.l.b16 %v1896
      %v1929 = vunpack.c.l.b16 %v1897
      %v1930 = vunpack.c.l.b16 %v1898
      %v1931 = vunpack.c.l.b16 %v1899
      %v1932 = vunpack.c.l.b16 %v1900
      %v1933 = vunpack.c.l.b16 %v1901
      %v1934 = vunpack.c.l.b16 %v1902
      %v1935 = vunpack.c.l.b16 %v1903
      %v1936 = vunpack.c.l.b16 %v1904
      %v1937 = vunpack.c.l.b16 %v1905
      %v1938 = vunpack.c.l.b16 %v1906
      %v1939 = vunpack.c.l.b16 %v1907
      %v1940 = vunpack.c.l.b16 %v1908
      %v1941 = vpack.c.b16 %v1926, %v1925
      %v1942 = vpack.c.b16 %v1928, %v1927
      %v1943 = vpack.c.b16 %v1930, %v1929
      %v1944 = vpack.c.b16 %v1932, %v1931
      %v1945 = vpack.c.b16 %v1934, %v1933
      %v1946 = vpack.c.b16 %v1936, %v1935
      %v1947 = vpack.c.b16 %v1938, %v1937
      %v1948 = vpack.c.b16 %v1940, %v1939
      %1957 = vmatprep.subr.bf16.mxu0 0
      %1958 = vmatpush1.bf16.msra.mxu0 %v1941
      %1959 = vmatprep.subr.bf16.mxu0 0
      %1960 = vmatpush1.bf16.msra.mxu0 %v1942
      %1961 = vmatprep.subr.bf16.mxu0 0
      %1962 = vmatpush1.bf16.msra.mxu0 %v1943
      %1963 = vmatprep.subr.bf16.mxu0 0
      %1964 = vmatpush1.bf16.msra.mxu0 %v1944
      %1965 = vmatprep.subr.bf16.mxu0 0
      %1966 = vmatpush1.bf16.msra.mxu0 %v1945
      %1967 = vmatprep.subr.bf16.mxu0 0
      %1968 = vmatpush1.bf16.msra.mxu0 %v1946
      %1969 = vmatprep.subr.bf16.mxu0 0
      %1970 = vmatpush1.bf16.msra.mxu0 %v1947
      %1971 = vmatprep.subr.bf16.mxu0 0
      %1972 = vmatpush1.bf16.msra.mxu0 %v1948
      %1973 = vmatprep.subr.bf16.mxu0 0
      %1974 = vmatpush1.bf16.msra.mxu0 0
      %1975 = vmatprep.subr.bf16.mxu0 0
      %1976 = vmatpush1.bf16.msra.mxu0 0
      %1977 = vmatprep.subr.bf16.mxu0 0
      %1978 = vmatpush1.bf16.msra.mxu0 0
      %1979 = vmatprep.subr.bf16.mxu0 0
      %1980 = vmatpush1.bf16.msra.mxu0 0
      %1981 = vmatprep.subr.bf16.mxu0 0
      %1982 = vmatpush1.bf16.msra.mxu0 0
      %1983 = vmatprep.subr.bf16.mxu0 0
      %1984 = vmatpush1.bf16.msra.mxu0 0
      %1985 = vmatprep.subr.bf16.mxu0 0
      %1986 = vmatpush1.bf16.msra.mxu0 0
      %1987 = vmatprep.subr.bf16.mxu0 0
      %1988 = vmatpush1.bf16.msra.mxu0 0
      %1989 = vmatprep.mubr.bf16.mxu0 0
      %1990 = vmatmul.mubr.bf16.gmra.mrb[0].mxu0 %v388
      %v1991 = vpop.f32.mrb[0].mxu0
      %v1992 = vadd.f32 0.0, %v1991
      %v1993 = vpop.f32.mrb[0].mxu0
      %v1994 = vpop.f32.mrb[0].mxu0
      %v1995 = vpop.f32.mrb[0].mxu0
      %1996 = vdwg.mxu0
      %v1997 = vadd.f32 %v1766, %v1992
      %1998 = vmatprep.subr.bf16.mxu0 0
      %1999 = vmatpush1.bf16.msra.mxu0 %v1941
      %2000 = vmatprep.subr.bf16.mxu0 0
      %2001 = vmatpush1.bf16.msra.mxu0 %v1942
      %2002 = vmatprep.subr.bf16.mxu0 0
      %2003 = vmatpush1.bf16.msra.mxu0 %v1943
      %2004 = vmatprep.subr.bf16.mxu0 0
      %2005 = vmatpush1.bf16.msra.mxu0 %v1944
      %2006 = vmatprep.subr.bf16.mxu0 0
      %2007 = vmatpush1.bf16.msra.mxu0 %v1945
      %2008 = vmatprep.subr.bf16.mxu0 0
      %2009 = vmatpush1.bf16.msra.mxu0 %v1946
      %2010 = vmatprep.subr.bf16.mxu0 0
      %2011 = vmatpush1.bf16.msra.mxu0 %v1947
      %2012 = vmatprep.subr.bf16.mxu0 0
      %2013 = vmatpush1.bf16.msra.mxu0 %v1948
      %2014 = vmatprep.subr.bf16.mxu0 0
      %2015 = vmatpush1.bf16.msra.mxu0 0
      %2016 = vmatprep.subr.bf16.mxu0 0
      %2017 = vmatpush1.bf16.msra.mxu0 0
      %2018 = vmatprep.subr.bf16.mxu0 0
      %2019 = vmatpush1.bf16.msra.mxu0 0
      %2020 = vmatprep.subr.bf16.mxu0 0
      %2021 = vmatpush1.bf16.msra.mxu0 0
      %2022 = vmatprep.subr.bf16.mxu0 0
      %2023 = vmatpush1.bf16.msra.mxu0 0
      %2024 = vmatprep.subr.bf16.mxu0 0
      %2025 = vmatpush1.bf16.msra.mxu0 0
      %2026 = vmatprep.subr.bf16.mxu0 0
      %2027 = vmatpush1.bf16.msra.mxu0 0
      %2028 = vmatprep.subr.bf16.mxu0 0
      %2029 = vmatpush1.bf16.msra.mxu0 0
      %2030 = vmatprep.mubr.bf16.mxu0 0
      %2031 = vmatmul.mubr.bf16.gmra.mrb[0].mxu0 %v470
      %v2032 = vpop.f32.mrb[0].mxu0
      %v2033 = vadd.f32 0.0, %v2032
      %v2034 = vpop.f32.mrb[0].mxu0
      %v2035 = vpop.f32.mrb[0].mxu0
      %v2036 = vpop.f32.mrb[0].mxu0
      %2037 = vdwg.mxu0
      %v2038 = vadd.f32 %v1807, %v2033
      %2039 = vmatprep.subr.bf16.mxu0 0
      %2040 = vmatpush1.bf16.msra.mxu0 %v1941
      %2041 = vmatprep.subr.bf16.mxu0 0
      %2042 = vmatpush1.bf16.msra.mxu0 %v1942
      %2043 = vmatprep.subr.bf16.mxu0 0
      %2044 = vmatpush1.bf16.msra.mxu0 %v1943
      %2045 = vmatprep.subr.bf16.mxu0 0
      %2046 = vmatpush1.bf16.msra.mxu0 %v1944
      %2047 = vmatprep.subr.bf16.mxu0 0
      %2048 = vmatpush1.bf16.msra.mxu0 %v1945
      %2049 = vmatprep.subr.bf16.mxu0 0
      %2050 = vmatpush1.bf16.msra.mxu0 %v1946
      %2051 = vmatprep.subr.bf16.mxu0 0
      %2052 = vmatpush1.bf16.msra.mxu0 %v1947
      %2053 = vmatprep.subr.bf16.mxu0 0
      %2054 = vmatpush1.bf16.msra.mxu0 %v1948
      %2055 = vmatprep.subr.bf16.mxu0 0
      %2056 = vmatpush1.bf16.msra.mxu0 0
      %2057 = vmatprep.subr.bf16.mxu0 0
      %2058 = vmatpush1.bf16.msra.mxu0 0
      %2059 = vmatprep.subr.bf16.mxu0 0
      %2060 = vmatpush1.bf16.msra.mxu0 0
      %2061 = vmatprep.subr.bf16.mxu0 0
      %2062 = vmatpush1.bf16.msra.mxu0 0
      %2063 = vmatprep.subr.bf16.mxu0 0
      %2064 = vmatpush1.bf16.msra.mxu0 0
      %2065 = vmatprep.subr.bf16.mxu0 0
      %2066 = vmatpush1.bf16.msra.mxu0 0
      %2067 = vmatprep.subr.bf16.mxu0 0
      %2068 = vmatpush1.bf16.msra.mxu0 0
      %2069 = vmatprep.subr.bf16.mxu0 0
      %2070 = vmatpush1.bf16.msra.mxu0 0
      %2071 = vmatprep.mubr.bf16.mxu0 0
      %2072 = vmatmul.mubr.bf16.gmra.mrb[0].mxu0 %v552
      %v2073 = vpop.f32.mrb[0].mxu0
      %v2074 = vadd.f32 0.0, %v2073
      %v2075 = vpop.f32.mrb[0].mxu0
      %v2076 = vpop.f32.mrb[0].mxu0
      %v2077 = vpop.f32.mrb[0].mxu0
      %2078 = vdwg.mxu0
      %v2079 = vadd.f32 %v1848, %v2074
      %s2080 = scalar_lea.vmem %s163, 36
      %v2081 = vld [vmem:[%s2080] sm:$0x3]
      %2082 = vmatprep.subr.bf16.mxu0 0
      %2083 = vmatpush1.bf16.msra.mxu0 %v1941
      %2084 = vmatprep.subr.bf16.mxu0 0
      %2085 = vmatpush1.bf16.msra.mxu0 %v1942
      %2086 = vmatprep.subr.bf16.mxu0 0
      %2087 = vmatpush1.bf16.msra.mxu0 %v1943
      %2088 = vmatprep.subr.bf16.mxu0 0
      %2089 = vmatpush1.bf16.msra.mxu0 %v1944
      %2090 = vmatprep.subr.bf16.mxu0 0
      %2091 = vmatpush1.bf16.msra.mxu0 %v1945
      %2092 = vmatprep.subr.bf16.mxu0 0
      %2093 = vmatpush1.bf16.msra.mxu0 %v1946
      %2094 = vmatprep.subr.bf16.mxu0 0
      %2095 = vmatpush1.bf16.msra.mxu0 %v1947
      %2096 = vmatprep.subr.bf16.mxu0 0
      %2097 = vmatpush1.bf16.msra.mxu0 %v1948
      %2098 = vmatprep.subr.bf16.mxu0 0
      %2099 = vmatpush1.bf16.msra.mxu0 0
      %2100 = vmatprep.subr.bf16.mxu0 0
      %2101 = vmatpush1.bf16.msra.mxu0 0
      %2102 = vmatprep.subr.bf16.mxu0 0
      %2103 = vmatpush1.bf16.msra.mxu0 0
      %2104 = vmatprep.subr.bf16.mxu0 0
      %2105 = vmatpush1.bf16.msra.mxu0 0
      %2106 = vmatprep.subr.bf16.mxu0 0
      %2107 = vmatpush1.bf16.msra.mxu0 0
      %2108 = vmatprep.subr.bf16.mxu0 0
      %2109 = vmatpush1.bf16.msra.mxu0 0
      %2110 = vmatprep.subr.bf16.mxu0 0
      %2111 = vmatpush1.bf16.msra.mxu0 0
      %2112 = vmatprep.subr.bf16.mxu0 0
      %2113 = vmatpush1.bf16.msra.mxu0 0
      %2114 = vmatprep.mubr.bf16.mxu0 0
      %2115 = vmatmul.mubr.bf16.gmra.mrb[0].mxu0 %v2081
      %v2116 = vpop.f32.mrb[0].mxu0
      %v2117 = vadd.f32 0.0, %v2116
      %v2118 = vpop.f32.mrb[0].mxu0
      %v2119 = vpop.f32.mrb[0].mxu0
      %v2120 = vpop.f32.mrb[0].mxu0
      %2121 = vdwg.mxu0
      %v2122 = vadd.f32 %v1891, %v2117
      %s2123 = scalar_lea.vmem %s1, 512
      %v2124 = vld [vmem:[%s2123] sm:$0xf]
      %v2125 = vld [vmem:[%s2123 + $0x4] sm:$0xf]
      %v2126 = vld [vmem:[%s2123 + $0x8] sm:$0xf]
      %v2127 = vld [vmem:[%s2123 + $0xc] sm:$0xf]
      %v2128 = vld [vmem:[%s2123 + $0x10] sm:$0xf]
      %v2129 = vld [vmem:[%s2123 + $0x14] sm:$0xf]
      %v2130 = vld [vmem:[%s2123 + $0x18] sm:$0xf]
      %v2131 = vld [vmem:[%s2123 + $0x1c] sm:$0xf]
      %v2132 = vld [vmem:[%s2123 + $0x20] sm:$0xf]
      %v2133 = vld [vmem:[%s2123 + $0x24] sm:$0xf]
      %v2134 = vld [vmem:[%s2123 + $0x28] sm:$0xf]
      %v2135 = vld [vmem:[%s2123 + $0x2c] sm:$0xf]
      %v2136 = vld [vmem:[%s2123 + $0x30] sm:$0xf]
      %v2137 = vld [vmem:[%s2123 + $0x34] sm:$0xf]
      %v2138 = vld [vmem:[%s2123 + $0x38] sm:$0xf]
      %v2139 = vld [vmem:[%s2123 + $0x3c] sm:$0xf]
      %v2156 = vunpack.c.l.b16 %v2124
      %v2157 = vunpack.c.l.b16 %v2125
      %v2158 = vunpack.c.l.b16 %v2126
      %v2159 = vunpack.c.l.b16 %v2127
      %v2160 = vunpack.c.l.b16 %v2128
      %v2161 = vunpack.c.l.b16 %v2129
      %v2162 = vunpack.c.l.b16 %v2130
      %v2163 = vunpack.c.l.b16 %v2131
      %v2164 = vunpack.c.l.b16 %v2132
      %v2165 = vunpack.c.l.b16 %v2133
      %v2166 = vunpack.c.l.b16 %v2134
      %v2167 = vunpack.c.l.b16 %v2135
      %v2168 = vunpack.c.l.b16 %v2136
      %v2169 = vunpack.c.l.b16 %v2137
      %v2170 = vunpack.c.l.b16 %v2138
      %v2171 = vunpack.c.l.b16 %v2139
      %v2172 = vpack.c.b16 %v2157, %v2156
      %v2173 = vpack.c.b16 %v2159, %v2158
      %v2174 = vpack.c.b16 %v2161, %v2160
      %v2175 = vpack.c.b16 %v2163, %v2162
      %v2176 = vpack.c.b16 %v2165, %v2164
      %v2177 = vpack.c.b16 %v2167, %v2166
      %v2178 = vpack.c.b16 %v2169, %v2168
      %v2179 = vpack.c.b16 %v2171, %v2170
      %2188 = vmatprep.subr.bf16.mxu0 0
      %2189 = vmatpush1.bf16.msra.mxu0 %v2172
      %2190 = vmatprep.subr.bf16.mxu0 0
      %2191 = vmatpush1.bf16.msra.mxu0 %v2173
      %2192 = vmatprep.subr.bf16.mxu0 0
      %2193 = vmatpush1.bf16.msra.mxu0 %v2174
      %2194 = vmatprep.subr.bf16.mxu0 0
      %2195 = vmatpush1.bf16.msra.mxu0 %v2175
      %2196 = vmatprep.subr.bf16.mxu0 0
      %2197 = vmatpush1.bf16.msra.mxu0 %v2176
      %2198 = vmatprep.subr.bf16.mxu0 0
      %2199 = vmatpush1.bf16.msra.mxu0 %v2177
      %2200 = vmatprep.subr.bf16.mxu0 0
      %2201 = vmatpush1.bf16.msra.mxu0 %v2178
      %2202 = vmatprep.subr.bf16.mxu0 0
      %2203 = vmatpush1.bf16.msra.mxu0 %v2179
      %2204 = vmatprep.subr.bf16.mxu0 0
      %2205 = vmatpush1.bf16.msra.mxu0 0
      %2206 = vmatprep.subr.bf16.mxu0 0
      %2207 = vmatpush1.bf16.msra.mxu0 0
      %2208 = vmatprep.subr.bf16.mxu0 0
      %2209 = vmatpush1.bf16.msra.mxu0 0
      %2210 = vmatprep.subr.bf16.mxu0 0
      %2211 = vmatpush1.bf16.msra.mxu0 0
      %2212 = vmatprep.subr.bf16.mxu0 0
      %2213 = vmatpush1.bf16.msra.mxu0 0
      %2214 = vmatprep.subr.bf16.mxu0 0
      %2215 = vmatpush1.bf16.msra.mxu0 0
      %2216 = vmatprep.subr.bf16.mxu0 0
      %2217 = vmatpush1.bf16.msra.mxu0 0
      %2218 = vmatprep.subr.bf16.mxu0 0
      %2219 = vmatpush1.bf16.msra.mxu0 0
      %2220 = vmatprep.mubr.bf16.mxu0 0
      %2221 = vmatmul.mubr.bf16.gmra.mrb[0].mxu0 %v761
      %v2222 = vpop.f32.mrb[0].mxu0
      %v2223 = vadd.f32 0.0, %v2222
      %v2224 = vpop.f32.mrb[0].mxu0
      %v2225 = vpop.f32.mrb[0].mxu0
      %v2226 = vpop.f32.mrb[0].mxu0
      %2227 = vdwg.mxu0
      %v2228 = vadd.f32 %v1997, %v2223
      %2229 = vmatprep.subr.bf16.mxu0 0
      %2230 = vmatpush1.bf16.msra.mxu0 %v2172
      %2231 = vmatprep.subr.bf16.mxu0 0
      %2232 = vmatpush1.bf16.msra.mxu0 %v2173
      %2233 = vmatprep.subr.bf16.mxu0 0
      %2234 = vmatpush1.bf16.msra.mxu0 %v2174
      %2235 = vmatprep.subr.bf16.mxu0 0
      %2236 = vmatpush1.bf16.msra.mxu0 %v2175
      %2237 = vmatprep.subr.bf16.mxu0 0
      %2238 = vmatpush1.bf16.msra.mxu0 %v2176
      %2239 = vmatprep.subr.bf16.mxu0 0
      %2240 = vmatpush1.bf16.msra.mxu0 %v2177
      %2241 = vmatprep.subr.bf16.mxu0 0
      %2242 = vmatpush1.bf16.msra.mxu0 %v2178
      %2243 = vmatprep.subr.bf16.mxu0 0
      %2244 = vmatpush1.bf16.msra.mxu0 %v2179
      %2245 = vmatprep.subr.bf16.mxu0 0
      %2246 = vmatpush1.bf16.msra.mxu0 0
      %2247 = vmatprep.subr.bf16.mxu0 0
      %2248 = vmatpush1.bf16.msra.mxu0 0
      %2249 = vmatprep.subr.bf16.mxu0 0
      %2250 = vmatpush1.bf16.msra.mxu0 0
      %2251 = vmatprep.subr.bf16.mxu0 0
      %2252 = vmatpush1.bf16.msra.mxu0 0
      %2253 = vmatprep.subr.bf16.mxu0 0
      %2254 = vmatpush1.bf16.msra.mxu0 0
      %2255 = vmatprep.subr.bf16.mxu0 0
      %2256 = vmatpush1.bf16.msra.mxu0 0
      %2257 = vmatprep.subr.bf16.mxu0 0
      %2258 = vmatpush1.bf16.msra.mxu0 0
      %2259 = vmatprep.subr.bf16.mxu0 0
      %2260 = vmatpush1.bf16.msra.mxu0 0
      %2261 = vmatprep.mubr.bf16.mxu0 0
      %2262 = vmatmul.mubr.bf16.gmra.mrb[0].mxu0 %v814
      %v2263 = vpop.f32.mrb[0].mxu0
      %v2264 = vadd.f32 0.0, %v2263
      %v2265 = vpop.f32.mrb[0].mxu0
      %v2266 = vpop.f32.mrb[0].mxu0
      %v2267 = vpop.f32.mrb[0].mxu0
      %2268 = vdwg.mxu0
      %v2269 = vadd.f32 %v2038, %v2264
      %2270 = vmatprep.subr.bf16.mxu0 0
      %2271 = vmatpush1.bf16.msra.mxu0 %v2172
      %2272 = vmatprep.subr.bf16.mxu0 0
      %2273 = vmatpush1.bf16.msra.mxu0 %v2173
      %2274 = vmatprep.subr.bf16.mxu0 0
      %2275 = vmatpush1.bf16.msra.mxu0 %v2174
      %2276 = vmatprep.subr.bf16.mxu0 0
      %2277 = vmatpush1.bf16.msra.mxu0 %v2175
      %2278 = vmatprep.subr.bf16.mxu0 0
      %2279 = vmatpush1.bf16.msra.mxu0 %v2176
      %2280 = vmatprep.subr.bf16.mxu0 0
      %2281 = vmatpush1.bf16.msra.mxu0 %v2177
      %2282 = vmatprep.subr.bf16.mxu0 0
      %2283 = vmatpush1.bf16.msra.mxu0 %v2178
      %2284 = vmatprep.subr.bf16.mxu0 0
      %2285 = vmatpush1.bf16.msra.mxu0 %v2179
      %2286 = vmatprep.subr.bf16.mxu0 0
      %2287 = vmatpush1.bf16.msra.mxu0 0
      %2288 = vmatprep.subr.bf16.mxu0 0
      %2289 = vmatpush1.bf16.msra.mxu0 0
      %2290 = vmatprep.subr.bf16.mxu0 0
      %2291 = vmatpush1.bf16.msra.mxu0 0
      %2292 = vmatprep.subr.bf16.mxu0 0
      %2293 = vmatpush1.bf16.msra.mxu0 0
      %2294 = vmatprep.subr.bf16.mxu0 0
      %2295 = vmatpush1.bf16.msra.mxu0 0
      %2296 = vmatprep.subr.bf16.mxu0 0
      %2297 = vmatpush1.bf16.msra.mxu0 0
      %2298 = vmatprep.subr.bf16.mxu0 0
      %2299 = vmatpush1.bf16.msra.mxu0 0
      %2300 = vmatprep.subr.bf16.mxu0 0
      %2301 = vmatpush1.bf16.msra.mxu0 0
      %2302 = vmatprep.mubr.bf16.mxu0 0
      %2303 = vmatmul.mubr.bf16.gmra.mrb[0].mxu0 %v867
      %v2304 = vpop.f32.mrb[0].mxu0
      %v2305 = vadd.f32 0.0, %v2304
      %v2306 = vpop.f32.mrb[0].mxu0
      %v2307 = vpop.f32.mrb[0].mxu0
      %v2308 = vpop.f32.mrb[0].mxu0
      %2309 = vdwg.mxu0
      %v2310 = vadd.f32 %v2079, %v2305
      %v2311 = vld [vmem:[%s1849] sm:$0x7]
      %v2313 = vunpack.c.l.b16 %v2311
      %v2314 = vpack.c.b16 %v2313, %v2313
      %v2316 = vshrl.u32 %v2314, 16
      %v2318 = vshll.u32 %v2314, 16
      %v2320 = vrot.slane %v2318, 1
      %v2321 = vor.u32 %v2316, %v2320
      %2323 = vmatprep.subr.bf16.mxu0 0
      %2324 = vmatpush1.bf16.msra.mxu0 %v2172
      %2325 = vmatprep.subr.bf16.mxu0 0
      %2326 = vmatpush1.bf16.msra.mxu0 %v2173
      %2327 = vmatprep.subr.bf16.mxu0 0
      %2328 = vmatpush1.bf16.msra.mxu0 %v2174
      %2329 = vmatprep.subr.bf16.mxu0 0
      %2330 = vmatpush1.bf16.msra.mxu0 %v2175
      %2331 = vmatprep.subr.bf16.mxu0 0
      %2332 = vmatpush1.bf16.msra.mxu0 %v2176
      %2333 = vmatprep.subr.bf16.mxu0 0
      %2334 = vmatpush1.bf16.msra.mxu0 %v2177
      %2335 = vmatprep.subr.bf16.mxu0 0
      %2336 = vmatpush1.bf16.msra.mxu0 %v2178
      %2337 = vmatprep.subr.bf16.mxu0 0
      %2338 = vmatpush1.bf16.msra.mxu0 %v2179
      %2339 = vmatprep.subr.bf16.mxu0 0
      %2340 = vmatpush1.bf16.msra.mxu0 0
      %2341 = vmatprep.subr.bf16.mxu0 0
      %2342 = vmatpush1.bf16.msra.mxu0 0
      %2343 = vmatprep.subr.bf16.mxu0 0
      %2344 = vmatpush1.bf16.msra.mxu0 0
      %2345 = vmatprep.subr.bf16.mxu0 0
      %2346 = vmatpush1.bf16.msra.mxu0 0
      %2347 = vmatprep.subr.bf16.mxu0 0
      %2348 = vmatpush1.bf16.msra.mxu0 0
      %2349 = vmatprep.subr.bf16.mxu0 0
      %2350 = vmatpush1.bf16.msra.mxu0 0
      %2351 = vmatprep.subr.bf16.mxu0 0
      %2352 = vmatpush1.bf16.msra.mxu0 0
      %2353 = vmatprep.subr.bf16.mxu0 0
      %2354 = vmatpush1.bf16.msra.mxu0 0
      %2355 = vmatprep.mubr.bf16.mxu0 0
      %2356 = vmatmul.mubr.bf16.gmra.mrb[0].mxu0 %v2321
      %v2357 = vpop.f32.mrb[0].mxu0
      %v2358 = vadd.f32 0.0, %v2357
      %v2359 = vpop.f32.mrb[0].mxu0
      %v2360 = vpop.f32.mrb[0].mxu0
      %v2361 = vpop.f32.mrb[0].mxu0
      %2362 = vdwg.mxu0
      %v2363 = vadd.f32 %v2122, %v2358
      %v2365 = vlaneseq
      %v2366 = vshrl.u32 %v2365, 7
      %v2367 = vsub.s32 0, %v2366
      %v2368 = vrot.slane %v168, %v2367
      %v2370 = vadd.f32 %v2228, %v2368
      %v2371 = vmax.f32 %v2370, 0.0
      %v2372 = vadd.f32 %v2269, %v2368
      %v2373 = vmax.f32 %v2372, 0.0
      %v2374 = vadd.f32 %v2310, %v2368
      %v2375 = vmax.f32 %v2374, 0.0
      %v2376 = vadd.f32 %v2363, %v2368
      %v2377 = vmax.f32 %v2376, 0.0
      %v2378 = vadd.f32 %v2371, %v2373
      %v2379 = vadd.f32 %v2378, %v2375
      %v2380 = vadd.f32 %v2379, %v2377
      %vm2381 = vcmask 1043456
      %v2382 = vsel %vm2381, %v2380, 0.0
      %v2383 = vrot.slane %v2382, 4
      %v2384 = vadd.f32 %v2382, %v2383
      %v2385 = vrot.slane %v2384, 2
      %v2386 = vadd.f32 %v2384, %v2385
      %v2387 = vrot.slane %v2386, 1
      %v2388 = vadd.f32 %v2386, %v2387
      %v2389 = vmul.f32 %v2388, 0.0625
      %2390 = vst [vmem:[%s166] sm:$0x1] %v2389
      %p2391 = scmp.lt.s32.totalorder %s14, 3
      %s2392 = scalar_select %p2391, %s14, 3
      %s2393 = scalar_lea.vmem %s3, %s2392
      // Predicated region
      $region33: #{model2_apply.6} parent=31 // pred_check
        %p2394 = pneg %p100
      $region34: #{model2_apply.6} parent=31 // pred_check_branch
        %2396 = sbr.rel (%p2394) target = $region36
      $region35: #{model2_apply.6} parent=31 // pred_region
        _
      $region36: #{model2_apply.6} parent=31 // pred_fallthru
        _
    $region32: #{model2_apply.6} parent=5 // pred_fallthru
      _
    %p2397 = scmp.le.s32.totalorder 2, %s9
    // Predicated region
    $region37: #{model2_apply.6} parent=5 // pred_check
      %p2398 = pneg %p2397
    $region38: #{model2_apply.6} parent=5 // pred_check_branch
      %2400 = sbr.rel (%p2398) target = $region40
    $region39: #{model2_apply.6} parent=5 // pred_region
      %s2401 = ssub.s32 %s9, 2
      // Predicated region
      $region41: #{model2_apply.6} parent=39 // pred_check
        %p2402 = pneg %p106
      $region42: #{model2_apply.6} parent=39 // pred_check_branch
        %2404 = sbr.rel (%p2402) target = $region44
      $region43: #{model2_apply.6} parent=39 // pred_region
        %p2405 = scmp.lt.s32.totalorder %s15, 3
        %s2406 = scalar_select %p2405, %s15, 3
        %s2407 = scalar_lea.vmem %s3, %s2406
      $region44: #{model2_apply.6} parent=39 // pred_fallthru
        _
    $region40: #{model2_apply.6} parent=5 // pred_fallthru
      _
  $region6: #{model2_apply.6} parent=0 // loop_footer
    %s13 = sadd.s32 1, %s9
  $region7: #{model2_apply.6} parent=0 // loop_footer_branch
    %8 = sbr.rel target = $region3
  $region8: #{model2_apply.6} parent=0 // loop_exit
    _

</llo_original>
